<compile_context>
chip_gen: v7x
topology: tpu7x:2x2x1
jax: 0.10.0
libtpu: 0.0.40
codegen_flags: <defaults>
</compile_context>

<pallas_src>
import math

import jax
import jax.numpy as jnp
from jax.experimental import pallas as pl
from jax.experimental.pallas import tpu as pltpu

# ----------------------------- config ---------------------------------------
VOCAB_SIZE = 64
VOCAB_PAD = 128            # lane-dense LM-head output width (sliced back to VOCAB_SIZE)
CONTEXT_LENGTH = 16
EMB_DIM = 32
NUM_HEADS = 4
HEAD_DIM = EMB_DIM // NUM_HEADS
FF_DIM = 4 * EMB_DIM
NUM_LAYERS = 2
DROP_RATE = 0.0            # inference -> identity
LN_EPS = 1e-5

BATCH = 2
SEQ = 8


# ----------------------------- in-kernel helpers ----------------------------
def _layer_norm(x, scale, shift):
    # x: (T, E); scale/shift: (1, E). Matches torch LayerNorm (biased variance).
    mean = jnp.mean(x, axis=-1, keepdims=True)
    var = jnp.mean((x - mean) ** 2, axis=-1, keepdims=True)
    return (x - mean) * jax.lax.rsqrt(var + LN_EPS) * scale + shift


def _gelu_tanh(x):
    # GELU (tanh approximation), as in the "from-scratch" GPT implementation.
    return 0.5 * x * (
        1.0 + jnp.tanh(math.sqrt(2.0 / math.pi) * (x + 0.044715 * x * x * x))
    )


def _mm(a, b):
    # a @ b, bf16 operands, f32 accumulation (MXU-native on all generations).
    return jnp.dot(a.astype(jnp.bfloat16), b.astype(jnp.bfloat16),
                   preferred_element_type=jnp.float32)


def _mm_nt(a, b):
    # a @ b.T without materializing the transpose (contract last dims of both).
    return jax.lax.dot_general(
        a.astype(jnp.bfloat16), b.astype(jnp.bfloat16),
        (((1,), (1,)), ((), ())), preferred_element_type=jnp.float32)


# ----------------------------- fused forward kernel -------------------------
def _make_gpt_kernel(batch, seq):
    T = batch * seq
    E = EMB_DIM
    H = NUM_HEADS
    D = HEAD_DIM

    def kernel(
        ids_ref,                                 # (T, 1)  int32  token ids
        tok_ref, pos_ref,                        # (V, E), (CTX, E)  f32
        ln1s_ref, ln1b_ref,                      # (L, 1, E) f32
        wqkv_ref,                                # (L, E, 3E) bf16 (scale folded into Q)
        wo_ref, bo_ref,                          # (L, E, E) bf16, (L, 1, E) f32
        ln2s_ref, ln2b_ref,                      # (L, 1, E) f32
        w1_ref, b1_ref,                          # (L, E, F) bf16, (L, 1, F) f32
        w2_ref, b2_ref,                          # (L, F, E) bf16, (L, 1, E) f32
        flns_ref, flnb_ref,                      # (1, E) f32
        whead_ref,                               # (E, VOCAB_PAD) bf16
        o_ref,                                   # (T, VOCAB_PAD) f32
    ):
        # ---- fused embedding lookup: one-hot matmuls on the MXU -------------
        ids = ids_ref[...]                                         # (T, 1) int32
        vcol = jax.lax.broadcasted_iota(jnp.int32, (T, VOCAB_SIZE), 1)
        tok_oh = (ids == vcol).astype(jnp.float32)                 # (T, V)
        x = jnp.dot(tok_oh, tok_ref[...], preferred_element_type=jnp.float32)

        prow = jax.lax.broadcasted_iota(jnp.int32, (T, CONTEXT_LENGTH), 0)
        pcol = jax.lax.broadcasted_iota(jnp.int32, (T, CONTEXT_LENGTH), 1)
        if (seq & (seq - 1)) == 0:
            pos_idx = jnp.bitwise_and(prow, seq - 1)               # row mod seq
        else:
            pos_idx = prow % seq
        pos_oh = (pcol == pos_idx).astype(jnp.float32)             # (T, CTX)
        x = x + jnp.dot(pos_oh, pos_ref[...], preferred_element_type=jnp.float32)
        # dropout_embeddings: identity at inference.

        # ---- block-causal mask over the flattened (batch*seq) token axis ----
        qrow = jax.lax.broadcasted_iota(jnp.int32, (T, T), 0)
        kcol = jax.lax.broadcasted_iota(jnp.int32, (T, T), 1)
        if (seq & (seq - 1)) == 0:
            q_pos = jnp.bitwise_and(qrow, seq - 1)
        else:
            q_pos = qrow % seq
        # allowed iff same sequence AND causal:  q - q_pos <= k <= q
        allowed = jnp.logical_and(kcol <= qrow, kcol >= qrow - q_pos)
        neg = jnp.float32(-1e30)

        lane = jax.lax.broadcasted_iota(jnp.int32, (1, E), 1)      # (1, E)

        for l in range(NUM_LAYERS):
            # ---- multi-head causal self-attention ---------------------------
            h1 = _layer_norm(x, ln1s_ref[l], ln1b_ref[l])          # (T, E) f32
            qkv = _mm(h1, wqkv_ref[l])                             # (T, 3E) f32
            q = qkv[:, :E]
            k = qkv[:, E:2 * E]
            v = qkv[:, 2 * E:]

            ctx = jnp.zeros((T, E), jnp.float32)
            for hh in range(H):
                head_lanes = jnp.logical_and(lane >= hh * D, lane < (hh + 1) * D)
                q_h = jnp.where(head_lanes, q, 0.0)                # lane mask, no slicing
                s = _mm_nt(q_h, k)                                 # (T, T) scores, head hh
                s = jnp.where(allowed, s, neg)
                m = jnp.max(s, axis=-1, keepdims=True)
                p = jnp.exp(s - m)
                p = p * pl.reciprocal(jnp.sum(p, axis=-1, keepdims=True), approx=True)
                pv = _mm(p, v)                                     # (T, E) full width
                ctx = ctx + jnp.where(head_lanes, pv, 0.0)         # keep head's lanes

            x = x + _mm(ctx, wo_ref[l]) + bo_ref[l]                # residual

            # ---- feed-forward ------------------------------------------------
            h2 = _layer_norm(x, ln2s_ref[l], ln2b_ref[l])
            f = _mm(h2, w1_ref[l]) + b1_ref[l]
            f = _gelu_tanh(f)
            x = x + _mm(f, w2_ref[l]) + b2_ref[l]                  # residual

        # ---- final LayerNorm + LM head (lane-dense padded vocab) ------------
        hf = _layer_norm(x, flns_ref[...], flnb_ref[...])
        o_ref[...] = _mm(hf, whead_ref[...])

    return kernel


def run_gpt_fused(ids, fp, batch, seq):
    T = batch * seq
    kernel = _make_gpt_kernel(batch, seq)

    args = (
        ids, fp["tok_emb"], fp["pos_emb"],
        fp["ln1_s"], fp["ln1_b"],
        fp["wqkv"],
        fp["wo"], fp["bo"],
        fp["ln2_s"], fp["ln2_b"],
        fp["w1"], fp["b1"], fp["w2"], fp["b2"],
        fp["final_ln_s"], fp["final_ln_b"],
        fp["w_head"],
    )

    def full(a):
        return pl.BlockSpec(tuple(a.shape), lambda i, _n=a.ndim: (0,) * _n)

    in_specs = [full(a) for a in args]
    out_spec = pl.BlockSpec((T, VOCAB_PAD), lambda i: (0, 0))

    # ---- advisory cost estimate (kernel is launch-overhead dominated) -------
    E, F, H = EMB_DIM, FF_DIM, NUM_HEADS
    flops_layer = (2 * T * E * 3 * E            # fused QKV projection
                   + H * 2 * T * T * E          # masked full-width QK^T
                   + H * 2 * T * T * E          # PV
                   + 2 * T * E * E              # output projection
                   + 2 * T * E * F + 2 * T * F * E)   # feed-forward
    flops = (2 * T * VOCAB_SIZE * E + 2 * T * CONTEXT_LENGTH * E
             + NUM_LAYERS * flops_layer + 2 * T * E * VOCAB_PAD)
    transcendentals = (NUM_LAYERS * (H * T * T + T * F)      # exp + tanh
                       + (2 * NUM_LAYERS + 1) * T            # rsqrt (layernorm)
                       + NUM_LAYERS * H * T)                 # approx reciprocal
    bytes_accessed = (sum(int(a.size) * a.dtype.itemsize for a in args)
                      + T * VOCAB_PAD * 4)

    return pl.pallas_call(
        kernel,
        out_shape=jax.ShapeDtypeStruct((T, VOCAB_PAD), jnp.float32),
        grid_spec=pltpu.PrefetchScalarGridSpec(
            num_scalar_prefetch=0,
            grid=(1,),
            in_specs=in_specs,
            out_specs=out_spec,
        ),
        compiler_params=pltpu.CompilerParams(dimension_semantics=("arbitrary",)),
        cost_estimate=pl.CostEstimate(flops=flops,
                                      transcendentals=transcendentals,
                                      bytes_accessed=bytes_accessed),
    )(*args)


# ----------------------------- parameter init -------------------------------
def init_params(key):
    ks = iter(jax.random.split(key, 3 + NUM_LAYERS * 6))

    def nrm(shape, std=0.02):
        return (std * jax.random.normal(next(ks), shape)).astype(jnp.float32)

    params = {
        "tok_emb": nrm((VOCAB_SIZE, EMB_DIM)),
        "pos_emb": nrm((CONTEXT_LENGTH, EMB_DIM)),
        "final_ln_s": jnp.ones((1, EMB_DIM), jnp.float32),
        "final_ln_b": jnp.zeros((1, EMB_DIM), jnp.float32),
        "w_head": nrm((EMB_DIM, VOCAB_SIZE)),
        "blocks": [],
    }
    for _ in range(NUM_LAYERS):
        params["blocks"].append(
            {
                "ln1_s": jnp.ones((1, EMB_DIM), jnp.float32),
                "ln1_b": jnp.zeros((1, EMB_DIM), jnp.float32),
                "wq": nrm((EMB_DIM, EMB_DIM)),
                "wk": nrm((EMB_DIM, EMB_DIM)),
                "wv": nrm((EMB_DIM, EMB_DIM)),
                "wo": nrm((EMB_DIM, EMB_DIM)),
                "bo": jnp.zeros((1, EMB_DIM), jnp.float32),
                "ln2_s": jnp.ones((1, EMB_DIM), jnp.float32),
                "ln2_b": jnp.zeros((1, EMB_DIM), jnp.float32),
                "w1": nrm((EMB_DIM, FF_DIM)),
                "b1": jnp.zeros((1, FF_DIM), jnp.float32),
                "w2": nrm((FF_DIM, EMB_DIM)),
                "b2": jnp.zeros((1, EMB_DIM), jnp.float32),
            }
        )
    return params


def prepare_fused_params(params):
    """Stack per-layer weights, fuse QKV (attention scale folded into Wq),
    cast matmul weights to bf16, pad the LM head to a lane-dense 128-wide output."""
    scale = jnp.float32(1.0 / math.sqrt(float(HEAD_DIM)))

    def stack(name):
        return jnp.stack([blk[name] for blk in params["blocks"]], axis=0)

    wq = stack("wq") * scale                                          # fold 1/sqrt(D)
    wqkv = jnp.concatenate([wq, stack("wk"), stack("wv")], axis=-1)   # (L, E, 3E)
    w_head_pad = jnp.pad(params["w_head"],
                         ((0, 0), (0, VOCAB_PAD - VOCAB_SIZE)))       # (E, 128)
    return {
        "tok_emb": params["tok_emb"].astype(jnp.float32),
        "pos_emb": params["pos_emb"].astype(jnp.float32),
        "ln1_s": stack("ln1_s"), "ln1_b": stack("ln1_b"),
        "wqkv": wqkv.astype(jnp.bfloat16),
        "wo": stack("wo").astype(jnp.bfloat16), "bo": stack("bo"),
        "ln2_s": stack("ln2_s"), "ln2_b": stack("ln2_b"),
        "w1": stack("w1").astype(jnp.bfloat16), "b1": stack("b1"),
        "w2": stack("w2").astype(jnp.bfloat16), "b2": stack("b2"),
        "final_ln_s": params["final_ln_s"], "final_ln_b": params["final_ln_b"],
        "w_head": w_head_pad.astype(jnp.bfloat16),
    }


# ----------------------------- full model forward ---------------------------
def gpt_forward(token_ids, params, fused=None):
    if fused is None:
        fused = prepare_fused_params(params)
    B, S = token_ids.shape
    ids = token_ids.astype(jnp.int32).reshape(B * S, 1)       # only wrapper-side glue
    logits_pad = run_gpt_fused(ids, fused, B, S)              # (B*S, VOCAB_PAD)
    return logits_pad[:, :VOCAB_SIZE].reshape(B, S, VOCAB_SIZE)


# ----------------------------- main ------------------------------------------
if __name__ == "__main__":
    key = jax.random.PRNGKey(0)
    pkey, ikey = jax.random.split(key)
    params = init_params(pkey)
    token_ids = jax.random.randint(ikey, (BATCH, SEQ), 0, VOCAB_SIZE, dtype=jnp.int32)

    logits = gpt_forward(token_ids, params)
    jax.block_until_ready(logits)

    assert logits.shape == (BATCH, SEQ, VOCAB_SIZE), logits.shape
    assert logits.dtype == jnp.float32
    assert bool(jnp.all(jnp.isfinite(logits)))
    print("KERNEL_OK")
</pallas_src>

<mosaic_0001>
module attributes {stable_mosaic.version = 11 : i64} {
  func.func @kernel(%arg0: i32, %arg1: memref<16x1xi32, #tpu.memory_space<vmem>>, %arg2: memref<64x32xf32, #tpu.memory_space<vmem>>, %arg3: memref<16x32xf32, #tpu.memory_space<vmem>>, %arg4: memref<2x1x32xf32, #tpu.memory_space<vmem>>, %arg5: memref<2x1x32xf32, #tpu.memory_space<vmem>>, %arg6: memref<2x32x96xbf16, #tpu.memory_space<vmem>>, %arg7: memref<2x32x32xbf16, #tpu.memory_space<vmem>>, %arg8: memref<2x1x32xf32, #tpu.memory_space<vmem>>, %arg9: memref<2x1x32xf32, #tpu.memory_space<vmem>>, %arg10: memref<2x1x32xf32, #tpu.memory_space<vmem>>, %arg11: memref<2x32x128xbf16, #tpu.memory_space<vmem>>, %arg12: memref<2x1x128xf32, #tpu.memory_space<vmem>>, %arg13: memref<2x128x32xbf16, #tpu.memory_space<vmem>>, %arg14: memref<2x1x32xf32, #tpu.memory_space<vmem>>, %arg15: memref<1x32xf32, #tpu.memory_space<vmem>>, %arg16: memref<1x32xf32, #tpu.memory_space<vmem>>, %arg17: memref<32x128xbf16, #tpu.memory_space<vmem>>, %arg18: memref<16x128xf32, #tpu.memory_space<vmem>>) attributes {dimension_semantics = [#tpu.dimension_semantics<arbitrary>], iteration_bounds = array<i64: 1>, scalar_prefetch = 0 : i64, scratch_operands = 0 : i64, tpu.core_type = #tpu.core_type<tc>, window_params = [{pipeline_mode = #tpu.pipeline_mode<synchronous>, transform_indices = @transform_0, window_bounds = array<i64: 16, 1>}, {pipeline_mode = #tpu.pipeline_mode<synchronous>, transform_indices = @transform_1, window_bounds = array<i64: 64, 32>}, {pipeline_mode = #tpu.pipeline_mode<synchronous>, transform_indices = @transform_2, window_bounds = array<i64: 16, 32>}, {pipeline_mode = #tpu.pipeline_mode<synchronous>, transform_indices = @transform_3, window_bounds = array<i64: 2, 1, 32>}, {pipeline_mode = #tpu.pipeline_mode<synchronous>, transform_indices = @transform_4, window_bounds = array<i64: 2, 1, 32>}, {pipeline_mode = #tpu.pipeline_mode<synchronous>, transform_indices = @transform_5, window_bounds = array<i64: 2, 32, 96>}, {pipeline_mode = #tpu.pipeline_mode<synchronous>, transform_indices = @transform_6, window_bounds = array<i64: 2, 32, 32>}, {pipeline_mode = #tpu.pipeline_mode<synchronous>, transform_indices = @transform_7, window_bounds = array<i64: 2, 1, 32>}, {pipeline_mode = #tpu.pipeline_mode<synchronous>, transform_indices = @transform_8, window_bounds = array<i64: 2, 1, 32>}, {pipeline_mode = #tpu.pipeline_mode<synchronous>, transform_indices = @transform_9, window_bounds = array<i64: 2, 1, 32>}, {pipeline_mode = #tpu.pipeline_mode<synchronous>, transform_indices = @transform_10, window_bounds = array<i64: 2, 32, 128>}, {pipeline_mode = #tpu.pipeline_mode<synchronous>, transform_indices = @transform_11, window_bounds = array<i64: 2, 1, 128>}, {pipeline_mode = #tpu.pipeline_mode<synchronous>, transform_indices = @transform_12, window_bounds = array<i64: 2, 128, 32>}, {pipeline_mode = #tpu.pipeline_mode<synchronous>, transform_indices = @transform_13, window_bounds = array<i64: 2, 1, 32>}, {pipeline_mode = #tpu.pipeline_mode<synchronous>, transform_indices = @transform_14, window_bounds = array<i64: 1, 32>}, {pipeline_mode = #tpu.pipeline_mode<synchronous>, transform_indices = @transform_15, window_bounds = array<i64: 1, 32>}, {pipeline_mode = #tpu.pipeline_mode<synchronous>, transform_indices = @transform_16, window_bounds = array<i64: 32, 128>}, {pipeline_mode = #tpu.pipeline_mode<synchronous>, transform_indices = @transform_17, window_bounds = array<i64: 16, 128>}]} {
    %c0 = arith.constant 0 : index
    %c0_0 = arith.constant 0 : index
    %0 = vector.load %arg1[%c0, %c0_0] : memref<16x1xi32, #tpu.memory_space<vmem>>, vector<16x1xi32>
    %1 = tpu.iota {dimensions = array<i32: 1>} : vector<16x64xi32>
    %2 = vector.broadcast %0 : vector<16x1xi32> to vector<16x64xi32>
    %3 = arith.cmpi eq, %2, %1 : vector<16x64xi32>
    %4 = arith.extui %3 : vector<16x64xi1> to vector<16x64xi32>
    %5 = arith.sitofp %4 : vector<16x64xi32> to vector<16x64xf32>
    %c0_1 = arith.constant 0 : index
    %c0_2 = arith.constant 0 : index
    %6 = vector.load %arg2[%c0_1, %c0_2] : memref<64x32xf32, #tpu.memory_space<vmem>>, vector<64x32xf32>
    %cst = arith.constant dense<0.000000e+00> : vector<16x32xf32>
    %7 = tpu.matmul %5, %6, %cst {dimension_numbers = #tpu.dot_dimension_numbers<[1], [0], [0], [1], [0, 0, 1, 1], [], []>} : vector<16x64xf32>, vector<64x32xf32>, vector<16x32xf32> -> vector<16x32xf32>
    %8 = tpu.iota {dimensions = array<i32: 0>} : vector<16x16xi32>
    %9 = tpu.iota {dimensions = array<i32: 1>} : vector<16x16xi32>
    %c7_i32 = arith.constant 7 : i32
    %10 = vector.broadcast %c7_i32 : i32 to vector<16x16xi32>
    %11 = arith.andi %8, %10 : vector<16x16xi32>
    %12 = arith.cmpi eq, %9, %11 : vector<16x16xi32>
    %13 = arith.extui %12 : vector<16x16xi1> to vector<16x16xi32>
    %14 = arith.sitofp %13 : vector<16x16xi32> to vector<16x16xf32>
    %c0_3 = arith.constant 0 : index
    %c0_4 = arith.constant 0 : index
    %15 = vector.load %arg3[%c0_3, %c0_4] : memref<16x32xf32, #tpu.memory_space<vmem>>, vector<16x32xf32>
    %cst_5 = arith.constant dense<0.000000e+00> : vector<16x32xf32>
    %16 = tpu.matmul %14, %15, %cst_5 {dimension_numbers = #tpu.dot_dimension_numbers<[1], [0], [0], [1], [0, 0, 1, 1], [], []>} : vector<16x16xf32>, vector<16x32xf32>, vector<16x32xf32> -> vector<16x32xf32>
    %17 = arith.addf %7, %16 : vector<16x32xf32>
    %18 = tpu.iota {dimensions = array<i32: 0>} : vector<16x16xi32>
    %19 = tpu.iota {dimensions = array<i32: 1>} : vector<16x16xi32>
    %c7_i32_6 = arith.constant 7 : i32
    %20 = vector.broadcast %c7_i32_6 : i32 to vector<16x16xi32>
    %21 = arith.andi %18, %20 : vector<16x16xi32>
    %22 = arith.cmpi sle, %19, %18 : vector<16x16xi32>
    %23 = arith.subi %18, %21 : vector<16x16xi32>
    %24 = arith.cmpi sge, %19, %23 : vector<16x16xi32>
    %25 = arith.andi %22, %24 : vector<16x16xi1>
    %26 = tpu.iota {dimensions = array<i32: 1>} : vector<1x32xi32>
    %c0_7 = arith.constant 0 : index
    %c0_8 = arith.constant 0 : index
    %c0_9 = arith.constant 0 : index
    %27 = vector.load %arg4[%c0_7, %c0_8, %c0_9] : memref<2x1x32xf32, #tpu.memory_space<vmem>>, vector<1x1x32xf32>
    %28 = vector.shape_cast %27 : vector<1x1x32xf32> to vector<1x32xf32>
    %c0_10 = arith.constant 0 : index
    %c0_11 = arith.constant 0 : index
    %c0_12 = arith.constant 0 : index
    %29 = vector.load %arg5[%c0_10, %c0_11, %c0_12] : memref<2x1x32xf32, #tpu.memory_space<vmem>>, vector<1x1x32xf32>
    %30 = vector.shape_cast %29 : vector<1x1x32xf32> to vector<1x32xf32>
    %cst_13 = arith.constant dense<0.000000e+00> : vector<16xf32>
    %31 = vector.multi_reduction <add>, %17, %cst_13 [1] : vector<16x32xf32> to vector<16xf32>
    %32 = vector.shape_cast %31 : vector<16xf32> to vector<16x1xf32>
    %cst_14 = arith.constant 3.200000e+01 : f32
    %33 = vector.broadcast %cst_14 : f32 to vector<16x1xf32>
    %34 = arith.divf %32, %33 : vector<16x1xf32>
    %35 = vector.broadcast %34 : vector<16x1xf32> to vector<16x32xf32>
    %36 = arith.subf %17, %35 : vector<16x32xf32>
    %37 = arith.mulf %36, %36 : vector<16x32xf32>
    %cst_15 = arith.constant dense<0.000000e+00> : vector<16xf32>
    %38 = vector.multi_reduction <add>, %37, %cst_15 [1] : vector<16x32xf32> to vector<16xf32>
    %39 = vector.shape_cast %38 : vector<16xf32> to vector<16x1xf32>
    %cst_16 = arith.constant 3.200000e+01 : f32
    %40 = vector.broadcast %cst_16 : f32 to vector<16x1xf32>
    %41 = arith.divf %39, %40 : vector<16x1xf32>
    %42 = vector.broadcast %34 : vector<16x1xf32> to vector<16x32xf32>
    %43 = arith.subf %17, %42 : vector<16x32xf32>
    %cst_17 = arith.constant 9.99999974E-6 : f32
    %44 = vector.broadcast %cst_17 : f32 to vector<16x1xf32>
    %45 = arith.addf %41, %44 : vector<16x1xf32>
    %46 = math.rsqrt %45 : vector<16x1xf32>
    %47 = vector.broadcast %46 : vector<16x1xf32> to vector<16x32xf32>
    %48 = arith.mulf %43, %47 : vector<16x32xf32>
    %49 = vector.broadcast %28 : vector<1x32xf32> to vector<16x32xf32>
    %50 = arith.mulf %48, %49 : vector<16x32xf32>
    %51 = vector.broadcast %30 : vector<1x32xf32> to vector<16x32xf32>
    %52 = arith.addf %50, %51 : vector<16x32xf32>
    %c0_18 = arith.constant 0 : index
    %c0_19 = arith.constant 0 : index
    %c0_20 = arith.constant 0 : index
    %53 = vector.load %arg6[%c0_18, %c0_19, %c0_20] : memref<2x32x96xbf16, #tpu.memory_space<vmem>>, vector<1x32x96xbf16>
    %54 = vector.shape_cast %53 : vector<1x32x96xbf16> to vector<32x96xbf16>
    %55 = arith.truncf %52 : vector<16x32xf32> to vector<16x32xbf16>
    %cst_21 = arith.constant dense<0.000000e+00> : vector<16x96xf32>
    %56 = tpu.matmul %55, %54, %cst_21 {dimension_numbers = #tpu.dot_dimension_numbers<[1], [0], [0], [1], [0, 0, 1, 1], [], []>} : vector<16x32xbf16>, vector<32x96xbf16>, vector<16x96xf32> -> vector<16x96xf32>
    %57 = vector.extract_strided_slice %56 {offsets = [0, 0], sizes = [16, 32], strides = [1, 1]} : vector<16x96xf32> to vector<16x32xf32>
    %58 = vector.extract_strided_slice %56 {offsets = [0, 32], sizes = [16, 32], strides = [1, 1]} : vector<16x96xf32> to vector<16x32xf32>
    %59 = vector.extract_strided_slice %56 {offsets = [0, 64], sizes = [16, 32], strides = [1, 1]} : vector<16x96xf32> to vector<16x32xf32>
    %cst_22 = arith.constant 0.000000e+00 : f32
    %60 = vector.broadcast %cst_22 : f32 to vector<16x32xf32>
    %c0_i32 = arith.constant 0 : i32
    %61 = vector.broadcast %c0_i32 : i32 to vector<1x32xi32>
    %62 = arith.cmpi sge, %26, %61 : vector<1x32xi32>
    %c8_i32 = arith.constant 8 : i32
    %63 = vector.broadcast %c8_i32 : i32 to vector<1x32xi32>
    %64 = arith.cmpi slt, %26, %63 : vector<1x32xi32>
    %65 = arith.andi %62, %64 : vector<1x32xi1>
    %cst_23 = arith.constant 0.000000e+00 : f32
    %66 = vector.shape_cast %65 : vector<1x32xi1> to vector<1x32xi1>
    %67 = vector.broadcast %66 : vector<1x32xi1> to vector<16x32xi1>
    %68 = vector.broadcast %cst_23 : f32 to vector<16x32xf32>
    %69 = arith.select %67, %57, %68 : vector<16x32xi1>, vector<16x32xf32>
    %70 = arith.truncf %69 : vector<16x32xf32> to vector<16x32xbf16>
    %71 = arith.truncf %58 : vector<16x32xf32> to vector<16x32xbf16>
    %cst_24 = arith.constant dense<0.000000e+00> : vector<16x16xf32>
    %72 = tpu.matmul %70, %71, %cst_24 {dimension_numbers = #tpu.dot_dimension_numbers<[1], [1], [0], [0], [0, 0, 1, 0], [], []>} : vector<16x32xbf16>, vector<16x32xbf16>, vector<16x16xf32> -> vector<16x16xf32>
    %cst_25 = arith.constant -1.000000e+30 : f32
    %73 = vector.broadcast %cst_25 : f32 to vector<16x16xf32>
    %74 = arith.select %25, %72, %73 : vector<16x16xi1>, vector<16x16xf32>
    %cst_26 = arith.constant dense<0xFF800000> : vector<16xf32>
    %75 = vector.multi_reduction <maximumf>, %74, %cst_26 [1] : vector<16x16xf32> to vector<16xf32>
    %76 = vector.shape_cast %75 : vector<16xf32> to vector<16x1xf32>
    %77 = vector.broadcast %76 : vector<16x1xf32> to vector<16x16xf32>
    %78 = arith.subf %74, %77 : vector<16x16xf32>
    %79 = math.exp %78 : vector<16x16xf32>
    %cst_27 = arith.constant dense<0.000000e+00> : vector<16xf32>
    %80 = vector.multi_reduction <add>, %79, %cst_27 [1] : vector<16x16xf32> to vector<16xf32>
    %81 = vector.shape_cast %80 : vector<16xf32> to vector<16x1xf32>
    %82 = tpu.reciprocal %81 {approx = true} : vector<16x1xf32> -> vector<16x1xf32>
    %83 = vector.broadcast %82 : vector<16x1xf32> to vector<16x16xf32>
    %84 = arith.mulf %79, %83 : vector<16x16xf32>
    %85 = arith.truncf %84 : vector<16x16xf32> to vector<16x16xbf16>
    %86 = arith.truncf %59 : vector<16x32xf32> to vector<16x32xbf16>
    %cst_28 = arith.constant dense<0.000000e+00> : vector<16x32xf32>
    %87 = tpu.matmul %85, %86, %cst_28 {dimension_numbers = #tpu.dot_dimension_numbers<[1], [0], [0], [1], [0, 0, 1, 1], [], []>} : vector<16x16xbf16>, vector<16x32xbf16>, vector<16x32xf32> -> vector<16x32xf32>
    %cst_29 = arith.constant 0.000000e+00 : f32
    %88 = vector.shape_cast %65 : vector<1x32xi1> to vector<1x32xi1>
    %89 = vector.broadcast %88 : vector<1x32xi1> to vector<16x32xi1>
    %90 = vector.broadcast %cst_29 : f32 to vector<16x32xf32>
    %91 = arith.select %89, %87, %90 : vector<16x32xi1>, vector<16x32xf32>
    %92 = arith.addf %60, %91 : vector<16x32xf32>
    %c8_i32_30 = arith.constant 8 : i32
    %93 = vector.broadcast %c8_i32_30 : i32 to vector<1x32xi32>
    %94 = arith.cmpi sge, %26, %93 : vector<1x32xi32>
    %c16_i32 = arith.constant 16 : i32
    %95 = vector.broadcast %c16_i32 : i32 to vector<1x32xi32>
    %96 = arith.cmpi slt, %26, %95 : vector<1x32xi32>
    %97 = arith.andi %94, %96 : vector<1x32xi1>
    %cst_31 = arith.constant 0.000000e+00 : f32
    %98 = vector.shape_cast %97 : vector<1x32xi1> to vector<1x32xi1>
    %99 = vector.broadcast %98 : vector<1x32xi1> to vector<16x32xi1>
    %100 = vector.broadcast %cst_31 : f32 to vector<16x32xf32>
    %101 = arith.select %99, %57, %100 : vector<16x32xi1>, vector<16x32xf32>
    %102 = arith.truncf %101 : vector<16x32xf32> to vector<16x32xbf16>
    %103 = arith.truncf %58 : vector<16x32xf32> to vector<16x32xbf16>
    %cst_32 = arith.constant dense<0.000000e+00> : vector<16x16xf32>
    %104 = tpu.matmul %102, %103, %cst_32 {dimension_numbers = #tpu.dot_dimension_numbers<[1], [1], [0], [0], [0, 0, 1, 0], [], []>} : vector<16x32xbf16>, vector<16x32xbf16>, vector<16x16xf32> -> vector<16x16xf32>
    %cst_33 = arith.constant -1.000000e+30 : f32
    %105 = vector.broadcast %cst_33 : f32 to vector<16x16xf32>
    %106 = arith.select %25, %104, %105 : vector<16x16xi1>, vector<16x16xf32>
    %cst_34 = arith.constant dense<0xFF800000> : vector<16xf32>
    %107 = vector.multi_reduction <maximumf>, %106, %cst_34 [1] : vector<16x16xf32> to vector<16xf32>
    %108 = vector.shape_cast %107 : vector<16xf32> to vector<16x1xf32>
    %109 = vector.broadcast %108 : vector<16x1xf32> to vector<16x16xf32>
    %110 = arith.subf %106, %109 : vector<16x16xf32>
    %111 = math.exp %110 : vector<16x16xf32>
    %cst_35 = arith.constant dense<0.000000e+00> : vector<16xf32>
    %112 = vector.multi_reduction <add>, %111, %cst_35 [1] : vector<16x16xf32> to vector<16xf32>
    %113 = vector.shape_cast %112 : vector<16xf32> to vector<16x1xf32>
    %114 = tpu.reciprocal %113 {approx = true} : vector<16x1xf32> -> vector<16x1xf32>
    %115 = vector.broadcast %114 : vector<16x1xf32> to vector<16x16xf32>
    %116 = arith.mulf %111, %115 : vector<16x16xf32>
    %117 = arith.truncf %116 : vector<16x16xf32> to vector<16x16xbf16>
    %118 = arith.truncf %59 : vector<16x32xf32> to vector<16x32xbf16>
    %cst_36 = arith.constant dense<0.000000e+00> : vector<16x32xf32>
    %119 = tpu.matmul %117, %118, %cst_36 {dimension_numbers = #tpu.dot_dimension_numbers<[1], [0], [0], [1], [0, 0, 1, 1], [], []>} : vector<16x16xbf16>, vector<16x32xbf16>, vector<16x32xf32> -> vector<16x32xf32>
    %cst_37 = arith.constant 0.000000e+00 : f32
    %120 = vector.shape_cast %97 : vector<1x32xi1> to vector<1x32xi1>
    %121 = vector.broadcast %120 : vector<1x32xi1> to vector<16x32xi1>
    %122 = vector.broadcast %cst_37 : f32 to vector<16x32xf32>
    %123 = arith.select %121, %119, %122 : vector<16x32xi1>, vector<16x32xf32>
    %124 = arith.addf %92, %123 : vector<16x32xf32>
    %c16_i32_38 = arith.constant 16 : i32
    %125 = vector.broadcast %c16_i32_38 : i32 to vector<1x32xi32>
    %126 = arith.cmpi sge, %26, %125 : vector<1x32xi32>
    %c24_i32 = arith.constant 24 : i32
    %127 = vector.broadcast %c24_i32 : i32 to vector<1x32xi32>
    %128 = arith.cmpi slt, %26, %127 : vector<1x32xi32>
    %129 = arith.andi %126, %128 : vector<1x32xi1>
    %cst_39 = arith.constant 0.000000e+00 : f32
    %130 = vector.shape_cast %129 : vector<1x32xi1> to vector<1x32xi1>
    %131 = vector.broadcast %130 : vector<1x32xi1> to vector<16x32xi1>
    %132 = vector.broadcast %cst_39 : f32 to vector<16x32xf32>
    %133 = arith.select %131, %57, %132 : vector<16x32xi1>, vector<16x32xf32>
    %134 = arith.truncf %133 : vector<16x32xf32> to vector<16x32xbf16>
    %135 = arith.truncf %58 : vector<16x32xf32> to vector<16x32xbf16>
    %cst_40 = arith.constant dense<0.000000e+00> : vector<16x16xf32>
    %136 = tpu.matmul %134, %135, %cst_40 {dimension_numbers = #tpu.dot_dimension_numbers<[1], [1], [0], [0], [0, 0, 1, 0], [], []>} : vector<16x32xbf16>, vector<16x32xbf16>, vector<16x16xf32> -> vector<16x16xf32>
    %cst_41 = arith.constant -1.000000e+30 : f32
    %137 = vector.broadcast %cst_41 : f32 to vector<16x16xf32>
    %138 = arith.select %25, %136, %137 : vector<16x16xi1>, vector<16x16xf32>
    %cst_42 = arith.constant dense<0xFF800000> : vector<16xf32>
    %139 = vector.multi_reduction <maximumf>, %138, %cst_42 [1] : vector<16x16xf32> to vector<16xf32>
    %140 = vector.shape_cast %139 : vector<16xf32> to vector<16x1xf32>
    %141 = vector.broadcast %140 : vector<16x1xf32> to vector<16x16xf32>
    %142 = arith.subf %138, %141 : vector<16x16xf32>
    %143 = math.exp %142 : vector<16x16xf32>
    %cst_43 = arith.constant dense<0.000000e+00> : vector<16xf32>
    %144 = vector.multi_reduction <add>, %143, %cst_43 [1] : vector<16x16xf32> to vector<16xf32>
    %145 = vector.shape_cast %144 : vector<16xf32> to vector<16x1xf32>
    %146 = tpu.reciprocal %145 {approx = true} : vector<16x1xf32> -> vector<16x1xf32>
    %147 = vector.broadcast %146 : vector<16x1xf32> to vector<16x16xf32>
    %148 = arith.mulf %143, %147 : vector<16x16xf32>
    %149 = arith.truncf %148 : vector<16x16xf32> to vector<16x16xbf16>
    %150 = arith.truncf %59 : vector<16x32xf32> to vector<16x32xbf16>
    %cst_44 = arith.constant dense<0.000000e+00> : vector<16x32xf32>
    %151 = tpu.matmul %149, %150, %cst_44 {dimension_numbers = #tpu.dot_dimension_numbers<[1], [0], [0], [1], [0, 0, 1, 1], [], []>} : vector<16x16xbf16>, vector<16x32xbf16>, vector<16x32xf32> -> vector<16x32xf32>
    %cst_45 = arith.constant 0.000000e+00 : f32
    %152 = vector.shape_cast %129 : vector<1x32xi1> to vector<1x32xi1>
    %153 = vector.broadcast %152 : vector<1x32xi1> to vector<16x32xi1>
    %154 = vector.broadcast %cst_45 : f32 to vector<16x32xf32>
    %155 = arith.select %153, %151, %154 : vector<16x32xi1>, vector<16x32xf32>
    %156 = arith.addf %124, %155 : vector<16x32xf32>
    %c24_i32_46 = arith.constant 24 : i32
    %157 = vector.broadcast %c24_i32_46 : i32 to vector<1x32xi32>
    %158 = arith.cmpi sge, %26, %157 : vector<1x32xi32>
    %c32_i32 = arith.constant 32 : i32
    %159 = vector.broadcast %c32_i32 : i32 to vector<1x32xi32>
    %160 = arith.cmpi slt, %26, %159 : vector<1x32xi32>
    %161 = arith.andi %158, %160 : vector<1x32xi1>
    %cst_47 = arith.constant 0.000000e+00 : f32
    %162 = vector.shape_cast %161 : vector<1x32xi1> to vector<1x32xi1>
    %163 = vector.broadcast %162 : vector<1x32xi1> to vector<16x32xi1>
    %164 = vector.broadcast %cst_47 : f32 to vector<16x32xf32>
    %165 = arith.select %163, %57, %164 : vector<16x32xi1>, vector<16x32xf32>
    %166 = arith.truncf %165 : vector<16x32xf32> to vector<16x32xbf16>
    %167 = arith.truncf %58 : vector<16x32xf32> to vector<16x32xbf16>
    %cst_48 = arith.constant dense<0.000000e+00> : vector<16x16xf32>
    %168 = tpu.matmul %166, %167, %cst_48 {dimension_numbers = #tpu.dot_dimension_numbers<[1], [1], [0], [0], [0, 0, 1, 0], [], []>} : vector<16x32xbf16>, vector<16x32xbf16>, vector<16x16xf32> -> vector<16x16xf32>
    %cst_49 = arith.constant -1.000000e+30 : f32
    %169 = vector.broadcast %cst_49 : f32 to vector<16x16xf32>
    %170 = arith.select %25, %168, %169 : vector<16x16xi1>, vector<16x16xf32>
    %cst_50 = arith.constant dense<0xFF800000> : vector<16xf32>
    %171 = vector.multi_reduction <maximumf>, %170, %cst_50 [1] : vector<16x16xf32> to vector<16xf32>
    %172 = vector.shape_cast %171 : vector<16xf32> to vector<16x1xf32>
    %173 = vector.broadcast %172 : vector<16x1xf32> to vector<16x16xf32>
    %174 = arith.subf %170, %173 : vector<16x16xf32>
    %175 = math.exp %174 : vector<16x16xf32>
    %cst_51 = arith.constant dense<0.000000e+00> : vector<16xf32>
    %176 = vector.multi_reduction <add>, %175, %cst_51 [1] : vector<16x16xf32> to vector<16xf32>
    %177 = vector.shape_cast %176 : vector<16xf32> to vector<16x1xf32>
    %178 = tpu.reciprocal %177 {approx = true} : vector<16x1xf32> -> vector<16x1xf32>
    %179 = vector.broadcast %178 : vector<16x1xf32> to vector<16x16xf32>
    %180 = arith.mulf %175, %179 : vector<16x16xf32>
    %181 = arith.truncf %180 : vector<16x16xf32> to vector<16x16xbf16>
    %182 = arith.truncf %59 : vector<16x32xf32> to vector<16x32xbf16>
    %cst_52 = arith.constant dense<0.000000e+00> : vector<16x32xf32>
    %183 = tpu.matmul %181, %182, %cst_52 {dimension_numbers = #tpu.dot_dimension_numbers<[1], [0], [0], [1], [0, 0, 1, 1], [], []>} : vector<16x16xbf16>, vector<16x32xbf16>, vector<16x32xf32> -> vector<16x32xf32>
    %cst_53 = arith.constant 0.000000e+00 : f32
    %184 = vector.shape_cast %161 : vector<1x32xi1> to vector<1x32xi1>
    %185 = vector.broadcast %184 : vector<1x32xi1> to vector<16x32xi1>
    %186 = vector.broadcast %cst_53 : f32 to vector<16x32xf32>
    %187 = arith.select %185, %183, %186 : vector<16x32xi1>, vector<16x32xf32>
    %188 = arith.addf %156, %187 : vector<16x32xf32>
    %c0_54 = arith.constant 0 : index
    %c0_55 = arith.constant 0 : index
    %c0_56 = arith.constant 0 : index
    %189 = vector.load %arg7[%c0_54, %c0_55, %c0_56] : memref<2x32x32xbf16, #tpu.memory_space<vmem>>, vector<1x32x32xbf16>
    %190 = vector.shape_cast %189 : vector<1x32x32xbf16> to vector<32x32xbf16>
    %191 = arith.truncf %188 : vector<16x32xf32> to vector<16x32xbf16>
    %cst_57 = arith.constant dense<0.000000e+00> : vector<16x32xf32>
    %192 = tpu.matmul %191, %190, %cst_57 {dimension_numbers = #tpu.dot_dimension_numbers<[1], [0], [0], [1], [0, 0, 1, 1], [], []>} : vector<16x32xbf16>, vector<32x32xbf16>, vector<16x32xf32> -> vector<16x32xf32>
    %193 = arith.addf %17, %192 : vector<16x32xf32>
    %c0_58 = arith.constant 0 : index
    %c0_59 = arith.constant 0 : index
    %c0_60 = arith.constant 0 : index
    %194 = vector.load %arg8[%c0_58, %c0_59, %c0_60] : memref<2x1x32xf32, #tpu.memory_space<vmem>>, vector<1x1x32xf32>
    %195 = vector.shape_cast %194 : vector<1x1x32xf32> to vector<1x32xf32>
    %196 = vector.broadcast %195 : vector<1x32xf32> to vector<16x32xf32>
    %197 = arith.addf %193, %196 : vector<16x32xf32>
    %c0_61 = arith.constant 0 : index
    %c0_62 = arith.constant 0 : index
    %c0_63 = arith.constant 0 : index
    %198 = vector.load %arg9[%c0_61, %c0_62, %c0_63] : memref<2x1x32xf32, #tpu.memory_space<vmem>>, vector<1x1x32xf32>
    %199 = vector.shape_cast %198 : vector<1x1x32xf32> to vector<1x32xf32>
    %c0_64 = arith.constant 0 : index
    %c0_65 = arith.constant 0 : index
    %c0_66 = arith.constant 0 : index
    %200 = vector.load %arg10[%c0_64, %c0_65, %c0_66] : memref<2x1x32xf32, #tpu.memory_space<vmem>>, vector<1x1x32xf32>
    %201 = vector.shape_cast %200 : vector<1x1x32xf32> to vector<1x32xf32>
    %cst_67 = arith.constant dense<0.000000e+00> : vector<16xf32>
    %202 = vector.multi_reduction <add>, %197, %cst_67 [1] : vector<16x32xf32> to vector<16xf32>
    %203 = vector.shape_cast %202 : vector<16xf32> to vector<16x1xf32>
    %cst_68 = arith.constant 3.200000e+01 : f32
    %204 = vector.broadcast %cst_68 : f32 to vector<16x1xf32>
    %205 = arith.divf %203, %204 : vector<16x1xf32>
    %206 = vector.broadcast %205 : vector<16x1xf32> to vector<16x32xf32>
    %207 = arith.subf %197, %206 : vector<16x32xf32>
    %208 = arith.mulf %207, %207 : vector<16x32xf32>
    %cst_69 = arith.constant dense<0.000000e+00> : vector<16xf32>
    %209 = vector.multi_reduction <add>, %208, %cst_69 [1] : vector<16x32xf32> to vector<16xf32>
    %210 = vector.shape_cast %209 : vector<16xf32> to vector<16x1xf32>
    %cst_70 = arith.constant 3.200000e+01 : f32
    %211 = vector.broadcast %cst_70 : f32 to vector<16x1xf32>
    %212 = arith.divf %210, %211 : vector<16x1xf32>
    %213 = vector.broadcast %205 : vector<16x1xf32> to vector<16x32xf32>
    %214 = arith.subf %197, %213 : vector<16x32xf32>
    %cst_71 = arith.constant 9.99999974E-6 : f32
    %215 = vector.broadcast %cst_71 : f32 to vector<16x1xf32>
    %216 = arith.addf %212, %215 : vector<16x1xf32>
    %217 = math.rsqrt %216 : vector<16x1xf32>
    %218 = vector.broadcast %217 : vector<16x1xf32> to vector<16x32xf32>
    %219 = arith.mulf %214, %218 : vector<16x32xf32>
    %220 = vector.broadcast %199 : vector<1x32xf32> to vector<16x32xf32>
    %221 = arith.mulf %219, %220 : vector<16x32xf32>
    %222 = vector.broadcast %201 : vector<1x32xf32> to vector<16x32xf32>
    %223 = arith.addf %221, %222 : vector<16x32xf32>
    %c0_72 = arith.constant 0 : index
    %c0_73 = arith.constant 0 : index
    %c0_74 = arith.constant 0 : index
    %224 = vector.load %arg11[%c0_72, %c0_73, %c0_74] : memref<2x32x128xbf16, #tpu.memory_space<vmem>>, vector<1x32x128xbf16>
    %225 = vector.shape_cast %224 : vector<1x32x128xbf16> to vector<32x128xbf16>
    %226 = arith.truncf %223 : vector<16x32xf32> to vector<16x32xbf16>
    %cst_75 = arith.constant dense<0.000000e+00> : vector<16x128xf32>
    %227 = tpu.matmul %226, %225, %cst_75 {dimension_numbers = #tpu.dot_dimension_numbers<[1], [0], [0], [1], [0, 0, 1, 1], [], []>} : vector<16x32xbf16>, vector<32x128xbf16>, vector<16x128xf32> -> vector<16x128xf32>
    %c0_76 = arith.constant 0 : index
    %c0_77 = arith.constant 0 : index
    %c0_78 = arith.constant 0 : index
    %228 = vector.load %arg12[%c0_76, %c0_77, %c0_78] : memref<2x1x128xf32, #tpu.memory_space<vmem>>, vector<1x1x128xf32>
    %229 = vector.shape_cast %228 : vector<1x1x128xf32> to vector<1x128xf32>
    %230 = vector.broadcast %229 : vector<1x128xf32> to vector<16x128xf32>
    %231 = arith.addf %227, %230 : vector<16x128xf32>
    %cst_79 = arith.constant 5.000000e-01 : f32
    %232 = vector.broadcast %cst_79 : f32 to vector<16x128xf32>
    %233 = arith.mulf %232, %231 : vector<16x128xf32>
    %cst_80 = arith.constant 4.471500e-02 : f32
    %234 = vector.broadcast %cst_80 : f32 to vector<16x128xf32>
    %235 = arith.mulf %234, %231 : vector<16x128xf32>
    %236 = arith.mulf %235, %231 : vector<16x128xf32>
    %237 = arith.mulf %236, %231 : vector<16x128xf32>
    %238 = arith.addf %231, %237 : vector<16x128xf32>
    %cst_81 = arith.constant 0.797884583 : f32
    %239 = vector.broadcast %cst_81 : f32 to vector<16x128xf32>
    %240 = arith.mulf %239, %238 : vector<16x128xf32>
    %241 = math.tanh %240 : vector<16x128xf32>
    %cst_82 = arith.constant 1.000000e+00 : f32
    %242 = vector.broadcast %cst_82 : f32 to vector<16x128xf32>
    %243 = arith.addf %242, %241 : vector<16x128xf32>
    %244 = arith.mulf %233, %243 : vector<16x128xf32>
    %c0_83 = arith.constant 0 : index
    %c0_84 = arith.constant 0 : index
    %c0_85 = arith.constant 0 : index
    %245 = vector.load %arg13[%c0_83, %c0_84, %c0_85] : memref<2x128x32xbf16, #tpu.memory_space<vmem>>, vector<1x128x32xbf16>
    %246 = vector.shape_cast %245 : vector<1x128x32xbf16> to vector<128x32xbf16>
    %247 = arith.truncf %244 : vector<16x128xf32> to vector<16x128xbf16>
    %cst_86 = arith.constant dense<0.000000e+00> : vector<16x32xf32>
    %248 = tpu.matmul %247, %246, %cst_86 {dimension_numbers = #tpu.dot_dimension_numbers<[1], [0], [0], [1], [0, 0, 1, 1], [], []>} : vector<16x128xbf16>, vector<128x32xbf16>, vector<16x32xf32> -> vector<16x32xf32>
    %249 = arith.addf %197, %248 : vector<16x32xf32>
    %c0_87 = arith.constant 0 : index
    %c0_88 = arith.constant 0 : index
    %c0_89 = arith.constant 0 : index
    %250 = vector.load %arg14[%c0_87, %c0_88, %c0_89] : memref<2x1x32xf32, #tpu.memory_space<vmem>>, vector<1x1x32xf32>
    %251 = vector.shape_cast %250 : vector<1x1x32xf32> to vector<1x32xf32>
    %252 = vector.broadcast %251 : vector<1x32xf32> to vector<16x32xf32>
    %253 = arith.addf %249, %252 : vector<16x32xf32>
    %c1 = arith.constant 1 : index
    %c0_90 = arith.constant 0 : index
    %c0_91 = arith.constant 0 : index
    %254 = vector.load %arg4[%c1, %c0_90, %c0_91] : memref<2x1x32xf32, #tpu.memory_space<vmem>>, vector<1x1x32xf32>
    %255 = vector.shape_cast %254 : vector<1x1x32xf32> to vector<1x32xf32>
    %c1_92 = arith.constant 1 : index
    %c0_93 = arith.constant 0 : index
    %c0_94 = arith.constant 0 : index
    %256 = vector.load %arg5[%c1_92, %c0_93, %c0_94] : memref<2x1x32xf32, #tpu.memory_space<vmem>>, vector<1x1x32xf32>
    %257 = vector.shape_cast %256 : vector<1x1x32xf32> to vector<1x32xf32>
    %cst_95 = arith.constant dense<0.000000e+00> : vector<16xf32>
    %258 = vector.multi_reduction <add>, %253, %cst_95 [1] : vector<16x32xf32> to vector<16xf32>
    %259 = vector.shape_cast %258 : vector<16xf32> to vector<16x1xf32>
    %cst_96 = arith.constant 3.200000e+01 : f32
    %260 = vector.broadcast %cst_96 : f32 to vector<16x1xf32>
    %261 = arith.divf %259, %260 : vector<16x1xf32>
    %262 = vector.broadcast %261 : vector<16x1xf32> to vector<16x32xf32>
    %263 = arith.subf %253, %262 : vector<16x32xf32>
    %264 = arith.mulf %263, %263 : vector<16x32xf32>
    %cst_97 = arith.constant dense<0.000000e+00> : vector<16xf32>
    %265 = vector.multi_reduction <add>, %264, %cst_97 [1] : vector<16x32xf32> to vector<16xf32>
    %266 = vector.shape_cast %265 : vector<16xf32> to vector<16x1xf32>
    %cst_98 = arith.constant 3.200000e+01 : f32
    %267 = vector.broadcast %cst_98 : f32 to vector<16x1xf32>
    %268 = arith.divf %266, %267 : vector<16x1xf32>
    %269 = vector.broadcast %261 : vector<16x1xf32> to vector<16x32xf32>
    %270 = arith.subf %253, %269 : vector<16x32xf32>
    %cst_99 = arith.constant 9.99999974E-6 : f32
    %271 = vector.broadcast %cst_99 : f32 to vector<16x1xf32>
    %272 = arith.addf %268, %271 : vector<16x1xf32>
    %273 = math.rsqrt %272 : vector<16x1xf32>
    %274 = vector.broadcast %273 : vector<16x1xf32> to vector<16x32xf32>
    %275 = arith.mulf %270, %274 : vector<16x32xf32>
    %276 = vector.broadcast %255 : vector<1x32xf32> to vector<16x32xf32>
    %277 = arith.mulf %275, %276 : vector<16x32xf32>
    %278 = vector.broadcast %257 : vector<1x32xf32> to vector<16x32xf32>
    %279 = arith.addf %277, %278 : vector<16x32xf32>
    %c1_100 = arith.constant 1 : index
    %c0_101 = arith.constant 0 : index
    %c0_102 = arith.constant 0 : index
    %280 = vector.load %arg6[%c1_100, %c0_101, %c0_102] : memref<2x32x96xbf16, #tpu.memory_space<vmem>>, vector<1x32x96xbf16>
    %281 = vector.shape_cast %280 : vector<1x32x96xbf16> to vector<32x96xbf16>
    %282 = arith.truncf %279 : vector<16x32xf32> to vector<16x32xbf16>
    %cst_103 = arith.constant dense<0.000000e+00> : vector<16x96xf32>
    %283 = tpu.matmul %282, %281, %cst_103 {dimension_numbers = #tpu.dot_dimension_numbers<[1], [0], [0], [1], [0, 0, 1, 1], [], []>} : vector<16x32xbf16>, vector<32x96xbf16>, vector<16x96xf32> -> vector<16x96xf32>
    %284 = vector.extract_strided_slice %283 {offsets = [0, 0], sizes = [16, 32], strides = [1, 1]} : vector<16x96xf32> to vector<16x32xf32>
    %285 = vector.extract_strided_slice %283 {offsets = [0, 32], sizes = [16, 32], strides = [1, 1]} : vector<16x96xf32> to vector<16x32xf32>
    %286 = vector.extract_strided_slice %283 {offsets = [0, 64], sizes = [16, 32], strides = [1, 1]} : vector<16x96xf32> to vector<16x32xf32>
    %cst_104 = arith.constant 0.000000e+00 : f32
    %287 = vector.broadcast %cst_104 : f32 to vector<16x32xf32>
    %c0_i32_105 = arith.constant 0 : i32
    %288 = vector.broadcast %c0_i32_105 : i32 to vector<1x32xi32>
    %289 = arith.cmpi sge, %26, %288 : vector<1x32xi32>
    %c8_i32_106 = arith.constant 8 : i32
    %290 = vector.broadcast %c8_i32_106 : i32 to vector<1x32xi32>
    %291 = arith.cmpi slt, %26, %290 : vector<1x32xi32>
    %292 = arith.andi %289, %291 : vector<1x32xi1>
    %cst_107 = arith.constant 0.000000e+00 : f32
    %293 = vector.shape_cast %292 : vector<1x32xi1> to vector<1x32xi1>
    %294 = vector.broadcast %293 : vector<1x32xi1> to vector<16x32xi1>
    %295 = vector.broadcast %cst_107 : f32 to vector<16x32xf32>
    %296 = arith.select %294, %284, %295 : vector<16x32xi1>, vector<16x32xf32>
    %297 = arith.truncf %296 : vector<16x32xf32> to vector<16x32xbf16>
    %298 = arith.truncf %285 : vector<16x32xf32> to vector<16x32xbf16>
    %cst_108 = arith.constant dense<0.000000e+00> : vector<16x16xf32>
    %299 = tpu.matmul %297, %298, %cst_108 {dimension_numbers = #tpu.dot_dimension_numbers<[1], [1], [0], [0], [0, 0, 1, 0], [], []>} : vector<16x32xbf16>, vector<16x32xbf16>, vector<16x16xf32> -> vector<16x16xf32>
    %cst_109 = arith.constant -1.000000e+30 : f32
    %300 = vector.broadcast %cst_109 : f32 to vector<16x16xf32>
    %301 = arith.select %25, %299, %300 : vector<16x16xi1>, vector<16x16xf32>
    %cst_110 = arith.constant dense<0xFF800000> : vector<16xf32>
    %302 = vector.multi_reduction <maximumf>, %301, %cst_110 [1] : vector<16x16xf32> to vector<16xf32>
    %303 = vector.shape_cast %302 : vector<16xf32> to vector<16x1xf32>
    %304 = vector.broadcast %303 : vector<16x1xf32> to vector<16x16xf32>
    %305 = arith.subf %301, %304 : vector<16x16xf32>
    %306 = math.exp %305 : vector<16x16xf32>
    %cst_111 = arith.constant dense<0.000000e+00> : vector<16xf32>
    %307 = vector.multi_reduction <add>, %306, %cst_111 [1] : vector<16x16xf32> to vector<16xf32>
    %308 = vector.shape_cast %307 : vector<16xf32> to vector<16x1xf32>
    %309 = tpu.reciprocal %308 {approx = true} : vector<16x1xf32> -> vector<16x1xf32>
    %310 = vector.broadcast %309 : vector<16x1xf32> to vector<16x16xf32>
    %311 = arith.mulf %306, %310 : vector<16x16xf32>
    %312 = arith.truncf %311 : vector<16x16xf32> to vector<16x16xbf16>
    %313 = arith.truncf %286 : vector<16x32xf32> to vector<16x32xbf16>
    %cst_112 = arith.constant dense<0.000000e+00> : vector<16x32xf32>
    %314 = tpu.matmul %312, %313, %cst_112 {dimension_numbers = #tpu.dot_dimension_numbers<[1], [0], [0], [1], [0, 0, 1, 1], [], []>} : vector<16x16xbf16>, vector<16x32xbf16>, vector<16x32xf32> -> vector<16x32xf32>
    %cst_113 = arith.constant 0.000000e+00 : f32
    %315 = vector.shape_cast %292 : vector<1x32xi1> to vector<1x32xi1>
    %316 = vector.broadcast %315 : vector<1x32xi1> to vector<16x32xi1>
    %317 = vector.broadcast %cst_113 : f32 to vector<16x32xf32>
    %318 = arith.select %316, %314, %317 : vector<16x32xi1>, vector<16x32xf32>
    %319 = arith.addf %287, %318 : vector<16x32xf32>
    %c8_i32_114 = arith.constant 8 : i32
    %320 = vector.broadcast %c8_i32_114 : i32 to vector<1x32xi32>
    %321 = arith.cmpi sge, %26, %320 : vector<1x32xi32>
    %c16_i32_115 = arith.constant 16 : i32
    %322 = vector.broadcast %c16_i32_115 : i32 to vector<1x32xi32>
    %323 = arith.cmpi slt, %26, %322 : vector<1x32xi32>
    %324 = arith.andi %321, %323 : vector<1x32xi1>
    %cst_116 = arith.constant 0.000000e+00 : f32
    %325 = vector.shape_cast %324 : vector<1x32xi1> to vector<1x32xi1>
    %326 = vector.broadcast %325 : vector<1x32xi1> to vector<16x32xi1>
    %327 = vector.broadcast %cst_116 : f32 to vector<16x32xf32>
    %328 = arith.select %326, %284, %327 : vector<16x32xi1>, vector<16x32xf32>
    %329 = arith.truncf %328 : vector<16x32xf32> to vector<16x32xbf16>
    %330 = arith.truncf %285 : vector<16x32xf32> to vector<16x32xbf16>
    %cst_117 = arith.constant dense<0.000000e+00> : vector<16x16xf32>
    %331 = tpu.matmul %329, %330, %cst_117 {dimension_numbers = #tpu.dot_dimension_numbers<[1], [1], [0], [0], [0, 0, 1, 0], [], []>} : vector<16x32xbf16>, vector<16x32xbf16>, vector<16x16xf32> -> vector<16x16xf32>
    %cst_118 = arith.constant -1.000000e+30 : f32
    %332 = vector.broadcast %cst_118 : f32 to vector<16x16xf32>
    %333 = arith.select %25, %331, %332 : vector<16x16xi1>, vector<16x16xf32>
    %cst_119 = arith.constant dense<0xFF800000> : vector<16xf32>
    %334 = vector.multi_reduction <maximumf>, %333, %cst_119 [1] : vector<16x16xf32> to vector<16xf32>
    %335 = vector.shape_cast %334 : vector<16xf32> to vector<16x1xf32>
    %336 = vector.broadcast %335 : vector<16x1xf32> to vector<16x16xf32>
    %337 = arith.subf %333, %336 : vector<16x16xf32>
    %338 = math.exp %337 : vector<16x16xf32>
    %cst_120 = arith.constant dense<0.000000e+00> : vector<16xf32>
    %339 = vector.multi_reduction <add>, %338, %cst_120 [1] : vector<16x16xf32> to vector<16xf32>
    %340 = vector.shape_cast %339 : vector<16xf32> to vector<16x1xf32>
    %341 = tpu.reciprocal %340 {approx = true} : vector<16x1xf32> -> vector<16x1xf32>
    %342 = vector.broadcast %341 : vector<16x1xf32> to vector<16x16xf32>
    %343 = arith.mulf %338, %342 : vector<16x16xf32>
    %344 = arith.truncf %343 : vector<16x16xf32> to vector<16x16xbf16>
    %345 = arith.truncf %286 : vector<16x32xf32> to vector<16x32xbf16>
    %cst_121 = arith.constant dense<0.000000e+00> : vector<16x32xf32>
    %346 = tpu.matmul %344, %345, %cst_121 {dimension_numbers = #tpu.dot_dimension_numbers<[1], [0], [0], [1], [0, 0, 1, 1], [], []>} : vector<16x16xbf16>, vector<16x32xbf16>, vector<16x32xf32> -> vector<16x32xf32>
    %cst_122 = arith.constant 0.000000e+00 : f32
    %347 = vector.shape_cast %324 : vector<1x32xi1> to vector<1x32xi1>
    %348 = vector.broadcast %347 : vector<1x32xi1> to vector<16x32xi1>
    %349 = vector.broadcast %cst_122 : f32 to vector<16x32xf32>
    %350 = arith.select %348, %346, %349 : vector<16x32xi1>, vector<16x32xf32>
    %351 = arith.addf %319, %350 : vector<16x32xf32>
    %c16_i32_123 = arith.constant 16 : i32
    %352 = vector.broadcast %c16_i32_123 : i32 to vector<1x32xi32>
    %353 = arith.cmpi sge, %26, %352 : vector<1x32xi32>
    %c24_i32_124 = arith.constant 24 : i32
    %354 = vector.broadcast %c24_i32_124 : i32 to vector<1x32xi32>
    %355 = arith.cmpi slt, %26, %354 : vector<1x32xi32>
    %356 = arith.andi %353, %355 : vector<1x32xi1>
    %cst_125 = arith.constant 0.000000e+00 : f32
    %357 = vector.shape_cast %356 : vector<1x32xi1> to vector<1x32xi1>
    %358 = vector.broadcast %357 : vector<1x32xi1> to vector<16x32xi1>
    %359 = vector.broadcast %cst_125 : f32 to vector<16x32xf32>
    %360 = arith.select %358, %284, %359 : vector<16x32xi1>, vector<16x32xf32>
    %361 = arith.truncf %360 : vector<16x32xf32> to vector<16x32xbf16>
    %362 = arith.truncf %285 : vector<16x32xf32> to vector<16x32xbf16>
    %cst_126 = arith.constant dense<0.000000e+00> : vector<16x16xf32>
    %363 = tpu.matmul %361, %362, %cst_126 {dimension_numbers = #tpu.dot_dimension_numbers<[1], [1], [0], [0], [0, 0, 1, 0], [], []>} : vector<16x32xbf16>, vector<16x32xbf16>, vector<16x16xf32> -> vector<16x16xf32>
    %cst_127 = arith.constant -1.000000e+30 : f32
    %364 = vector.broadcast %cst_127 : f32 to vector<16x16xf32>
    %365 = arith.select %25, %363, %364 : vector<16x16xi1>, vector<16x16xf32>
    %cst_128 = arith.constant dense<0xFF800000> : vector<16xf32>
    %366 = vector.multi_reduction <maximumf>, %365, %cst_128 [1] : vector<16x16xf32> to vector<16xf32>
    %367 = vector.shape_cast %366 : vector<16xf32> to vector<16x1xf32>
    %368 = vector.broadcast %367 : vector<16x1xf32> to vector<16x16xf32>
    %369 = arith.subf %365, %368 : vector<16x16xf32>
    %370 = math.exp %369 : vector<16x16xf32>
    %cst_129 = arith.constant dense<0.000000e+00> : vector<16xf32>
    %371 = vector.multi_reduction <add>, %370, %cst_129 [1] : vector<16x16xf32> to vector<16xf32>
    %372 = vector.shape_cast %371 : vector<16xf32> to vector<16x1xf32>
    %373 = tpu.reciprocal %372 {approx = true} : vector<16x1xf32> -> vector<16x1xf32>
    %374 = vector.broadcast %373 : vector<16x1xf32> to vector<16x16xf32>
    %375 = arith.mulf %370, %374 : vector<16x16xf32>
    %376 = arith.truncf %375 : vector<16x16xf32> to vector<16x16xbf16>
    %377 = arith.truncf %286 : vector<16x32xf32> to vector<16x32xbf16>
    %cst_130 = arith.constant dense<0.000000e+00> : vector<16x32xf32>
    %378 = tpu.matmul %376, %377, %cst_130 {dimension_numbers = #tpu.dot_dimension_numbers<[1], [0], [0], [1], [0, 0, 1, 1], [], []>} : vector<16x16xbf16>, vector<16x32xbf16>, vector<16x32xf32> -> vector<16x32xf32>
    %cst_131 = arith.constant 0.000000e+00 : f32
    %379 = vector.shape_cast %356 : vector<1x32xi1> to vector<1x32xi1>
    %380 = vector.broadcast %379 : vector<1x32xi1> to vector<16x32xi1>
    %381 = vector.broadcast %cst_131 : f32 to vector<16x32xf32>
    %382 = arith.select %380, %378, %381 : vector<16x32xi1>, vector<16x32xf32>
    %383 = arith.addf %351, %382 : vector<16x32xf32>
    %c24_i32_132 = arith.constant 24 : i32
    %384 = vector.broadcast %c24_i32_132 : i32 to vector<1x32xi32>
    %385 = arith.cmpi sge, %26, %384 : vector<1x32xi32>
    %c32_i32_133 = arith.constant 32 : i32
    %386 = vector.broadcast %c32_i32_133 : i32 to vector<1x32xi32>
    %387 = arith.cmpi slt, %26, %386 : vector<1x32xi32>
    %388 = arith.andi %385, %387 : vector<1x32xi1>
    %cst_134 = arith.constant 0.000000e+00 : f32
    %389 = vector.shape_cast %388 : vector<1x32xi1> to vector<1x32xi1>
    %390 = vector.broadcast %389 : vector<1x32xi1> to vector<16x32xi1>
    %391 = vector.broadcast %cst_134 : f32 to vector<16x32xf32>
    %392 = arith.select %390, %284, %391 : vector<16x32xi1>, vector<16x32xf32>
    %393 = arith.truncf %392 : vector<16x32xf32> to vector<16x32xbf16>
    %394 = arith.truncf %285 : vector<16x32xf32> to vector<16x32xbf16>
    %cst_135 = arith.constant dense<0.000000e+00> : vector<16x16xf32>
    %395 = tpu.matmul %393, %394, %cst_135 {dimension_numbers = #tpu.dot_dimension_numbers<[1], [1], [0], [0], [0, 0, 1, 0], [], []>} : vector<16x32xbf16>, vector<16x32xbf16>, vector<16x16xf32> -> vector<16x16xf32>
    %cst_136 = arith.constant -1.000000e+30 : f32
    %396 = vector.broadcast %cst_136 : f32 to vector<16x16xf32>
    %397 = arith.select %25, %395, %396 : vector<16x16xi1>, vector<16x16xf32>
    %cst_137 = arith.constant dense<0xFF800000> : vector<16xf32>
    %398 = vector.multi_reduction <maximumf>, %397, %cst_137 [1] : vector<16x16xf32> to vector<16xf32>
    %399 = vector.shape_cast %398 : vector<16xf32> to vector<16x1xf32>
    %400 = vector.broadcast %399 : vector<16x1xf32> to vector<16x16xf32>
    %401 = arith.subf %397, %400 : vector<16x16xf32>
    %402 = math.exp %401 : vector<16x16xf32>
    %cst_138 = arith.constant dense<0.000000e+00> : vector<16xf32>
    %403 = vector.multi_reduction <add>, %402, %cst_138 [1] : vector<16x16xf32> to vector<16xf32>
    %404 = vector.shape_cast %403 : vector<16xf32> to vector<16x1xf32>
    %405 = tpu.reciprocal %404 {approx = true} : vector<16x1xf32> -> vector<16x1xf32>
    %406 = vector.broadcast %405 : vector<16x1xf32> to vector<16x16xf32>
    %407 = arith.mulf %402, %406 : vector<16x16xf32>
    %408 = arith.truncf %407 : vector<16x16xf32> to vector<16x16xbf16>
    %409 = arith.truncf %286 : vector<16x32xf32> to vector<16x32xbf16>
    %cst_139 = arith.constant dense<0.000000e+00> : vector<16x32xf32>
    %410 = tpu.matmul %408, %409, %cst_139 {dimension_numbers = #tpu.dot_dimension_numbers<[1], [0], [0], [1], [0, 0, 1, 1], [], []>} : vector<16x16xbf16>, vector<16x32xbf16>, vector<16x32xf32> -> vector<16x32xf32>
    %cst_140 = arith.constant 0.000000e+00 : f32
    %411 = vector.shape_cast %388 : vector<1x32xi1> to vector<1x32xi1>
    %412 = vector.broadcast %411 : vector<1x32xi1> to vector<16x32xi1>
    %413 = vector.broadcast %cst_140 : f32 to vector<16x32xf32>
    %414 = arith.select %412, %410, %413 : vector<16x32xi1>, vector<16x32xf32>
    %415 = arith.addf %383, %414 : vector<16x32xf32>
    %c1_141 = arith.constant 1 : index
    %c0_142 = arith.constant 0 : index
    %c0_143 = arith.constant 0 : index
    %416 = vector.load %arg7[%c1_141, %c0_142, %c0_143] : memref<2x32x32xbf16, #tpu.memory_space<vmem>>, vector<1x32x32xbf16>
    %417 = vector.shape_cast %416 : vector<1x32x32xbf16> to vector<32x32xbf16>
    %418 = arith.truncf %415 : vector<16x32xf32> to vector<16x32xbf16>
    %cst_144 = arith.constant dense<0.000000e+00> : vector<16x32xf32>
    %419 = tpu.matmul %418, %417, %cst_144 {dimension_numbers = #tpu.dot_dimension_numbers<[1], [0], [0], [1], [0, 0, 1, 1], [], []>} : vector<16x32xbf16>, vector<32x32xbf16>, vector<16x32xf32> -> vector<16x32xf32>
    %420 = arith.addf %253, %419 : vector<16x32xf32>
    %c1_145 = arith.constant 1 : index
    %c0_146 = arith.constant 0 : index
    %c0_147 = arith.constant 0 : index
    %421 = vector.load %arg8[%c1_145, %c0_146, %c0_147] : memref<2x1x32xf32, #tpu.memory_space<vmem>>, vector<1x1x32xf32>
    %422 = vector.shape_cast %421 : vector<1x1x32xf32> to vector<1x32xf32>
    %423 = vector.broadcast %422 : vector<1x32xf32> to vector<16x32xf32>
    %424 = arith.addf %420, %423 : vector<16x32xf32>
    %c1_148 = arith.constant 1 : index
    %c0_149 = arith.constant 0 : index
    %c0_150 = arith.constant 0 : index
    %425 = vector.load %arg9[%c1_148, %c0_149, %c0_150] : memref<2x1x32xf32, #tpu.memory_space<vmem>>, vector<1x1x32xf32>
    %426 = vector.shape_cast %425 : vector<1x1x32xf32> to vector<1x32xf32>
    %c1_151 = arith.constant 1 : index
    %c0_152 = arith.constant 0 : index
    %c0_153 = arith.constant 0 : index
    %427 = vector.load %arg10[%c1_151, %c0_152, %c0_153] : memref<2x1x32xf32, #tpu.memory_space<vmem>>, vector<1x1x32xf32>
    %428 = vector.shape_cast %427 : vector<1x1x32xf32> to vector<1x32xf32>
    %cst_154 = arith.constant dense<0.000000e+00> : vector<16xf32>
    %429 = vector.multi_reduction <add>, %424, %cst_154 [1] : vector<16x32xf32> to vector<16xf32>
    %430 = vector.shape_cast %429 : vector<16xf32> to vector<16x1xf32>
    %cst_155 = arith.constant 3.200000e+01 : f32
    %431 = vector.broadcast %cst_155 : f32 to vector<16x1xf32>
    %432 = arith.divf %430, %431 : vector<16x1xf32>
    %433 = vector.broadcast %432 : vector<16x1xf32> to vector<16x32xf32>
    %434 = arith.subf %424, %433 : vector<16x32xf32>
    %435 = arith.mulf %434, %434 : vector<16x32xf32>
    %cst_156 = arith.constant dense<0.000000e+00> : vector<16xf32>
    %436 = vector.multi_reduction <add>, %435, %cst_156 [1] : vector<16x32xf32> to vector<16xf32>
    %437 = vector.shape_cast %436 : vector<16xf32> to vector<16x1xf32>
    %cst_157 = arith.constant 3.200000e+01 : f32
    %438 = vector.broadcast %cst_157 : f32 to vector<16x1xf32>
    %439 = arith.divf %437, %438 : vector<16x1xf32>
    %440 = vector.broadcast %432 : vector<16x1xf32> to vector<16x32xf32>
    %441 = arith.subf %424, %440 : vector<16x32xf32>
    %cst_158 = arith.constant 9.99999974E-6 : f32
    %442 = vector.broadcast %cst_158 : f32 to vector<16x1xf32>
    %443 = arith.addf %439, %442 : vector<16x1xf32>
    %444 = math.rsqrt %443 : vector<16x1xf32>
    %445 = vector.broadcast %444 : vector<16x1xf32> to vector<16x32xf32>
    %446 = arith.mulf %441, %445 : vector<16x32xf32>
    %447 = vector.broadcast %426 : vector<1x32xf32> to vector<16x32xf32>
    %448 = arith.mulf %446, %447 : vector<16x32xf32>
    %449 = vector.broadcast %428 : vector<1x32xf32> to vector<16x32xf32>
    %450 = arith.addf %448, %449 : vector<16x32xf32>
    %c1_159 = arith.constant 1 : index
    %c0_160 = arith.constant 0 : index
    %c0_161 = arith.constant 0 : index
    %451 = vector.load %arg11[%c1_159, %c0_160, %c0_161] : memref<2x32x128xbf16, #tpu.memory_space<vmem>>, vector<1x32x128xbf16>
    %452 = vector.shape_cast %451 : vector<1x32x128xbf16> to vector<32x128xbf16>
    %453 = arith.truncf %450 : vector<16x32xf32> to vector<16x32xbf16>
    %cst_162 = arith.constant dense<0.000000e+00> : vector<16x128xf32>
    %454 = tpu.matmul %453, %452, %cst_162 {dimension_numbers = #tpu.dot_dimension_numbers<[1], [0], [0], [1], [0, 0, 1, 1], [], []>} : vector<16x32xbf16>, vector<32x128xbf16>, vector<16x128xf32> -> vector<16x128xf32>
    %c1_163 = arith.constant 1 : index
    %c0_164 = arith.constant 0 : index
    %c0_165 = arith.constant 0 : index
    %455 = vector.load %arg12[%c1_163, %c0_164, %c0_165] : memref<2x1x128xf32, #tpu.memory_space<vmem>>, vector<1x1x128xf32>
    %456 = vector.shape_cast %455 : vector<1x1x128xf32> to vector<1x128xf32>
    %457 = vector.broadcast %456 : vector<1x128xf32> to vector<16x128xf32>
    %458 = arith.addf %454, %457 : vector<16x128xf32>
    %cst_166 = arith.constant 5.000000e-01 : f32
    %459 = vector.broadcast %cst_166 : f32 to vector<16x128xf32>
    %460 = arith.mulf %459, %458 : vector<16x128xf32>
    %cst_167 = arith.constant 4.471500e-02 : f32
    %461 = vector.broadcast %cst_167 : f32 to vector<16x128xf32>
    %462 = arith.mulf %461, %458 : vector<16x128xf32>
    %463 = arith.mulf %462, %458 : vector<16x128xf32>
    %464 = arith.mulf %463, %458 : vector<16x128xf32>
    %465 = arith.addf %458, %464 : vector<16x128xf32>
    %cst_168 = arith.constant 0.797884583 : f32
    %466 = vector.broadcast %cst_168 : f32 to vector<16x128xf32>
    %467 = arith.mulf %466, %465 : vector<16x128xf32>
    %468 = math.tanh %467 : vector<16x128xf32>
    %cst_169 = arith.constant 1.000000e+00 : f32
    %469 = vector.broadcast %cst_169 : f32 to vector<16x128xf32>
    %470 = arith.addf %469, %468 : vector<16x128xf32>
    %471 = arith.mulf %460, %470 : vector<16x128xf32>
    %c1_170 = arith.constant 1 : index
    %c0_171 = arith.constant 0 : index
    %c0_172 = arith.constant 0 : index
    %472 = vector.load %arg13[%c1_170, %c0_171, %c0_172] : memref<2x128x32xbf16, #tpu.memory_space<vmem>>, vector<1x128x32xbf16>
    %473 = vector.shape_cast %472 : vector<1x128x32xbf16> to vector<128x32xbf16>
    %474 = arith.truncf %471 : vector<16x128xf32> to vector<16x128xbf16>
    %cst_173 = arith.constant dense<0.000000e+00> : vector<16x32xf32>
    %475 = tpu.matmul %474, %473, %cst_173 {dimension_numbers = #tpu.dot_dimension_numbers<[1], [0], [0], [1], [0, 0, 1, 1], [], []>} : vector<16x128xbf16>, vector<128x32xbf16>, vector<16x32xf32> -> vector<16x32xf32>
    %476 = arith.addf %424, %475 : vector<16x32xf32>
    %c1_174 = arith.constant 1 : index
    %c0_175 = arith.constant 0 : index
    %c0_176 = arith.constant 0 : index
    %477 = vector.load %arg14[%c1_174, %c0_175, %c0_176] : memref<2x1x32xf32, #tpu.memory_space<vmem>>, vector<1x1x32xf32>
    %478 = vector.shape_cast %477 : vector<1x1x32xf32> to vector<1x32xf32>
    %479 = vector.broadcast %478 : vector<1x32xf32> to vector<16x32xf32>
    %480 = arith.addf %476, %479 : vector<16x32xf32>
    %c0_177 = arith.constant 0 : index
    %c0_178 = arith.constant 0 : index
    %481 = vector.load %arg15[%c0_177, %c0_178] : memref<1x32xf32, #tpu.memory_space<vmem>>, vector<1x32xf32>
    %c0_179 = arith.constant 0 : index
    %c0_180 = arith.constant 0 : index
    %482 = vector.load %arg16[%c0_179, %c0_180] : memref<1x32xf32, #tpu.memory_space<vmem>>, vector<1x32xf32>
    %cst_181 = arith.constant dense<0.000000e+00> : vector<16xf32>
    %483 = vector.multi_reduction <add>, %480, %cst_181 [1] : vector<16x32xf32> to vector<16xf32>
    %484 = vector.shape_cast %483 : vector<16xf32> to vector<16x1xf32>
    %cst_182 = arith.constant 3.200000e+01 : f32
    %485 = vector.broadcast %cst_182 : f32 to vector<16x1xf32>
    %486 = arith.divf %484, %485 : vector<16x1xf32>
    %487 = vector.broadcast %486 : vector<16x1xf32> to vector<16x32xf32>
    %488 = arith.subf %480, %487 : vector<16x32xf32>
    %489 = arith.mulf %488, %488 : vector<16x32xf32>
    %cst_183 = arith.constant dense<0.000000e+00> : vector<16xf32>
    %490 = vector.multi_reduction <add>, %489, %cst_183 [1] : vector<16x32xf32> to vector<16xf32>
    %491 = vector.shape_cast %490 : vector<16xf32> to vector<16x1xf32>
    %cst_184 = arith.constant 3.200000e+01 : f32
    %492 = vector.broadcast %cst_184 : f32 to vector<16x1xf32>
    %493 = arith.divf %491, %492 : vector<16x1xf32>
    %494 = vector.broadcast %486 : vector<16x1xf32> to vector<16x32xf32>
    %495 = arith.subf %480, %494 : vector<16x32xf32>
    %cst_185 = arith.constant 9.99999974E-6 : f32
    %496 = vector.broadcast %cst_185 : f32 to vector<16x1xf32>
    %497 = arith.addf %493, %496 : vector<16x1xf32>
    %498 = math.rsqrt %497 : vector<16x1xf32>
    %499 = vector.broadcast %498 : vector<16x1xf32> to vector<16x32xf32>
    %500 = arith.mulf %495, %499 : vector<16x32xf32>
    %501 = vector.broadcast %481 : vector<1x32xf32> to vector<16x32xf32>
    %502 = arith.mulf %500, %501 : vector<16x32xf32>
    %503 = vector.broadcast %482 : vector<1x32xf32> to vector<16x32xf32>
    %504 = arith.addf %502, %503 : vector<16x32xf32>
    %c0_186 = arith.constant 0 : index
    %c0_187 = arith.constant 0 : index
    %505 = vector.load %arg17[%c0_186, %c0_187] : memref<32x128xbf16, #tpu.memory_space<vmem>>, vector<32x128xbf16>
    %506 = arith.truncf %504 : vector<16x32xf32> to vector<16x32xbf16>
    %cst_188 = arith.constant dense<0.000000e+00> : vector<16x128xf32>
    %507 = tpu.matmul %506, %505, %cst_188 {dimension_numbers = #tpu.dot_dimension_numbers<[1], [0], [0], [1], [0, 0, 1, 1], [], []>} : vector<16x32xbf16>, vector<32x128xbf16>, vector<16x128xf32> -> vector<16x128xf32>
    %c0_189 = arith.constant 0 : index
    %c0_190 = arith.constant 0 : index
    %508 = vector.load %arg18[%c0_189, %c0_190] : memref<16x128xf32, #tpu.memory_space<vmem>>, vector<16x128xf32>
    tpu.vector_store %arg18[%c0_189, %c0_190], %507 {strides = array<i32>} : memref<16x128xf32, #tpu.memory_space<vmem>>, vector<16x128xf32>,
    return
  }
  func.func @transform_0(%arg0: i32) -> (i32, i32) {
    %c0_i32 = arith.constant 0 : i32
    %c0_i32_0 = arith.constant 0 : i32
    %c0_i32_1 = arith.constant 0 : i32
    return %c0_i32, %c0_i32_0 : i32, i32
  }
  func.func @transform_1(%arg0: i32) -> (i32, i32) {
    %c0_i32 = arith.constant 0 : i32
    %c0_i32_0 = arith.constant 0 : i32
    %c0_i32_1 = arith.constant 0 : i32
    return %c0_i32, %c0_i32_0 : i32, i32
  }
  func.func @transform_2(%arg0: i32) -> (i32, i32) {
    %c0_i32 = arith.constant 0 : i32
    %c0_i32_0 = arith.constant 0 : i32
    %c0_i32_1 = arith.constant 0 : i32
    return %c0_i32, %c0_i32_0 : i32, i32
  }
  func.func @transform_3(%arg0: i32) -> (i32, i32, i32) {
    %c0_i32 = arith.constant 0 : i32
    %c0_i32_0 = arith.constant 0 : i32
    %c0_i32_1 = arith.constant 0 : i32
    %c0_i32_2 = arith.constant 0 : i32
    return %c0_i32, %c0_i32_0, %c0_i32_1 : i32, i32, i32
  }
  func.func @transform_4(%arg0: i32) -> (i32, i32, i32) {
    %c0_i32 = arith.constant 0 : i32
    %c0_i32_0 = arith.constant 0 : i32
    %c0_i32_1 = arith.constant 0 : i32
    %c0_i32_2 = arith.constant 0 : i32
    return %c0_i32, %c0_i32_0, %c0_i32_1 : i32, i32, i32
  }
  func.func @transform_5(%arg0: i32) -> (i32, i32, i32) {
    %c0_i32 = arith.constant 0 : i32
    %c0_i32_0 = arith.constant 0 : i32
    %c0_i32_1 = arith.constant 0 : i32
    %c0_i32_2 = arith.constant 0 : i32
    return %c0_i32, %c0_i32_0, %c0_i32_1 : i32, i32, i32
  }
  func.func @transform_6(%arg0: i32) -> (i32, i32, i32) {
    %c0_i32 = arith.constant 0 : i32
    %c0_i32_0 = arith.constant 0 : i32
    %c0_i32_1 = arith.constant 0 : i32
    %c0_i32_2 = arith.constant 0 : i32
    return %c0_i32, %c0_i32_0, %c0_i32_1 : i32, i32, i32
  }
  func.func @transform_7(%arg0: i32) -> (i32, i32, i32) {
    %c0_i32 = arith.constant 0 : i32
    %c0_i32_0 = arith.constant 0 : i32
    %c0_i32_1 = arith.constant 0 : i32
    %c0_i32_2 = arith.constant 0 : i32
    return %c0_i32, %c0_i32_0, %c0_i32_1 : i32, i32, i32
  }
  func.func @transform_8(%arg0: i32) -> (i32, i32, i32) {
    %c0_i32 = arith.constant 0 : i32
    %c0_i32_0 = arith.constant 0 : i32
    %c0_i32_1 = arith.constant 0 : i32
    %c0_i32_2 = arith.constant 0 : i32
    return %c0_i32, %c0_i32_0, %c0_i32_1 : i32, i32, i32
  }
  func.func @transform_9(%arg0: i32) -> (i32, i32, i32) {
    %c0_i32 = arith.constant 0 : i32
    %c0_i32_0 = arith.constant 0 : i32
    %c0_i32_1 = arith.constant 0 : i32
    %c0_i32_2 = arith.constant 0 : i32
    return %c0_i32, %c0_i32_0, %c0_i32_1 : i32, i32, i32
  }
  func.func @transform_10(%arg0: i32) -> (i32, i32, i32) {
    %c0_i32 = arith.constant 0 : i32
    %c0_i32_0 = arith.constant 0 : i32
    %c0_i32_1 = arith.constant 0 : i32
    %c0_i32_2 = arith.constant 0 : i32
    return %c0_i32, %c0_i32_0, %c0_i32_1 : i32, i32, i32
  }
  func.func @transform_11(%arg0: i32) -> (i32, i32, i32) {
    %c0_i32 = arith.constant 0 : i32
    %c0_i32_0 = arith.constant 0 : i32
    %c0_i32_1 = arith.constant 0 : i32
    %c0_i32_2 = arith.constant 0 : i32
    return %c0_i32, %c0_i32_0, %c0_i32_1 : i32, i32, i32
  }
  func.func @transform_12(%arg0: i32) -> (i32, i32, i32) {
    %c0_i32 = arith.constant 0 : i32
    %c0_i32_0 = arith.constant 0 : i32
    %c0_i32_1 = arith.constant 0 : i32
    %c0_i32_2 = arith.constant 0 : i32
    return %c0_i32, %c0_i32_0, %c0_i32_1 : i32, i32, i32
  }
  func.func @transform_13(%arg0: i32) -> (i32, i32, i32) {
    %c0_i32 = arith.constant 0 : i32
    %c0_i32_0 = arith.constant 0 : i32
    %c0_i32_1 = arith.constant 0 : i32
    %c0_i32_2 = arith.constant 0 : i32
    return %c0_i32, %c0_i32_0, %c0_i32_1 : i32, i32, i32
  }
  func.func @transform_14(%arg0: i32) -> (i32, i32) {
    %c0_i32 = arith.constant 0 : i32
    %c0_i32_0 = arith.constant 0 : i32
    %c0_i32_1 = arith.constant 0 : i32
    return %c0_i32, %c0_i32_0 : i32, i32
  }
  func.func @transform_15(%arg0: i32) -> (i32, i32) {
    %c0_i32 = arith.constant 0 : i32
    %c0_i32_0 = arith.constant 0 : i32
    %c0_i32_1 = arith.constant 0 : i32
    return %c0_i32, %c0_i32_0 : i32, i32
  }
  func.func @transform_16(%arg0: i32) -> (i32, i32) {
    %c0_i32 = arith.constant 0 : i32
    %c0_i32_0 = arith.constant 0 : i32
    %c0_i32_1 = arith.constant 0 : i32
    return %c0_i32, %c0_i32_0 : i32, i32
  }
  func.func @transform_17(%arg0: i32) -> (i32, i32) {
    %c0_i32 = arith.constant 0 : i32
    %c0_i32_0 = arith.constant 0 : i32
    %c0_i32_1 = arith.constant 0 : i32
    return %c0_i32, %c0_i32_0 : i32, i32
  }
}

</mosaic_0001>

<llo_original>
// kernel: tpu_custom_call.1
$region0: #{tpu_custom_call.1}
  #allocation0 [shape = 'u32[]', space=smem, size = 0x4, offset = 0x4, fixed_abs, tag = 'smem constant byte address 0x4 - core index']
  #allocation1 [shape = 'u32[144,128]{1,0:T(1,128)}', space=vmem, size = 0x12000, scoped, tag = 'internal scratch']
  %s0 = inlined_call_operand.vmem [shape: s32[16,1], index: 0, kind: input, shape index: {}]
  %s1 = inlined_call_operand.vmem [shape: f32[64,32], index: 1, kind: input, shape index: {}]
  %s2 = inlined_call_operand.vmem [shape: f32[16,32], index: 2, kind: input, shape index: {}]
  %s3 = inlined_call_operand.vmem [shape: f32[2,1,32], index: 3, kind: input, shape index: {}]
  %s4 = inlined_call_operand.vmem [shape: f32[2,1,32], index: 4, kind: input, shape index: {}]
  %s5 = inlined_call_operand.vmem [shape: bf16[2,32,96], index: 5, kind: input, shape index: {}]
  %s6 = inlined_call_operand.vmem [shape: bf16[2,32,32], index: 6, kind: input, shape index: {}]
  %s7 = inlined_call_operand.vmem [shape: f32[2,1,32], index: 7, kind: input, shape index: {}]
  %s8 = inlined_call_operand.vmem [shape: f32[2,1,32], index: 8, kind: input, shape index: {}]
  %s9 = inlined_call_operand.vmem [shape: f32[2,1,32], index: 9, kind: input, shape index: {}]
  %s10 = inlined_call_operand.vmem [shape: bf16[2,32,128], index: 10, kind: input, shape index: {}]
  %s11 = inlined_call_operand.vmem [shape: f32[2,1,128], index: 11, kind: input, shape index: {}]
  %s12 = inlined_call_operand.vmem [shape: bf16[2,128,32], index: 12, kind: input, shape index: {}]
  %s13 = inlined_call_operand.vmem [shape: f32[2,1,32], index: 13, kind: input, shape index: {}]
  %s14 = inlined_call_operand.vmem [shape: f32[1,32], index: 14, kind: input, shape index: {}]
  %s15 = inlined_call_operand.vmem [shape: f32[1,32], index: 15, kind: input, shape index: {}]
  %s16 = inlined_call_operand.vmem [shape: bf16[32,128], index: 16, kind: input, shape index: {}]
  %s17 = inlined_call_operand.hbm [shape: f32[16,128], index: 17, kind: output, shape index: {}]
  %s18 = sld [smem:[#allocation0]]
  $region78: #{tpu_custom_call.1} parent=0
    _
  %s20 = ssub.s32 1, %s18
  %s21 = scalar_select 0, %s20, %s18
  $region1: #{tpu_custom_call.1} parent=0
    #allocation2 [shape = 'u8[8192]{0}', space=vmem, size = 0x2000, scoped, tag = 'output window, operand 0, single buffered']
    #allocation3 [shape = 's32[1]{0}', space=sflag, size = 0x4, scoped, tag = 'scoped memory for tpu_custom_call.1']
    %22 = vsyncpa [#allocation3], 0
    // Predicated region
    $region2: #{tpu_custom_call.1} parent=1 // pred_check
      _
    $region3: #{tpu_custom_call.1} parent=1 // pred_check_branch
      %24 = sbr.rel (0) target = $region5
    $region4: #{tpu_custom_call.1} parent=1 // pred_region
      _
    $region5: #{tpu_custom_call.1} parent=1 // pred_fallthru
      _
    // Predicated region
    $region6: #{tpu_custom_call.1} parent=1 // pred_check
      _
    $region7: #{tpu_custom_call.1} parent=1 // pred_check_branch
      %26 = sbr.rel (0) target = $region9
    $region8: #{tpu_custom_call.1} parent=1 // pred_region
      _
    $region9: #{tpu_custom_call.1} parent=1 // pred_fallthru
      _
    // Predicated region
    $region10: #{tpu_custom_call.1} parent=1 // pred_check
      _
    $region11: #{tpu_custom_call.1} parent=1 // pred_check_branch
      %28 = sbr.rel (0) target = $region13
    $region12: #{tpu_custom_call.1} parent=1 // pred_region
      _
    $region13: #{tpu_custom_call.1} parent=1 // pred_fallthru
      _
    // Predicated region
    $region14: #{tpu_custom_call.1} parent=1 // pred_check
      _
    $region15: #{tpu_custom_call.1} parent=1 // pred_check_branch
      %30 = sbr.rel (0) target = $region17
    $region16: #{tpu_custom_call.1} parent=1 // pred_region
      _
    $region17: #{tpu_custom_call.1} parent=1 // pred_fallthru
      _
    // Predicated region
    $region18: #{tpu_custom_call.1} parent=1 // pred_check
      _
    $region19: #{tpu_custom_call.1} parent=1 // pred_check_branch
      %32 = sbr.rel (0) target = $region21
    $region20: #{tpu_custom_call.1} parent=1 // pred_region
      _
    $region21: #{tpu_custom_call.1} parent=1 // pred_fallthru
      _
    // Predicated region
    $region22: #{tpu_custom_call.1} parent=1 // pred_check
      _
    $region23: #{tpu_custom_call.1} parent=1 // pred_check_branch
      %34 = sbr.rel (0) target = $region25
    $region24: #{tpu_custom_call.1} parent=1 // pred_region
      _
    $region25: #{tpu_custom_call.1} parent=1 // pred_fallthru
      _
    // Predicated region
    $region26: #{tpu_custom_call.1} parent=1 // pred_check
      _
    $region27: #{tpu_custom_call.1} parent=1 // pred_check_branch
      %36 = sbr.rel (0) target = $region29
    $region28: #{tpu_custom_call.1} parent=1 // pred_region
      _
    $region29: #{tpu_custom_call.1} parent=1 // pred_fallthru
      _
    // Predicated region
    $region30: #{tpu_custom_call.1} parent=1 // pred_check
      _
    $region31: #{tpu_custom_call.1} parent=1 // pred_check_branch
      %38 = sbr.rel (0) target = $region33
    $region32: #{tpu_custom_call.1} parent=1 // pred_region
      _
    $region33: #{tpu_custom_call.1} parent=1 // pred_fallthru
      _
    // Predicated region
    $region34: #{tpu_custom_call.1} parent=1 // pred_check
      _
    $region35: #{tpu_custom_call.1} parent=1 // pred_check_branch
      %40 = sbr.rel (0) target = $region37
    $region36: #{tpu_custom_call.1} parent=1 // pred_region
      _
    $region37: #{tpu_custom_call.1} parent=1 // pred_fallthru
      _
    // Predicated region
    $region38: #{tpu_custom_call.1} parent=1 // pred_check
      _
    $region39: #{tpu_custom_call.1} parent=1 // pred_check_branch
      %42 = sbr.rel (0) target = $region41
    $region40: #{tpu_custom_call.1} parent=1 // pred_region
      _
    $region41: #{tpu_custom_call.1} parent=1 // pred_fallthru
      _
    // Predicated region
    $region42: #{tpu_custom_call.1} parent=1 // pred_check
      _
    $region43: #{tpu_custom_call.1} parent=1 // pred_check_branch
      %44 = sbr.rel (0) target = $region45
    $region44: #{tpu_custom_call.1} parent=1 // pred_region
      _
    $region45: #{tpu_custom_call.1} parent=1 // pred_fallthru
      _
    // Predicated region
    $region46: #{tpu_custom_call.1} parent=1 // pred_check
      _
    $region47: #{tpu_custom_call.1} parent=1 // pred_check_branch
      %46 = sbr.rel (0) target = $region49
    $region48: #{tpu_custom_call.1} parent=1 // pred_region
      _
    $region49: #{tpu_custom_call.1} parent=1 // pred_fallthru
      _
    // Predicated region
    $region50: #{tpu_custom_call.1} parent=1 // pred_check
      _
    $region51: #{tpu_custom_call.1} parent=1 // pred_check_branch
      %48 = sbr.rel (0) target = $region53
    $region52: #{tpu_custom_call.1} parent=1 // pred_region
      _
    $region53: #{tpu_custom_call.1} parent=1 // pred_fallthru
      _
    // Predicated region
    $region54: #{tpu_custom_call.1} parent=1 // pred_check
      _
    $region55: #{tpu_custom_call.1} parent=1 // pred_check_branch
      %50 = sbr.rel (0) target = $region57
    $region56: #{tpu_custom_call.1} parent=1 // pred_region
      _
    $region57: #{tpu_custom_call.1} parent=1 // pred_fallthru
      _
    // Predicated region
    $region58: #{tpu_custom_call.1} parent=1 // pred_check
      _
    $region59: #{tpu_custom_call.1} parent=1 // pred_check_branch
      %52 = sbr.rel (0) target = $region61
    $region60: #{tpu_custom_call.1} parent=1 // pred_region
      _
    $region61: #{tpu_custom_call.1} parent=1 // pred_fallthru
      _
    // Predicated region
    $region62: #{tpu_custom_call.1} parent=1 // pred_check
      _
    $region63: #{tpu_custom_call.1} parent=1 // pred_check_branch
      %54 = sbr.rel (0) target = $region65
    $region64: #{tpu_custom_call.1} parent=1 // pred_region
      _
    $region65: #{tpu_custom_call.1} parent=1 // pred_fallthru
      _
    // Predicated region
    $region66: #{tpu_custom_call.1} parent=1 // pred_check
      _
    $region67: #{tpu_custom_call.1} parent=1 // pred_check_branch
      %56 = sbr.rel (0) target = $region69
    $region68: #{tpu_custom_call.1} parent=1 // pred_region
      _
    $region69: #{tpu_custom_call.1} parent=1 // pred_fallthru
      _
    %v58 = vld [vmem:[%s0] sm:$0xff]
    %v59 = vld [vmem:[%s0 + $0x8] sm:$0xff]
    %v60 = vlaneseq
    %v61 = vand.u32 %v60, 127
    %62 = vset.pattern.permute.xlu0 0
    %63 = vperm.xlu0 %62, %v58
    %v64 = vpop.permute.xlu0 %63
    %65 = vset.pattern.permute.xlu0 0
    %66 = vperm.xlu0 %65, %v59
    %v67 = vpop.permute.xlu0 %66
    %vm68 = vcmp.eq.s32.totalorder %v64, %v61
    %vm69 = vcmp.eq.s32.totalorder %v67, %v61
    %v70 = vsel %vm68, 1, 0
    %v71 = vsel %vm69, 1, 0
    %v72 = vcvt.s32.f32 %v70
    %v73 = vcvt.s32.f32 %v71
    %v74 = vld [vmem:[%s1] sm:$0xff]
    %v75 = vld [vmem:[%s1 + $0x8] sm:$0xff]
    %v76 = vld [vmem:[%s1 + $0x10] sm:$0xff]
    %v77 = vld [vmem:[%s1 + $0x18] sm:$0xff]
    %v78 = vld [vmem:[%s1 + $0x20] sm:$0xff]
    %v79 = vld [vmem:[%s1 + $0x28] sm:$0xff]
    %v80 = vld [vmem:[%s1 + $0x30] sm:$0xff]
    %v81 = vld [vmem:[%s1 + $0x38] sm:$0xff]
    %v82 = vlaneseq
    %v83 = vshrl.u32 %v82, 7
    %v84 = vadd.s32 %v83, 8
    %v85 = vand.u32 %v83, 7
    %v86 = vand.u32 %v84, 7
    %vm87 = vcmp.eq.s32.totalorder %v61, %v85
    %vm88 = vcmp.eq.s32.totalorder %v61, %v86
    %v89 = vsel %vm87, 1, 0
    %v90 = vsel %vm88, 1, 0
    %v91 = vcvt.s32.f32 %v89
    %v92 = vcvt.s32.f32 %v90
    %v93 = vld [vmem:[%s2] sm:$0xff]
    %v94 = vld [vmem:[%s2 + $0x8] sm:$0xff]
    %vm95 = vcmask 130048
    %v97 = vsel %vm95, %v91, 0
    %v100 = vsel %vm95, %v92, 0
    %102 = vmatprep.subr.mxu0 0.0
    %103 = vmatpush1.msra.mxu0 %v93
    %104 = vmatprep.subr.mxu0 0.0
    %105 = vmatpush1.msra.mxu0 %v94
    %106 = vmatprep.subr.mxu0 0.0
    %107 = vmatpush1.msra.mxu0 0.0
    %108 = vmatprep.subr.mxu0 0.0
    %109 = vmatpush1.msra.mxu0 0.0
    %110 = vmatprep.subr.mxu0 0.0
    %111 = vmatpush1.msra.mxu0 0.0
    %112 = vmatprep.subr.mxu0 0.0
    %113 = vmatpush1.msra.mxu0 0.0
    %114 = vmatprep.subr.mxu0 0.0
    %115 = vmatpush1.msra.mxu0 0.0
    %116 = vmatprep.subr.mxu0 0.0
    %117 = vmatpush1.msra.mxu0 0.0
    %118 = vmatprep.subr.mxu0 0.0
    %119 = vmatpush1.msra.mxu0 0.0
    %120 = vmatprep.subr.mxu0 0.0
    %121 = vmatpush1.msra.mxu0 0.0
    %122 = vmatprep.subr.mxu0 0.0
    %123 = vmatpush1.msra.mxu0 0.0
    %124 = vmatprep.subr.mxu0 0.0
    %125 = vmatpush1.msra.mxu0 0.0
    %126 = vmatprep.subr.mxu0 0.0
    %127 = vmatpush1.msra.mxu0 0.0
    %128 = vmatprep.subr.mxu0 0.0
    %129 = vmatpush1.msra.mxu0 0.0
    %130 = vmatprep.subr.mxu0 0.0
    %131 = vmatpush1.msra.mxu0 0.0
    %132 = vmatprep.subr.mxu0 0.0
    %133 = vmatpush1.msra.mxu0 0.0
    %134 = vmatprep.subr.mxu0 0.0
    %135 = vmatpush1.msra.mxu0 0.0
    %136 = vmatprep.subr.mxu0 0.0
    %137 = vmatpush1.msra.mxu0 0.0
    %138 = vmatprep.subr.mxu0 0.0
    %139 = vmatpush1.msra.mxu0 0.0
    %140 = vmatprep.subr.mxu0 0.0
    %141 = vmatpush1.msra.mxu0 0.0
    %142 = vmatprep.subr.mxu0 0.0
    %143 = vmatpush1.msra.mxu0 0.0
    %144 = vmatprep.subr.mxu0 0.0
    %145 = vmatpush1.msra.mxu0 0.0
    %146 = vmatprep.subr.mxu0 0.0
    %147 = vmatpush1.msra.mxu0 0.0
    %148 = vmatprep.subr.mxu0 0.0
    %149 = vmatpush1.msra.mxu0 0.0
    %150 = vmatprep.subr.mxu0 0.0
    %151 = vmatpush1.msra.mxu0 0.0
    %152 = vmatprep.subr.mxu0 0.0
    %153 = vmatpush1.msra.mxu0 0.0
    %154 = vmatprep.subr.mxu0 0.0
    %155 = vmatpush1.msra.mxu0 0.0
    %156 = vmatprep.subr.mxu0 0.0
    %157 = vmatpush1.msra.mxu0 0.0
    %158 = vmatprep.subr.mxu0 0.0
    %159 = vmatpush1.msra.mxu0 0.0
    %160 = vmatprep.subr.mxu0 0.0
    %161 = vmatpush1.msra.mxu0 0.0
    %162 = vmatprep.subr.mxu0 0.0
    %163 = vmatpush1.msra.mxu0 0.0
    %164 = vmatprep.subr.mxu0 0.0
    %165 = vmatpush1.msra.mxu0 0.0
    %166 = vmatprep.mubr.f32.mxu0 0.0
    %167 = vmatmul.mubr.f32.gmra.mrb[0].mxu0 %v97
    %v168 = vpop.f32.mrb[0].mxu0
    %v169 = vadd.f32 0.0, %v168
    %v170 = vpop.f32.mrb[0].mxu0
    %171 = vmatprep.mubr.f32.mxu0 0.0
    %172 = vmatmul.mubr.f32.gmra.mrb[0].mxu0 %v100
    %v173 = vpop.f32.mrb[0].mxu0
    %v174 = vadd.f32 0.0, %v173
    %v175 = vpop.f32.mrb[0].mxu0
    %176 = vdwg.mxu0
    %vm177 = vcmask 523264
    %v179 = vsel %vm177, %v72, 0
    %v182 = vsel %vm177, %v73, 0
    %184 = vmatprep.subr.mxu0 0.0
    %185 = vmatpush1.msra.mxu0 %v74
    %186 = vmatprep.subr.mxu0 0.0
    %187 = vmatpush1.msra.mxu0 %v75
    %188 = vmatprep.subr.mxu0 0.0
    %189 = vmatpush1.msra.mxu0 %v76
    %190 = vmatprep.subr.mxu0 0.0
    %191 = vmatpush1.msra.mxu0 %v77
    %192 = vmatprep.subr.mxu0 0.0
    %193 = vmatpush1.msra.mxu0 %v78
    %194 = vmatprep.subr.mxu0 0.0
    %195 = vmatpush1.msra.mxu0 %v79
    %196 = vmatprep.subr.mxu0 0.0
    %197 = vmatpush1.msra.mxu0 %v80
    %198 = vmatprep.subr.mxu0 0.0
    %199 = vmatpush1.msra.mxu0 %v81
    %200 = vmatprep.subr.mxu0 0.0
    %201 = vmatpush1.msra.mxu0 0.0
    %202 = vmatprep.subr.mxu0 0.0
    %203 = vmatpush1.msra.mxu0 0.0
    %204 = vmatprep.subr.mxu0 0.0
    %205 = vmatpush1.msra.mxu0 0.0
    %206 = vmatprep.subr.mxu0 0.0
    %207 = vmatpush1.msra.mxu0 0.0
    %208 = vmatprep.subr.mxu0 0.0
    %209 = vmatpush1.msra.mxu0 0.0
    %210 = vmatprep.subr.mxu0 0.0
    %211 = vmatpush1.msra.mxu0 0.0
    %212 = vmatprep.subr.mxu0 0.0
    %213 = vmatpush1.msra.mxu0 0.0
    %214 = vmatprep.subr.mxu0 0.0
    %215 = vmatpush1.msra.mxu0 0.0
    %216 = vmatprep.subr.mxu0 0.0
    %217 = vmatpush1.msra.mxu0 0.0
    %218 = vmatprep.subr.mxu0 0.0
    %219 = vmatpush1.msra.mxu0 0.0
    %220 = vmatprep.subr.mxu0 0.0
    %221 = vmatpush1.msra.mxu0 0.0
    %222 = vmatprep.subr.mxu0 0.0
    %223 = vmatpush1.msra.mxu0 0.0
    %224 = vmatprep.subr.mxu0 0.0
    %225 = vmatpush1.msra.mxu0 0.0
    %226 = vmatprep.subr.mxu0 0.0
    %227 = vmatpush1.msra.mxu0 0.0
    %228 = vmatprep.subr.mxu0 0.0
    %229 = vmatpush1.msra.mxu0 0.0
    %230 = vmatprep.subr.mxu0 0.0
    %231 = vmatpush1.msra.mxu0 0.0
    %232 = vmatprep.subr.mxu0 0.0
    %233 = vmatpush1.msra.mxu0 0.0
    %234 = vmatprep.subr.mxu0 0.0
    %235 = vmatpush1.msra.mxu0 0.0
    %236 = vmatprep.subr.mxu0 0.0
    %237 = vmatpush1.msra.mxu0 0.0
    %238 = vmatprep.subr.mxu0 0.0
    %239 = vmatpush1.msra.mxu0 0.0
    %240 = vmatprep.subr.mxu0 0.0
    %241 = vmatpush1.msra.mxu0 0.0
    %242 = vmatprep.subr.mxu0 0.0
    %243 = vmatpush1.msra.mxu0 0.0
    %244 = vmatprep.subr.mxu0 0.0
    %245 = vmatpush1.msra.mxu0 0.0
    %246 = vmatprep.subr.mxu0 0.0
    %247 = vmatpush1.msra.mxu0 0.0
    %248 = vmatprep.mubr.f32.mxu0 0.0
    %249 = vmatmul.mubr.f32.gmra.mrb[0].mxu0 %v179
    %v250 = vpop.f32.mrb[0].mxu0
    %v251 = vadd.f32 %v169, %v250
    %v252 = vpop.f32.mrb[0].mxu0
    %253 = vmatprep.mubr.f32.mxu0 0.0
    %254 = vmatmul.mubr.f32.gmra.mrb[0].mxu0 %v182
    %v255 = vpop.f32.mrb[0].mxu0
    %v256 = vadd.f32 %v174, %v255
    %v257 = vpop.f32.mrb[0].mxu0
    %258 = vdwg.mxu0
    %vm259 = vcmp.le.s32.totalorder %v61, %v83
    %vm260 = vcmp.le.s32.totalorder %v61, %v84
    %v261 = vsub.s32 %v83, %v85
    %v262 = vsub.s32 %v84, %v86
    %vm263 = vcmp.ge.s32.totalorder %v61, %v261
    %vm264 = vcmp.ge.s32.totalorder %v61, %v262
    %vm265 = vmand %vm259, %vm263
    %vm266 = vmand %vm260, %vm264
    %v267 = vld [vmem:[%s3] sm:$0x1]
    %v268 = vld [vmem:[%s4] sm:$0x1]
    %vm269 = vcmask 261120
    %v270 = vsel %vm269, %v251, 0.0
    %271 = vadd.xlane.f32.xlu0 %v270
    %v272 = vpop.xlane.xlu0 %271
    %v273 = vsel %vm269, %v256, 0.0
    %274 = vadd.xlane.f32.xlu0 %v273
    %v275 = vpop.xlane.xlu0 %274
    %v276 = vrcp.pop 32.0
    %v277 = vmul.f32 %v272, %v276
    %v278 = vmul.f32 %v275, %v276
    %v279 = vsub.f32 %v251, %v277
    %v280 = vsub.f32 %v256, %v278
    %v281 = vmul.f32 %v279, %v279
    %v282 = vmul.f32 %v280, %v280
    %v283 = vsel %vm269, %v281, 0.0
    %284 = vadd.xlane.f32.xlu0 %v283
    %v285 = vpop.xlane.xlu0 %284
    %v286 = vsel %vm269, %v282, 0.0
    %287 = vadd.xlane.f32.xlu0 %v286
    %v288 = vpop.xlane.xlu0 %287
    %v289 = vmul.f32 %v285, %v276
    %v290 = vmul.f32 %v288, %v276
    %v291 = vadd.f32 %v289, 1e-05
    %v292 = vadd.f32 %v290, 1e-05
    %v293 = vrsqrt.pop %v291
    %v294 = vrsqrt.pop %v292
    %v295 = vmul.f32 %v279, %v293
    %v296 = vmul.f32 %v280, %v294
    %v298 = vlaneseq
    %v299 = vshrl.u32 %v298, 7
    %v300 = vsub.s32 0, %v299
    %v301 = vrot.slane %v267, %v300
    %v303 = vmul.f32 %v295, %v301
    %v304 = vmul.f32 %v296, %v301
    %v306 = vlaneseq
    %v307 = vshrl.u32 %v306, 7
    %v308 = vsub.s32 0, %v307
    %v309 = vrot.slane %v268, %v308
    %v311 = vadd.f32 %v303, %v309
    %v312 = vadd.f32 %v304, %v309
    %v313 = vld [vmem:[%s5] sm:$0xf]
    %v314 = vld [vmem:[%s5 + $0x4] sm:$0xf]
    %v315 = vld [vmem:[%s5 + $0x8] sm:$0xf]
    %v316 = vld [vmem:[%s5 + $0xc] sm:$0xf]
    %v317 = vpack.c.bf16 %v312, %v311
    %v322 = vunpack.c.l.b16 %v313
    %v323 = vunpack.c.l.b16 %v314
    %v324 = vunpack.c.l.b16 %v315
    %v325 = vunpack.c.l.b16 %v316
    %v326 = vpack.c.b16 %v323, %v322
    %v327 = vpack.c.b16 %v325, %v324
    %v331 = vsel %vm269, %v317, 0
    %333 = vmatprep.subr.bf16.mxu0 0
    %334 = vmatpush1.bf16.msra.mxu0 %v326
    %335 = vmatprep.subr.bf16.mxu0 0
    %336 = vmatpush1.bf16.msra.mxu0 %v327
    %337 = vmatprep.subr.bf16.mxu0 0
    %338 = vmatpush1.bf16.msra.mxu0 0
    %339 = vmatprep.subr.bf16.mxu0 0
    %340 = vmatpush1.bf16.msra.mxu0 0
    %341 = vmatprep.subr.bf16.mxu0 0
    %342 = vmatpush1.bf16.msra.mxu0 0
    %343 = vmatprep.subr.bf16.mxu0 0
    %344 = vmatpush1.bf16.msra.mxu0 0
    %345 = vmatprep.subr.bf16.mxu0 0
    %346 = vmatpush1.bf16.msra.mxu0 0
    %347 = vmatprep.subr.bf16.mxu0 0
    %348 = vmatpush1.bf16.msra.mxu0 0
    %349 = vmatprep.subr.bf16.mxu0 0
    %350 = vmatpush1.bf16.msra.mxu0 0
    %351 = vmatprep.subr.bf16.mxu0 0
    %352 = vmatpush1.bf16.msra.mxu0 0
    %353 = vmatprep.subr.bf16.mxu0 0
    %354 = vmatpush1.bf16.msra.mxu0 0
    %355 = vmatprep.subr.bf16.mxu0 0
    %356 = vmatpush1.bf16.msra.mxu0 0
    %357 = vmatprep.subr.bf16.mxu0 0
    %358 = vmatpush1.bf16.msra.mxu0 0
    %359 = vmatprep.subr.bf16.mxu0 0
    %360 = vmatpush1.bf16.msra.mxu0 0
    %361 = vmatprep.subr.bf16.mxu0 0
    %362 = vmatpush1.bf16.msra.mxu0 0
    %363 = vmatprep.subr.bf16.mxu0 0
    %364 = vmatpush1.bf16.msra.mxu0 0
    %365 = vmatprep.mubr.bf16.mxu0 0
    %366 = vmatmul.mubr.bf16.gmra.mrb[0].mxu0 %v331
    %v367 = vpop.f32.mrb[0].mxu0
    %v368 = vadd.f32 0.0, %v367
    %v369 = vpop.f32.mrb[0].mxu0
    %v370 = vpop.f32.mrb[0].mxu0
    %v371 = vadd.f32 0.0, %v370
    %v372 = vpop.f32.mrb[0].mxu0
    %373 = vdwg.mxu0
    %vm374 = vcmp.ge.s32.totalorder %v61, 0
    %vm375 = vcmp.lt.s32.totalorder %v61, 8
    %vm376 = vmand %vm374, %vm375
    %v377 = vsel %vm376, 1, 0
    %vm378 = vcmp.eq.s32.totalorder %v377, 1
    %v379 = vsel %vm378, %v368, 0.0
    %v380 = vsel %vm378, %v371, 0.0
    %v381 = vpack.c.bf16 %v380, %v379
    %v382 = vpack.c.bf16 %v371, %v368
    %384 = vrot.lane.b32.xlu0 %v382, 96
    %v385 = vpop.permute.xlu0 %384
    %v387 = vsel %vm269, %v381, 0
    %v390 = vsel %vm269, %v385, 0
    %392 = vmatprep.subr.bf16.mxu0 0
    %393 = vmatpush1.bf16.xpose.msra.mxu0 %v390
    %394 = vmatprep.subr.bf16.mxu0 0
    %395 = vmatpush1.bf16.xpose.msra.mxu0 0
    %396 = vmatprep.subr.bf16.mxu0 0
    %397 = vmatpush1.bf16.xpose.msra.mxu0 0
    %398 = vmatprep.subr.bf16.mxu0 0
    %399 = vmatpush1.bf16.xpose.msra.mxu0 0
    %400 = vmatprep.subr.bf16.mxu0 0
    %401 = vmatpush1.bf16.xpose.msra.mxu0 0
    %402 = vmatprep.subr.bf16.mxu0 0
    %403 = vmatpush1.bf16.xpose.msra.mxu0 0
    %404 = vmatprep.subr.bf16.mxu0 0
    %405 = vmatpush1.bf16.xpose.msra.mxu0 0
    %406 = vmatprep.subr.bf16.mxu0 0
    %407 = vmatpush1.bf16.xpose.msra.mxu0 0
    %408 = vmatprep.subr.bf16.mxu0 0
    %409 = vmatpush1.bf16.xpose.msra.mxu0 0
    %410 = vmatprep.subr.bf16.mxu0 0
    %411 = vmatpush1.bf16.xpose.msra.mxu0 0
    %412 = vmatprep.subr.bf16.mxu0 0
    %413 = vmatpush1.bf16.xpose.msra.mxu0 0
    %414 = vmatprep.subr.bf16.mxu0 0
    %415 = vmatpush1.bf16.xpose.msra.mxu0 0
    %416 = vmatprep.subr.bf16.mxu0 0
    %417 = vmatpush1.bf16.xpose.msra.mxu0 0
    %418 = vmatprep.subr.bf16.mxu0 0
    %419 = vmatpush1.bf16.xpose.msra.mxu0 0
    %420 = vmatprep.subr.bf16.mxu0 0
    %421 = vmatpush1.bf16.xpose.msra.mxu0 0
    %422 = vmatprep.subr.bf16.mxu0 0
    %423 = vmatpush1.bf16.xpose.msra.mxu0 0
    %424 = vmatprep.mubr.bf16.mxu0 0
    %425 = vmatmul.mubr.bf16.gmra.mrb[0].mxu0 %v387
    %v426 = vpop.f32.mrb[0].mxu0
    %v427 = vadd.f32 0.0, %v426
    %v428 = vpop.f32.mrb[0].mxu0
    %v429 = vpop.f32.mrb[0].mxu0
    %v430 = vadd.f32 0.0, %v429
    %v431 = vpop.f32.mrb[0].mxu0
    %432 = vdwg.mxu0
    %v433 = vsel %vm265, %v427, -1e+30
    %v434 = vsel %vm266, %v430, -1e+30
    %v435 = vsel %vm95, %v433, -inf
    %436 = vmax.xlane.f32.xlu0 %v435
    %v437 = vpop.xlane.xlu0 %436
    %v438 = vsel %vm95, %v434, -inf
    %439 = vmax.xlane.f32.xlu0 %v438
    %v440 = vpop.xlane.xlu0 %439
    %v441 = vsub.f32 %v433, %v437
    %v442 = vsub.f32 %v434, %v440
    %v443 = vmul.f32 %v441, 1.442695
    %v444 = vpow.pop %v443
    %v445 = vmul.f32 %v442, 1.442695
    %v446 = vpow.pop %v445
    %v447 = vsel %vm95, %v444, 0.0
    %448 = vadd.xlane.f32.xlu0 %v447
    %v449 = vpop.xlane.xlu0 %448
    %v450 = vsel %vm95, %v446, 0.0
    %451 = vadd.xlane.f32.xlu0 %v450
    %v452 = vpop.xlane.xlu0 %451
    %v453 = vrcp.pop %v449
    %v454 = vrcp.pop %v452
    %v455 = vmul.f32 %v444, %v453
    %v456 = vmul.f32 %v446, %v454
    %v457 = vpack.c.bf16 %v456, %v455
    %458 = vrot.lane.b32.xlu0 %v382, 64
    %v459 = vpop.permute.xlu0 %458
    %v462 = vsel %vm95, %v457, 0
    %464 = vmatprep.subr.bf16.mxu0 0
    %465 = vmatpush1.bf16.msra.mxu0 %v459
    %466 = vmatprep.subr.bf16.mxu0 0
    %467 = vmatpush1.bf16.msra.mxu0 0
    %468 = vmatprep.subr.bf16.mxu0 0
    %469 = vmatpush1.bf16.msra.mxu0 0
    %470 = vmatprep.subr.bf16.mxu0 0
    %471 = vmatpush1.bf16.msra.mxu0 0
    %472 = vmatprep.subr.bf16.mxu0 0
    %473 = vmatpush1.bf16.msra.mxu0 0
    %474 = vmatprep.subr.bf16.mxu0 0
    %475 = vmatpush1.bf16.msra.mxu0 0
    %476 = vmatprep.subr.bf16.mxu0 0
    %477 = vmatpush1.bf16.msra.mxu0 0
    %478 = vmatprep.subr.bf16.mxu0 0
    %479 = vmatpush1.bf16.msra.mxu0 0
    %480 = vmatprep.subr.bf16.mxu0 0
    %481 = vmatpush1.bf16.msra.mxu0 0
    %482 = vmatprep.subr.bf16.mxu0 0
    %483 = vmatpush1.bf16.msra.mxu0 0
    %484 = vmatprep.subr.bf16.mxu0 0
    %485 = vmatpush1.bf16.msra.mxu0 0
    %486 = vmatprep.subr.bf16.mxu0 0
    %487 = vmatpush1.bf16.msra.mxu0 0
    %488 = vmatprep.subr.bf16.mxu0 0
    %489 = vmatpush1.bf16.msra.mxu0 0
    %490 = vmatprep.subr.bf16.mxu0 0
    %491 = vmatpush1.bf16.msra.mxu0 0
    %492 = vmatprep.subr.bf16.mxu0 0
    %493 = vmatpush1.bf16.msra.mxu0 0
    %494 = vmatprep.subr.bf16.mxu0 0
    %495 = vmatpush1.bf16.msra.mxu0 0
    %496 = vmatprep.mubr.bf16.mxu0 0
    %497 = vmatmul.mubr.bf16.gmra.mrb[0].mxu0 %v462
    %v498 = vpop.f32.mrb[0].mxu0
    %v499 = vadd.f32 0.0, %v498
    %v500 = vpop.f32.mrb[0].mxu0
    %v501 = vpop.f32.mrb[0].mxu0
    %v502 = vadd.f32 0.0, %v501
    %v503 = vpop.f32.mrb[0].mxu0
    %504 = vdwg.mxu0
    %v505 = vsel %vm378, %v499, 0.0
    %v506 = vsel %vm378, %v502, 0.0
    %v507 = vadd.f32 %v505, 0.0
    %v508 = vadd.f32 %v506, 0.0
    %vm509 = vcmp.ge.s32.totalorder %v61, 8
    %vm510 = vcmp.lt.s32.totalorder %v61, 16
    %vm511 = vmand %vm509, %vm510
    %v512 = vsel %vm511, 1, 0
    %vm513 = vcmp.eq.s32.totalorder %v512, 1
    %v514 = vsel %vm513, %v368, 0.0
    %v515 = vsel %vm513, %v371, 0.0
    %v516 = vpack.c.bf16 %v515, %v514
    %v518 = vsel %vm269, %v516, 0
    %520 = vmatprep.subr.bf16.mxu0 0
    %521 = vmatpush1.bf16.xpose.msra.mxu0 %v390
    %522 = vmatprep.subr.bf16.mxu0 0
    %523 = vmatpush1.bf16.xpose.msra.mxu0 0
    %524 = vmatprep.subr.bf16.mxu0 0
    %525 = vmatpush1.bf16.xpose.msra.mxu0 0
    %526 = vmatprep.subr.bf16.mxu0 0
    %527 = vmatpush1.bf16.xpose.msra.mxu0 0
    %528 = vmatprep.subr.bf16.mxu0 0
    %529 = vmatpush1.bf16.xpose.msra.mxu0 0
    %530 = vmatprep.subr.bf16.mxu0 0
    %531 = vmatpush1.bf16.xpose.msra.mxu0 0
    %532 = vmatprep.subr.bf16.mxu0 0
    %533 = vmatpush1.bf16.xpose.msra.mxu0 0
    %534 = vmatprep.subr.bf16.mxu0 0
    %535 = vmatpush1.bf16.xpose.msra.mxu0 0
    %536 = vmatprep.subr.bf16.mxu0 0
    %537 = vmatpush1.bf16.xpose.msra.mxu0 0
    %538 = vmatprep.subr.bf16.mxu0 0
    %539 = vmatpush1.bf16.xpose.msra.mxu0 0
    %540 = vmatprep.subr.bf16.mxu0 0
    %541 = vmatpush1.bf16.xpose.msra.mxu0 0
    %542 = vmatprep.subr.bf16.mxu0 0
    %543 = vmatpush1.bf16.xpose.msra.mxu0 0
    %544 = vmatprep.subr.bf16.mxu0 0
    %545 = vmatpush1.bf16.xpose.msra.mxu0 0
    %546 = vmatprep.subr.bf16.mxu0 0
    %547 = vmatpush1.bf16.xpose.msra.mxu0 0
    %548 = vmatprep.subr.bf16.mxu0 0
    %549 = vmatpush1.bf16.xpose.msra.mxu0 0
    %550 = vmatprep.subr.bf16.mxu0 0
    %551 = vmatpush1.bf16.xpose.msra.mxu0 0
    %552 = vmatprep.mubr.bf16.mxu0 0
    %553 = vmatmul.mubr.bf16.gmra.mrb[0].mxu0 %v518
    %v554 = vpop.f32.mrb[0].mxu0
    %v555 = vadd.f32 0.0, %v554
    %v556 = vpop.f32.mrb[0].mxu0
    %v557 = vpop.f32.mrb[0].mxu0
    %v558 = vadd.f32 0.0, %v557
    %v559 = vpop.f32.mrb[0].mxu0
    %560 = vdwg.mxu0
    %v561 = vsel %vm265, %v555, -1e+30
    %v562 = vsel %vm266, %v558, -1e+30
    %v563 = vsel %vm95, %v561, -inf
    %564 = vmax.xlane.f32.xlu0 %v563
    %v565 = vpop.xlane.xlu0 %564
    %v566 = vsel %vm95, %v562, -inf
    %567 = vmax.xlane.f32.xlu0 %v566
    %v568 = vpop.xlane.xlu0 %567
    %v569 = vsub.f32 %v561, %v565
    %v570 = vsub.f32 %v562, %v568
    %v571 = vmul.f32 %v569, 1.442695
    %v572 = vpow.pop %v571
    %v573 = vmul.f32 %v570, 1.442695
    %v574 = vpow.pop %v573
    %v575 = vsel %vm95, %v572, 0.0
    %576 = vadd.xlane.f32.xlu0 %v575
    %v577 = vpop.xlane.xlu0 %576
    %v578 = vsel %vm95, %v574, 0.0
    %579 = vadd.xlane.f32.xlu0 %v578
    %v580 = vpop.xlane.xlu0 %579
    %v581 = vrcp.pop %v577
    %v582 = vrcp.pop %v580
    %v583 = vmul.f32 %v572, %v581
    %v584 = vmul.f32 %v574, %v582
    %v585 = vpack.c.bf16 %v584, %v583
    %v587 = vsel %vm95, %v585, 0
    %589 = vmatprep.subr.bf16.mxu0 0
    %590 = vmatpush1.bf16.msra.mxu0 %v459
    %591 = vmatprep.subr.bf16.mxu0 0
    %592 = vmatpush1.bf16.msra.mxu0 0
    %593 = vmatprep.subr.bf16.mxu0 0
    %594 = vmatpush1.bf16.msra.mxu0 0
    %595 = vmatprep.subr.bf16.mxu0 0
    %596 = vmatpush1.bf16.msra.mxu0 0
    %597 = vmatprep.subr.bf16.mxu0 0
    %598 = vmatpush1.bf16.msra.mxu0 0
    %599 = vmatprep.subr.bf16.mxu0 0
    %600 = vmatpush1.bf16.msra.mxu0 0
    %601 = vmatprep.subr.bf16.mxu0 0
    %602 = vmatpush1.bf16.msra.mxu0 0
    %603 = vmatprep.subr.bf16.mxu0 0
    %604 = vmatpush1.bf16.msra.mxu0 0
    %605 = vmatprep.subr.bf16.mxu0 0
    %606 = vmatpush1.bf16.msra.mxu0 0
    %607 = vmatprep.subr.bf16.mxu0 0
    %608 = vmatpush1.bf16.msra.mxu0 0
    %609 = vmatprep.subr.bf16.mxu0 0
    %610 = vmatpush1.bf16.msra.mxu0 0
    %611 = vmatprep.subr.bf16.mxu0 0
    %612 = vmatpush1.bf16.msra.mxu0 0
    %613 = vmatprep.subr.bf16.mxu0 0
    %614 = vmatpush1.bf16.msra.mxu0 0
    %615 = vmatprep.subr.bf16.mxu0 0
    %616 = vmatpush1.bf16.msra.mxu0 0
    %617 = vmatprep.subr.bf16.mxu0 0
    %618 = vmatpush1.bf16.msra.mxu0 0
    %619 = vmatprep.subr.bf16.mxu0 0
    %620 = vmatpush1.bf16.msra.mxu0 0
    %621 = vmatprep.mubr.bf16.mxu0 0
    %622 = vmatmul.mubr.bf16.gmra.mrb[0].mxu0 %v587
    %v623 = vpop.f32.mrb[0].mxu0
    %v624 = vadd.f32 0.0, %v623
    %v625 = vpop.f32.mrb[0].mxu0
    %v626 = vpop.f32.mrb[0].mxu0
    %v627 = vadd.f32 0.0, %v626
    %v628 = vpop.f32.mrb[0].mxu0
    %629 = vdwg.mxu0
    %v630 = vsel %vm513, %v624, 0.0
    %v631 = vsel %vm513, %v627, 0.0
    %v632 = vadd.f32 %v507, %v630
    %v633 = vadd.f32 %v508, %v631
    %vm634 = vcmp.ge.s32.totalorder %v61, 16
    %vm635 = vcmp.lt.s32.totalorder %v61, 24
    %vm636 = vmand %vm634, %vm635
    %v637 = vsel %vm636, 1, 0
    %vm638 = vcmp.eq.s32.totalorder %v637, 1
    %v639 = vsel %vm638, %v368, 0.0
    %v640 = vsel %vm638, %v371, 0.0
    %v641 = vpack.c.bf16 %v640, %v639
    %v643 = vsel %vm269, %v641, 0
    %645 = vmatprep.subr.bf16.mxu0 0
    %646 = vmatpush1.bf16.xpose.msra.mxu0 %v390
    %647 = vmatprep.subr.bf16.mxu0 0
    %648 = vmatpush1.bf16.xpose.msra.mxu0 0
    %649 = vmatprep.subr.bf16.mxu0 0
    %650 = vmatpush1.bf16.xpose.msra.mxu0 0
    %651 = vmatprep.subr.bf16.mxu0 0
    %652 = vmatpush1.bf16.xpose.msra.mxu0 0
    %653 = vmatprep.subr.bf16.mxu0 0
    %654 = vmatpush1.bf16.xpose.msra.mxu0 0
    %655 = vmatprep.subr.bf16.mxu0 0
    %656 = vmatpush1.bf16.xpose.msra.mxu0 0
    %657 = vmatprep.subr.bf16.mxu0 0
    %658 = vmatpush1.bf16.xpose.msra.mxu0 0
    %659 = vmatprep.subr.bf16.mxu0 0
    %660 = vmatpush1.bf16.xpose.msra.mxu0 0
    %661 = vmatprep.subr.bf16.mxu0 0
    %662 = vmatpush1.bf16.xpose.msra.mxu0 0
    %663 = vmatprep.subr.bf16.mxu0 0
    %664 = vmatpush1.bf16.xpose.msra.mxu0 0
    %665 = vmatprep.subr.bf16.mxu0 0
    %666 = vmatpush1.bf16.xpose.msra.mxu0 0
    %667 = vmatprep.subr.bf16.mxu0 0
    %668 = vmatpush1.bf16.xpose.msra.mxu0 0
    %669 = vmatprep.subr.bf16.mxu0 0
    %670 = vmatpush1.bf16.xpose.msra.mxu0 0
    %671 = vmatprep.subr.bf16.mxu0 0
    %672 = vmatpush1.bf16.xpose.msra.mxu0 0
    %673 = vmatprep.subr.bf16.mxu0 0
    %674 = vmatpush1.bf16.xpose.msra.mxu0 0
    %675 = vmatprep.subr.bf16.mxu0 0
    %676 = vmatpush1.bf16.xpose.msra.mxu0 0
    %677 = vmatprep.mubr.bf16.mxu0 0
    %678 = vmatmul.mubr.bf16.gmra.mrb[0].mxu0 %v643
    %v679 = vpop.f32.mrb[0].mxu0
    %v680 = vadd.f32 0.0, %v679
    %v681 = vpop.f32.mrb[0].mxu0
    %v682 = vpop.f32.mrb[0].mxu0
    %v683 = vadd.f32 0.0, %v682
    %v684 = vpop.f32.mrb[0].mxu0
    %685 = vdwg.mxu0
    %v686 = vsel %vm265, %v680, -1e+30
    %v687 = vsel %vm266, %v683, -1e+30
    %v688 = vsel %vm95, %v686, -inf
    %689 = vmax.xlane.f32.xlu0 %v688
    %v690 = vpop.xlane.xlu0 %689
    %v691 = vsel %vm95, %v687, -inf
    %692 = vmax.xlane.f32.xlu0 %v691
    %v693 = vpop.xlane.xlu0 %692
    %v694 = vsub.f32 %v686, %v690
    %v695 = vsub.f32 %v687, %v693
    %v696 = vmul.f32 %v694, 1.442695
    %v697 = vpow.pop %v696
    %v698 = vmul.f32 %v695, 1.442695
    %v699 = vpow.pop %v698
    %v700 = vsel %vm95, %v697, 0.0
    %701 = vadd.xlane.f32.xlu0 %v700
    %v702 = vpop.xlane.xlu0 %701
    %v703 = vsel %vm95, %v699, 0.0
    %704 = vadd.xlane.f32.xlu0 %v703
    %v705 = vpop.xlane.xlu0 %704
    %v706 = vrcp.pop %v702
    %v707 = vrcp.pop %v705
    %v708 = vmul.f32 %v697, %v706
    %v709 = vmul.f32 %v699, %v707
    %v710 = vpack.c.bf16 %v709, %v708
    %v712 = vsel %vm95, %v710, 0
    %714 = vmatprep.subr.bf16.mxu0 0
    %715 = vmatpush1.bf16.msra.mxu0 %v459
    %716 = vmatprep.subr.bf16.mxu0 0
    %717 = vmatpush1.bf16.msra.mxu0 0
    %718 = vmatprep.subr.bf16.mxu0 0
    %719 = vmatpush1.bf16.msra.mxu0 0
    %720 = vmatprep.subr.bf16.mxu0 0
    %721 = vmatpush1.bf16.msra.mxu0 0
    %722 = vmatprep.subr.bf16.mxu0 0
    %723 = vmatpush1.bf16.msra.mxu0 0
    %724 = vmatprep.subr.bf16.mxu0 0
    %725 = vmatpush1.bf16.msra.mxu0 0
    %726 = vmatprep.subr.bf16.mxu0 0
    %727 = vmatpush1.bf16.msra.mxu0 0
    %728 = vmatprep.subr.bf16.mxu0 0
    %729 = vmatpush1.bf16.msra.mxu0 0
    %730 = vmatprep.subr.bf16.mxu0 0
    %731 = vmatpush1.bf16.msra.mxu0 0
    %732 = vmatprep.subr.bf16.mxu0 0
    %733 = vmatpush1.bf16.msra.mxu0 0
    %734 = vmatprep.subr.bf16.mxu0 0
    %735 = vmatpush1.bf16.msra.mxu0 0
    %736 = vmatprep.subr.bf16.mxu0 0
    %737 = vmatpush1.bf16.msra.mxu0 0
    %738 = vmatprep.subr.bf16.mxu0 0
    %739 = vmatpush1.bf16.msra.mxu0 0
    %740 = vmatprep.subr.bf16.mxu0 0
    %741 = vmatpush1.bf16.msra.mxu0 0
    %742 = vmatprep.subr.bf16.mxu0 0
    %743 = vmatpush1.bf16.msra.mxu0 0
    %744 = vmatprep.subr.bf16.mxu0 0
    %745 = vmatpush1.bf16.msra.mxu0 0
    %746 = vmatprep.mubr.bf16.mxu0 0
    %747 = vmatmul.mubr.bf16.gmra.mrb[0].mxu0 %v712
    %v748 = vpop.f32.mrb[0].mxu0
    %v749 = vadd.f32 0.0, %v748
    %v750 = vpop.f32.mrb[0].mxu0
    %v751 = vpop.f32.mrb[0].mxu0
    %v752 = vadd.f32 0.0, %v751
    %v753 = vpop.f32.mrb[0].mxu0
    %754 = vdwg.mxu0
    %v755 = vsel %vm638, %v749, 0.0
    %v756 = vsel %vm638, %v752, 0.0
    %v757 = vadd.f32 %v632, %v755
    %v758 = vadd.f32 %v633, %v756
    %vm759 = vcmp.ge.s32.totalorder %v61, 24
    %vm760 = vcmp.lt.s32.totalorder %v61, 32
    %vm761 = vmand %vm759, %vm760
    %v762 = vsel %vm761, 1, 0
    %vm763 = vcmp.eq.s32.totalorder %v762, 1
    %v764 = vsel %vm763, %v368, 0.0
    %v765 = vsel %vm763, %v371, 0.0
    %v766 = vpack.c.bf16 %v765, %v764
    %v768 = vsel %vm269, %v766, 0
    %770 = vmatprep.subr.bf16.mxu0 0
    %771 = vmatpush1.bf16.xpose.msra.mxu0 %v390
    %772 = vmatprep.subr.bf16.mxu0 0
    %773 = vmatpush1.bf16.xpose.msra.mxu0 0
    %774 = vmatprep.subr.bf16.mxu0 0
    %775 = vmatpush1.bf16.xpose.msra.mxu0 0
    %776 = vmatprep.subr.bf16.mxu0 0
    %777 = vmatpush1.bf16.xpose.msra.mxu0 0
    %778 = vmatprep.subr.bf16.mxu0 0
    %779 = vmatpush1.bf16.xpose.msra.mxu0 0
    %780 = vmatprep.subr.bf16.mxu0 0
    %781 = vmatpush1.bf16.xpose.msra.mxu0 0
    %782 = vmatprep.subr.bf16.mxu0 0
    %783 = vmatpush1.bf16.xpose.msra.mxu0 0
    %784 = vmatprep.subr.bf16.mxu0 0
    %785 = vmatpush1.bf16.xpose.msra.mxu0 0
    %786 = vmatprep.subr.bf16.mxu0 0
    %787 = vmatpush1.bf16.xpose.msra.mxu0 0
    %788 = vmatprep.subr.bf16.mxu0 0
    %789 = vmatpush1.bf16.xpose.msra.mxu0 0
    %790 = vmatprep.subr.bf16.mxu0 0
    %791 = vmatpush1.bf16.xpose.msra.mxu0 0
    %792 = vmatprep.subr.bf16.mxu0 0
    %793 = vmatpush1.bf16.xpose.msra.mxu0 0
    %794 = vmatprep.subr.bf16.mxu0 0
    %795 = vmatpush1.bf16.xpose.msra.mxu0 0
    %796 = vmatprep.subr.bf16.mxu0 0
    %797 = vmatpush1.bf16.xpose.msra.mxu0 0
    %798 = vmatprep.subr.bf16.mxu0 0
    %799 = vmatpush1.bf16.xpose.msra.mxu0 0
    %800 = vmatprep.subr.bf16.mxu0 0
    %801 = vmatpush1.bf16.xpose.msra.mxu0 0
    %802 = vmatprep.mubr.bf16.mxu0 0
    %803 = vmatmul.mubr.bf16.gmra.mrb[0].mxu0 %v768
    %v804 = vpop.f32.mrb[0].mxu0
    %v805 = vadd.f32 0.0, %v804
    %v806 = vpop.f32.mrb[0].mxu0
    %v807 = vpop.f32.mrb[0].mxu0
    %v808 = vadd.f32 0.0, %v807
    %v809 = vpop.f32.mrb[0].mxu0
    %810 = vdwg.mxu0
    %v811 = vsel %vm265, %v805, -1e+30
    %v812 = vsel %vm266, %v808, -1e+30
    %v813 = vsel %vm95, %v811, -inf
    %814 = vmax.xlane.f32.xlu0 %v813
    %v815 = vpop.xlane.xlu0 %814
    %v816 = vsel %vm95, %v812, -inf
    %817 = vmax.xlane.f32.xlu0 %v816
    %v818 = vpop.xlane.xlu0 %817
    %v819 = vsub.f32 %v811, %v815
    %v820 = vsub.f32 %v812, %v818
    %v821 = vmul.f32 %v819, 1.442695
    %v822 = vpow.pop %v821
    %v823 = vmul.f32 %v820, 1.442695
    %v824 = vpow.pop %v823
    %v825 = vsel %vm95, %v822, 0.0
    %826 = vadd.xlane.f32.xlu0 %v825
    %v827 = vpop.xlane.xlu0 %826
    %v828 = vsel %vm95, %v824, 0.0
    %829 = vadd.xlane.f32.xlu0 %v828
    %v830 = vpop.xlane.xlu0 %829
    %v831 = vrcp.pop %v827
    %v832 = vrcp.pop %v830
    %v833 = vmul.f32 %v822, %v831
    %v834 = vmul.f32 %v824, %v832
    %v835 = vpack.c.bf16 %v834, %v833
    %v837 = vsel %vm95, %v835, 0
    %839 = vmatprep.subr.bf16.mxu0 0
    %840 = vmatpush1.bf16.msra.mxu0 %v459
    %841 = vmatprep.subr.bf16.mxu0 0
    %842 = vmatpush1.bf16.msra.mxu0 0
    %843 = vmatprep.subr.bf16.mxu0 0
    %844 = vmatpush1.bf16.msra.mxu0 0
    %845 = vmatprep.subr.bf16.mxu0 0
    %846 = vmatpush1.bf16.msra.mxu0 0
    %847 = vmatprep.subr.bf16.mxu0 0
    %848 = vmatpush1.bf16.msra.mxu0 0
    %849 = vmatprep.subr.bf16.mxu0 0
    %850 = vmatpush1.bf16.msra.mxu0 0
    %851 = vmatprep.subr.bf16.mxu0 0
    %852 = vmatpush1.bf16.msra.mxu0 0
    %853 = vmatprep.subr.bf16.mxu0 0
    %854 = vmatpush1.bf16.msra.mxu0 0
    %855 = vmatprep.subr.bf16.mxu0 0
    %856 = vmatpush1.bf16.msra.mxu0 0
    %857 = vmatprep.subr.bf16.mxu0 0
    %858 = vmatpush1.bf16.msra.mxu0 0
    %859 = vmatprep.subr.bf16.mxu0 0
    %860 = vmatpush1.bf16.msra.mxu0 0
    %861 = vmatprep.subr.bf16.mxu0 0
    %862 = vmatpush1.bf16.msra.mxu0 0
    %863 = vmatprep.subr.bf16.mxu0 0
    %864 = vmatpush1.bf16.msra.mxu0 0
    %865 = vmatprep.subr.bf16.mxu0 0
    %866 = vmatpush1.bf16.msra.mxu0 0
    %867 = vmatprep.subr.bf16.mxu0 0
    %868 = vmatpush1.bf16.msra.mxu0 0
    %869 = vmatprep.subr.bf16.mxu0 0
    %870 = vmatpush1.bf16.msra.mxu0 0
    %871 = vmatprep.mubr.bf16.mxu0 0
    %872 = vmatmul.mubr.bf16.gmra.mrb[0].mxu0 %v837
    %v873 = vpop.f32.mrb[0].mxu0
    %v874 = vadd.f32 0.0, %v873
    %v875 = vpop.f32.mrb[0].mxu0
    %v876 = vpop.f32.mrb[0].mxu0
    %v877 = vadd.f32 0.0, %v876
    %v878 = vpop.f32.mrb[0].mxu0
    %879 = vdwg.mxu0
    %v880 = vsel %vm763, %v874, 0.0
    %v881 = vsel %vm763, %v877, 0.0
    %v882 = vadd.f32 %v757, %v880
    %v883 = vadd.f32 %v758, %v881
    %v884 = vld [vmem:[%s6] sm:$0xf]
    %v885 = vld [vmem:[%s6 + $0x4] sm:$0xf]
    %v886 = vld [vmem:[%s6 + $0x8] sm:$0xf]
    %v887 = vld [vmem:[%s6 + $0xc] sm:$0xf]
    %v888 = vpack.c.bf16 %v883, %v882
    %v893 = vunpack.c.l.b16 %v884
    %v894 = vunpack.c.l.b16 %v885
    %v895 = vunpack.c.l.b16 %v886
    %v896 = vunpack.c.l.b16 %v887
    %v897 = vpack.c.b16 %v894, %v893
    %v898 = vpack.c.b16 %v896, %v895
    %v902 = vsel %vm269, %v888, 0
    %904 = vmatprep.subr.bf16.mxu0 0
    %905 = vmatpush1.bf16.msra.mxu0 %v897
    %906 = vmatprep.subr.bf16.mxu0 0
    %907 = vmatpush1.bf16.msra.mxu0 %v898
    %908 = vmatprep.subr.bf16.mxu0 0
    %909 = vmatpush1.bf16.msra.mxu0 0
    %910 = vmatprep.subr.bf16.mxu0 0
    %911 = vmatpush1.bf16.msra.mxu0 0
    %912 = vmatprep.subr.bf16.mxu0 0
    %913 = vmatpush1.bf16.msra.mxu0 0
    %914 = vmatprep.subr.bf16.mxu0 0
    %915 = vmatpush1.bf16.msra.mxu0 0
    %916 = vmatprep.subr.bf16.mxu0 0
    %917 = vmatpush1.bf16.msra.mxu0 0
    %918 = vmatprep.subr.bf16.mxu0 0
    %919 = vmatpush1.bf16.msra.mxu0 0
    %920 = vmatprep.subr.bf16.mxu0 0
    %921 = vmatpush1.bf16.msra.mxu0 0
    %922 = vmatprep.subr.bf16.mxu0 0
    %923 = vmatpush1.bf16.msra.mxu0 0
    %924 = vmatprep.subr.bf16.mxu0 0
    %925 = vmatpush1.bf16.msra.mxu0 0
    %926 = vmatprep.subr.bf16.mxu0 0
    %927 = vmatpush1.bf16.msra.mxu0 0
    %928 = vmatprep.subr.bf16.mxu0 0
    %929 = vmatpush1.bf16.msra.mxu0 0
    %930 = vmatprep.subr.bf16.mxu0 0
    %931 = vmatpush1.bf16.msra.mxu0 0
    %932 = vmatprep.subr.bf16.mxu0 0
    %933 = vmatpush1.bf16.msra.mxu0 0
    %934 = vmatprep.subr.bf16.mxu0 0
    %935 = vmatpush1.bf16.msra.mxu0 0
    %936 = vmatprep.mubr.bf16.mxu0 0
    %937 = vmatmul.mubr.bf16.gmra.mrb[0].mxu0 %v902
    %v938 = vpop.f32.mrb[0].mxu0
    %v939 = vadd.f32 0.0, %v938
    %v940 = vpop.f32.mrb[0].mxu0
    %v941 = vpop.f32.mrb[0].mxu0
    %v942 = vadd.f32 0.0, %v941
    %v943 = vpop.f32.mrb[0].mxu0
    %944 = vdwg.mxu0
    %v945 = vadd.f32 %v251, %v939
    %v946 = vadd.f32 %v256, %v942
    %v947 = vld [vmem:[%s7] sm:$0x1]
    %v949 = vlaneseq
    %v950 = vshrl.u32 %v949, 7
    %v951 = vsub.s32 0, %v950
    %v952 = vrot.slane %v947, %v951
    %v954 = vadd.f32 %v945, %v952
    %v955 = vadd.f32 %v946, %v952
    %v956 = vld [vmem:[%s8] sm:$0x1]
    %v957 = vld [vmem:[%s9] sm:$0x1]
    %v958 = vsel %vm269, %v954, 0.0
    %959 = vadd.xlane.f32.xlu0 %v958
    %v960 = vpop.xlane.xlu0 %959
    %v961 = vsel %vm269, %v955, 0.0
    %962 = vadd.xlane.f32.xlu0 %v961
    %v963 = vpop.xlane.xlu0 %962
    %v964 = vmul.f32 %v960, %v276
    %v965 = vmul.f32 %v963, %v276
    %v966 = vsub.f32 %v954, %v964
    %v967 = vsub.f32 %v955, %v965
    %v968 = vmul.f32 %v966, %v966
    %v969 = vmul.f32 %v967, %v967
    %v970 = vsel %vm269, %v968, 0.0
    %971 = vadd.xlane.f32.xlu0 %v970
    %v972 = vpop.xlane.xlu0 %971
    %v973 = vsel %vm269, %v969, 0.0
    %974 = vadd.xlane.f32.xlu0 %v973
    %v975 = vpop.xlane.xlu0 %974
    %v976 = vmul.f32 %v972, %v276
    %v977 = vmul.f32 %v975, %v276
    %v978 = vadd.f32 %v976, 1e-05
    %v979 = vadd.f32 %v977, 1e-05
    %v980 = vrsqrt.pop %v978
    %v981 = vrsqrt.pop %v979
    %v982 = vmul.f32 %v966, %v980
    %v983 = vmul.f32 %v967, %v981
    %v985 = vlaneseq
    %v986 = vshrl.u32 %v985, 7
    %v987 = vsub.s32 0, %v986
    %v988 = vrot.slane %v956, %v987
    %v990 = vmul.f32 %v982, %v988
    %v991 = vmul.f32 %v983, %v988
    %v993 = vlaneseq
    %v994 = vshrl.u32 %v993, 7
    %v995 = vsub.s32 0, %v994
    %v996 = vrot.slane %v957, %v995
    %v998 = vadd.f32 %v990, %v996
    %v999 = vadd.f32 %v991, %v996
    %v1000 = vld [vmem:[%s10] sm:$0xf]
    %v1001 = vld [vmem:[%s10 + $0x4] sm:$0xf]
    %v1002 = vld [vmem:[%s10 + $0x8] sm:$0xf]
    %v1003 = vld [vmem:[%s10 + $0xc] sm:$0xf]
    %v1004 = vpack.c.bf16 %v999, %v998
    %v1005 = vld [vmem:[%s11] sm:$0x1]
    %v1007 = vlaneseq
    %v1008 = vshrl.u32 %v1007, 7
    %v1009 = vsub.s32 0, %v1008
    %v1010 = vrot.slane %v1005, %v1009
    %v1016 = vunpack.c.l.b16 %v1000
    %v1017 = vunpack.c.l.b16 %v1001
    %v1018 = vunpack.c.l.b16 %v1002
    %v1019 = vunpack.c.l.b16 %v1003
    %v1020 = vpack.c.b16 %v1017, %v1016
    %v1021 = vpack.c.b16 %v1019, %v1018
    %v1025 = vsel %vm269, %v1004, 0
    %1027 = vmatprep.subr.bf16.mxu0 0
    %1028 = vmatpush1.bf16.msra.mxu0 %v1020
    %1029 = vmatprep.subr.bf16.mxu0 0
    %1030 = vmatpush1.bf16.msra.mxu0 %v1021
    %1031 = vmatprep.subr.bf16.mxu0 0
    %1032 = vmatpush1.bf16.msra.mxu0 0
    %1033 = vmatprep.subr.bf16.mxu0 0
    %1034 = vmatpush1.bf16.msra.mxu0 0
    %1035 = vmatprep.subr.bf16.mxu0 0
    %1036 = vmatpush1.bf16.msra.mxu0 0
    %1037 = vmatprep.subr.bf16.mxu0 0
    %1038 = vmatpush1.bf16.msra.mxu0 0
    %1039 = vmatprep.subr.bf16.mxu0 0
    %1040 = vmatpush1.bf16.msra.mxu0 0
    %1041 = vmatprep.subr.bf16.mxu0 0
    %1042 = vmatpush1.bf16.msra.mxu0 0
    %1043 = vmatprep.subr.bf16.mxu0 0
    %1044 = vmatpush1.bf16.msra.mxu0 0
    %1045 = vmatprep.subr.bf16.mxu0 0
    %1046 = vmatpush1.bf16.msra.mxu0 0
    %1047 = vmatprep.subr.bf16.mxu0 0
    %1048 = vmatpush1.bf16.msra.mxu0 0
    %1049 = vmatprep.subr.bf16.mxu0 0
    %1050 = vmatpush1.bf16.msra.mxu0 0
    %1051 = vmatprep.subr.bf16.mxu0 0
    %1052 = vmatpush1.bf16.msra.mxu0 0
    %1053 = vmatprep.subr.bf16.mxu0 0
    %1054 = vmatpush1.bf16.msra.mxu0 0
    %1055 = vmatprep.subr.bf16.mxu0 0
    %1056 = vmatpush1.bf16.msra.mxu0 0
    %1057 = vmatprep.subr.bf16.mxu0 0
    %1058 = vmatpush1.bf16.msra.mxu0 0
    %1059 = vmatprep.mubr.bf16.mxu0 0
    %1060 = vmatmul.mubr.bf16.gmra.mrb[0].mxu0 %v1025
    %v1061 = vpop.f32.mrb[0].mxu0
    %v1062 = vadd.f32 %v1010, %v1061
    %v1063 = vpop.f32.mrb[0].mxu0
    %v1064 = vpop.f32.mrb[0].mxu0
    %v1065 = vadd.f32 %v1010, %v1064
    %v1066 = vpop.f32.mrb[0].mxu0
    %1067 = vdwg.mxu0
    %v1068 = vmul.f32 %v1062, 0.5
    %v1069 = vmul.f32 %v1065, 0.5
    %v1070 = vmul.f32 %v1062, 0.044715
    %v1071 = vmul.f32 %v1065, 0.044715
    %v1072 = vmul.f32 %v1070, %v1062
    %v1073 = vmul.f32 %v1071, %v1065
    %v1074 = vmul.f32 %v1072, %v1062
    %v1075 = vmul.f32 %v1073, %v1065
    %v1076 = vadd.f32 %v1062, %v1074
    %v1077 = vadd.f32 %v1065, %v1075
    %v1078 = vmul.f32 %v1076, 0.7978846
    %v1079 = vmul.f32 %v1077, 0.7978846
    %v1080 = vtanh.pop %v1078
    %v1081 = vtanh.pop %v1079
    %v1082 = vadd.f32 %v1080, 1.0
    %v1083 = vadd.f32 %v1081, 1.0
    %v1084 = vmul.f32 %v1068, %v1082
    %v1085 = vmul.f32 %v1069, %v1083
    %v1086 = vld [vmem:[%s12] sm:$0xf]
    %v1087 = vld [vmem:[%s12 + $0x4] sm:$0xf]
    %v1088 = vld [vmem:[%s12 + $0x8] sm:$0xf]
    %v1089 = vld [vmem:[%s12 + $0xc] sm:$0xf]
    %v1090 = vld [vmem:[%s12 + $0x10] sm:$0xf]
    %v1091 = vld [vmem:[%s12 + $0x14] sm:$0xf]
    %v1092 = vld [vmem:[%s12 + $0x18] sm:$0xf]
    %v1093 = vld [vmem:[%s12 + $0x1c] sm:$0xf]
    %v1094 = vld [vmem:[%s12 + $0x20] sm:$0xf]
    %v1095 = vld [vmem:[%s12 + $0x24] sm:$0xf]
    %v1096 = vld [vmem:[%s12 + $0x28] sm:$0xf]
    %v1097 = vld [vmem:[%s12 + $0x2c] sm:$0xf]
    %v1098 = vld [vmem:[%s12 + $0x30] sm:$0xf]
    %v1099 = vld [vmem:[%s12 + $0x34] sm:$0xf]
    %v1100 = vld [vmem:[%s12 + $0x38] sm:$0xf]
    %v1101 = vld [vmem:[%s12 + $0x3c] sm:$0xf]
    %v1102 = vpack.c.bf16 %v1085, %v1084
    %v1119 = vunpack.c.l.b16 %v1086
    %v1120 = vunpack.c.l.b16 %v1087
    %v1121 = vunpack.c.l.b16 %v1088
    %v1122 = vunpack.c.l.b16 %v1089
    %v1123 = vunpack.c.l.b16 %v1090
    %v1124 = vunpack.c.l.b16 %v1091
    %v1125 = vunpack.c.l.b16 %v1092
    %v1126 = vunpack.c.l.b16 %v1093
    %v1127 = vunpack.c.l.b16 %v1094
    %v1128 = vunpack.c.l.b16 %v1095
    %v1129 = vunpack.c.l.b16 %v1096
    %v1130 = vunpack.c.l.b16 %v1097
    %v1131 = vunpack.c.l.b16 %v1098
    %v1132 = vunpack.c.l.b16 %v1099
    %v1133 = vunpack.c.l.b16 %v1100
    %v1134 = vunpack.c.l.b16 %v1101
    %v1135 = vpack.c.b16 %v1120, %v1119
    %v1136 = vpack.c.b16 %v1122, %v1121
    %v1137 = vpack.c.b16 %v1124, %v1123
    %v1138 = vpack.c.b16 %v1126, %v1125
    %v1139 = vpack.c.b16 %v1128, %v1127
    %v1140 = vpack.c.b16 %v1130, %v1129
    %v1141 = vpack.c.b16 %v1132, %v1131
    %v1142 = vpack.c.b16 %v1134, %v1133
    %1151 = vmatprep.subr.bf16.mxu0 0
    %1152 = vmatpush1.bf16.msra.mxu0 %v1135
    %1153 = vmatprep.subr.bf16.mxu0 0
    %1154 = vmatpush1.bf16.msra.mxu0 %v1136
    %1155 = vmatprep.subr.bf16.mxu0 0
    %1156 = vmatpush1.bf16.msra.mxu0 %v1137
    %1157 = vmatprep.subr.bf16.mxu0 0
    %1158 = vmatpush1.bf16.msra.mxu0 %v1138
    %1159 = vmatprep.subr.bf16.mxu0 0
    %1160 = vmatpush1.bf16.msra.mxu0 %v1139
    %1161 = vmatprep.subr.bf16.mxu0 0
    %1162 = vmatpush1.bf16.msra.mxu0 %v1140
    %1163 = vmatprep.subr.bf16.mxu0 0
    %1164 = vmatpush1.bf16.msra.mxu0 %v1141
    %1165 = vmatprep.subr.bf16.mxu0 0
    %1166 = vmatpush1.bf16.msra.mxu0 %v1142
    %1167 = vmatprep.subr.bf16.mxu0 0
    %1168 = vmatpush1.bf16.msra.mxu0 0
    %1169 = vmatprep.subr.bf16.mxu0 0
    %1170 = vmatpush1.bf16.msra.mxu0 0
    %1171 = vmatprep.subr.bf16.mxu0 0
    %1172 = vmatpush1.bf16.msra.mxu0 0
    %1173 = vmatprep.subr.bf16.mxu0 0
    %1174 = vmatpush1.bf16.msra.mxu0 0
    %1175 = vmatprep.subr.bf16.mxu0 0
    %1176 = vmatpush1.bf16.msra.mxu0 0
    %1177 = vmatprep.subr.bf16.mxu0 0
    %1178 = vmatpush1.bf16.msra.mxu0 0
    %1179 = vmatprep.subr.bf16.mxu0 0
    %1180 = vmatpush1.bf16.msra.mxu0 0
    %1181 = vmatprep.subr.bf16.mxu0 0
    %1182 = vmatpush1.bf16.msra.mxu0 0
    %1183 = vmatprep.mubr.bf16.mxu0 0
    %1184 = vmatmul.mubr.bf16.gmra.mrb[0].mxu0 %v1102
    %v1185 = vpop.f32.mrb[0].mxu0
    %v1186 = vadd.f32 0.0, %v1185
    %v1187 = vpop.f32.mrb[0].mxu0
    %v1188 = vpop.f32.mrb[0].mxu0
    %v1189 = vadd.f32 0.0, %v1188
    %v1190 = vpop.f32.mrb[0].mxu0
    %1191 = vdwg.mxu0
    %v1192 = vadd.f32 %v954, %v1186
    %v1193 = vadd.f32 %v955, %v1189
    %v1194 = vld [vmem:[%s13] sm:$0x1]
    %v1196 = vlaneseq
    %v1197 = vshrl.u32 %v1196, 7
    %v1198 = vsub.s32 0, %v1197
    %v1199 = vrot.slane %v1194, %v1198
    %v1201 = vadd.f32 %v1192, %v1199
    %v1202 = vadd.f32 %v1193, %v1199
    %s1203 = scalar_lea.vmem %s3, 1
    %v1204 = vld [vmem:[%s1203] sm:$0x1]
    %s1205 = scalar_lea.vmem %s4, 1
    %v1206 = vld [vmem:[%s1205] sm:$0x1]
    %v1207 = vsel %vm269, %v1201, 0.0
    %1208 = vadd.xlane.f32.xlu0 %v1207
    %v1209 = vpop.xlane.xlu0 %1208
    %v1210 = vsel %vm269, %v1202, 0.0
    %1211 = vadd.xlane.f32.xlu0 %v1210
    %v1212 = vpop.xlane.xlu0 %1211
    %v1213 = vmul.f32 %v1209, %v276
    %v1214 = vmul.f32 %v1212, %v276
    %v1215 = vsub.f32 %v1201, %v1213
    %v1216 = vsub.f32 %v1202, %v1214
    %v1217 = vmul.f32 %v1215, %v1215
    %v1218 = vmul.f32 %v1216, %v1216
    %v1219 = vsel %vm269, %v1217, 0.0
    %1220 = vadd.xlane.f32.xlu0 %v1219
    %v1221 = vpop.xlane.xlu0 %1220
    %v1222 = vsel %vm269, %v1218, 0.0
    %1223 = vadd.xlane.f32.xlu0 %v1222
    %v1224 = vpop.xlane.xlu0 %1223
    %v1225 = vmul.f32 %v1221, %v276
    %v1226 = vmul.f32 %v1224, %v276
    %v1227 = vadd.f32 %v1225, 1e-05
    %v1228 = vadd.f32 %v1226, 1e-05
    %v1229 = vrsqrt.pop %v1227
    %v1230 = vrsqrt.pop %v1228
    %v1231 = vmul.f32 %v1215, %v1229
    %v1232 = vmul.f32 %v1216, %v1230
    %v1234 = vlaneseq
    %v1235 = vshrl.u32 %v1234, 7
    %v1236 = vsub.s32 0, %v1235
    %v1237 = vrot.slane %v1204, %v1236
    %v1239 = vmul.f32 %v1231, %v1237
    %v1240 = vmul.f32 %v1232, %v1237
    %v1242 = vlaneseq
    %v1243 = vshrl.u32 %v1242, 7
    %v1244 = vsub.s32 0, %v1243
    %v1245 = vrot.slane %v1206, %v1244
    %v1247 = vadd.f32 %v1239, %v1245
    %v1248 = vadd.f32 %v1240, %v1245
    %s1249 = scalar_lea.vmem %s5, 16
    %v1250 = vld [vmem:[%s1249] sm:$0xf]
    %v1251 = vld [vmem:[%s1249 + $0x4] sm:$0xf]
    %v1252 = vld [vmem:[%s1249 + $0x8] sm:$0xf]
    %v1253 = vld [vmem:[%s1249 + $0xc] sm:$0xf]
    %v1254 = vpack.c.bf16 %v1248, %v1247
    %v1259 = vunpack.c.l.b16 %v1250
    %v1260 = vunpack.c.l.b16 %v1251
    %v1261 = vunpack.c.l.b16 %v1252
    %v1262 = vunpack.c.l.b16 %v1253
    %v1263 = vpack.c.b16 %v1260, %v1259
    %v1264 = vpack.c.b16 %v1262, %v1261
    %v1268 = vsel %vm269, %v1254, 0
    %1270 = vmatprep.subr.bf16.mxu0 0
    %1271 = vmatpush1.bf16.msra.mxu0 %v1263
    %1272 = vmatprep.subr.bf16.mxu0 0
    %1273 = vmatpush1.bf16.msra.mxu0 %v1264
    %1274 = vmatprep.subr.bf16.mxu0 0
    %1275 = vmatpush1.bf16.msra.mxu0 0
    %1276 = vmatprep.subr.bf16.mxu0 0
    %1277 = vmatpush1.bf16.msra.mxu0 0
    %1278 = vmatprep.subr.bf16.mxu0 0
    %1279 = vmatpush1.bf16.msra.mxu0 0
    %1280 = vmatprep.subr.bf16.mxu0 0
    %1281 = vmatpush1.bf16.msra.mxu0 0
    %1282 = vmatprep.subr.bf16.mxu0 0
    %1283 = vmatpush1.bf16.msra.mxu0 0
    %1284 = vmatprep.subr.bf16.mxu0 0
    %1285 = vmatpush1.bf16.msra.mxu0 0
    %1286 = vmatprep.subr.bf16.mxu0 0
    %1287 = vmatpush1.bf16.msra.mxu0 0
    %1288 = vmatprep.subr.bf16.mxu0 0
    %1289 = vmatpush1.bf16.msra.mxu0 0
    %1290 = vmatprep.subr.bf16.mxu0 0
    %1291 = vmatpush1.bf16.msra.mxu0 0
    %1292 = vmatprep.subr.bf16.mxu0 0
    %1293 = vmatpush1.bf16.msra.mxu0 0
    %1294 = vmatprep.subr.bf16.mxu0 0
    %1295 = vmatpush1.bf16.msra.mxu0 0
    %1296 = vmatprep.subr.bf16.mxu0 0
    %1297 = vmatpush1.bf16.msra.mxu0 0
    %1298 = vmatprep.subr.bf16.mxu0 0
    %1299 = vmatpush1.bf16.msra.mxu0 0
    %1300 = vmatprep.subr.bf16.mxu0 0
    %1301 = vmatpush1.bf16.msra.mxu0 0
    %1302 = vmatprep.mubr.bf16.mxu0 0
    %1303 = vmatmul.mubr.bf16.gmra.mrb[0].mxu0 %v1268
    %v1304 = vpop.f32.mrb[0].mxu0
    %v1305 = vadd.f32 0.0, %v1304
    %v1306 = vpop.f32.mrb[0].mxu0
    %v1307 = vpop.f32.mrb[0].mxu0
    %v1308 = vadd.f32 0.0, %v1307
    %v1309 = vpop.f32.mrb[0].mxu0
    %1310 = vdwg.mxu0
    %v1311 = vsel %vm378, %v1305, 0.0
    %v1312 = vsel %vm378, %v1308, 0.0
    %v1313 = vpack.c.bf16 %v1312, %v1311
    %v1314 = vpack.c.bf16 %v1308, %v1305
    %1316 = vrot.lane.b32.xlu0 %v1314, 96
    %v1317 = vpop.permute.xlu0 %1316
    %v1319 = vsel %vm269, %v1313, 0
    %v1322 = vsel %vm269, %v1317, 0
    %1324 = vmatprep.subr.bf16.mxu0 0
    %1325 = vmatpush1.bf16.xpose.msra.mxu0 %v1322
    %1326 = vmatprep.subr.bf16.mxu0 0
    %1327 = vmatpush1.bf16.xpose.msra.mxu0 0
    %1328 = vmatprep.subr.bf16.mxu0 0
    %1329 = vmatpush1.bf16.xpose.msra.mxu0 0
    %1330 = vmatprep.subr.bf16.mxu0 0
    %1331 = vmatpush1.bf16.xpose.msra.mxu0 0
    %1332 = vmatprep.subr.bf16.mxu0 0
    %1333 = vmatpush1.bf16.xpose.msra.mxu0 0
    %1334 = vmatprep.subr.bf16.mxu0 0
    %1335 = vmatpush1.bf16.xpose.msra.mxu0 0
    %1336 = vmatprep.subr.bf16.mxu0 0
    %1337 = vmatpush1.bf16.xpose.msra.mxu0 0
    %1338 = vmatprep.subr.bf16.mxu0 0
    %1339 = vmatpush1.bf16.xpose.msra.mxu0 0
    %1340 = vmatprep.subr.bf16.mxu0 0
    %1341 = vmatpush1.bf16.xpose.msra.mxu0 0
    %1342 = vmatprep.subr.bf16.mxu0 0
    %1343 = vmatpush1.bf16.xpose.msra.mxu0 0
    %1344 = vmatprep.subr.bf16.mxu0 0
    %1345 = vmatpush1.bf16.xpose.msra.mxu0 0
    %1346 = vmatprep.subr.bf16.mxu0 0
    %1347 = vmatpush1.bf16.xpose.msra.mxu0 0
    %1348 = vmatprep.subr.bf16.mxu0 0
    %1349 = vmatpush1.bf16.xpose.msra.mxu0 0
    %1350 = vmatprep.subr.bf16.mxu0 0
    %1351 = vmatpush1.bf16.xpose.msra.mxu0 0
    %1352 = vmatprep.subr.bf16.mxu0 0
    %1353 = vmatpush1.bf16.xpose.msra.mxu0 0
    %1354 = vmatprep.subr.bf16.mxu0 0
    %1355 = vmatpush1.bf16.xpose.msra.mxu0 0
    %1356 = vmatprep.mubr.bf16.mxu0 0
    %1357 = vmatmul.mubr.bf16.gmra.mrb[0].mxu0 %v1319
    %v1358 = vpop.f32.mrb[0].mxu0
    %v1359 = vadd.f32 0.0, %v1358
    %v1360 = vpop.f32.mrb[0].mxu0
    %v1361 = vpop.f32.mrb[0].mxu0
    %v1362 = vadd.f32 0.0, %v1361
    %v1363 = vpop.f32.mrb[0].mxu0
    %1364 = vdwg.mxu0
    %v1365 = vsel %vm265, %v1359, -1e+30
    %v1366 = vsel %vm266, %v1362, -1e+30
    %v1367 = vsel %vm95, %v1365, -inf
    %1368 = vmax.xlane.f32.xlu0 %v1367
    %v1369 = vpop.xlane.xlu0 %1368
    %v1370 = vsel %vm95, %v1366, -inf
    %1371 = vmax.xlane.f32.xlu0 %v1370
    %v1372 = vpop.xlane.xlu0 %1371
    %v1373 = vsub.f32 %v1365, %v1369
    %v1374 = vsub.f32 %v1366, %v1372
    %v1375 = vmul.f32 %v1373, 1.442695
    %v1376 = vpow.pop %v1375
    %v1377 = vmul.f32 %v1374, 1.442695
    %v1378 = vpow.pop %v1377
    %v1379 = vsel %vm95, %v1376, 0.0
    %1380 = vadd.xlane.f32.xlu0 %v1379
    %v1381 = vpop.xlane.xlu0 %1380
    %v1382 = vsel %vm95, %v1378, 0.0
    %1383 = vadd.xlane.f32.xlu0 %v1382
    %v1384 = vpop.xlane.xlu0 %1383
    %v1385 = vrcp.pop %v1381
    %v1386 = vrcp.pop %v1384
    %v1387 = vmul.f32 %v1376, %v1385
    %v1388 = vmul.f32 %v1378, %v1386
    %v1389 = vpack.c.bf16 %v1388, %v1387
    %1390 = vrot.lane.b32.xlu0 %v1314, 64
    %v1391 = vpop.permute.xlu0 %1390
    %v1394 = vsel %vm95, %v1389, 0
    %1396 = vmatprep.subr.bf16.mxu0 0
    %1397 = vmatpush1.bf16.msra.mxu0 %v1391
    %1398 = vmatprep.subr.bf16.mxu0 0
    %1399 = vmatpush1.bf16.msra.mxu0 0
    %1400 = vmatprep.subr.bf16.mxu0 0
    %1401 = vmatpush1.bf16.msra.mxu0 0
    %1402 = vmatprep.subr.bf16.mxu0 0
    %1403 = vmatpush1.bf16.msra.mxu0 0
    %1404 = vmatprep.subr.bf16.mxu0 0
    %1405 = vmatpush1.bf16.msra.mxu0 0
    %1406 = vmatprep.subr.bf16.mxu0 0
    %1407 = vmatpush1.bf16.msra.mxu0 0
    %1408 = vmatprep.subr.bf16.mxu0 0
    %1409 = vmatpush1.bf16.msra.mxu0 0
    %1410 = vmatprep.subr.bf16.mxu0 0
    %1411 = vmatpush1.bf16.msra.mxu0 0
    %1412 = vmatprep.subr.bf16.mxu0 0
    %1413 = vmatpush1.bf16.msra.mxu0 0
    %1414 = vmatprep.subr.bf16.mxu0 0
    %1415 = vmatpush1.bf16.msra.mxu0 0
    %1416 = vmatprep.subr.bf16.mxu0 0
    %1417 = vmatpush1.bf16.msra.mxu0 0
    %1418 = vmatprep.subr.bf16.mxu0 0
    %1419 = vmatpush1.bf16.msra.mxu0 0
    %1420 = vmatprep.subr.bf16.mxu0 0
    %1421 = vmatpush1.bf16.msra.mxu0 0
    %1422 = vmatprep.subr.bf16.mxu0 0
    %1423 = vmatpush1.bf16.msra.mxu0 0
    %1424 = vmatprep.subr.bf16.mxu0 0
    %1425 = vmatpush1.bf16.msra.mxu0 0
    %1426 = vmatprep.subr.bf16.mxu0 0
    %1427 = vmatpush1.bf16.msra.mxu0 0
    %1428 = vmatprep.mubr.bf16.mxu0 0
    %1429 = vmatmul.mubr.bf16.gmra.mrb[0].mxu0 %v1394
    %v1430 = vpop.f32.mrb[0].mxu0
    %v1431 = vadd.f32 0.0, %v1430
    %v1432 = vpop.f32.mrb[0].mxu0
    %v1433 = vpop.f32.mrb[0].mxu0
    %v1434 = vadd.f32 0.0, %v1433
    %v1435 = vpop.f32.mrb[0].mxu0
    %1436 = vdwg.mxu0
    %v1437 = vsel %vm378, %v1431, 0.0
    %v1438 = vsel %vm378, %v1434, 0.0
    %v1439 = vadd.f32 %v1437, 0.0
    %v1440 = vadd.f32 %v1438, 0.0
    %v1441 = vsel %vm513, %v1305, 0.0
    %v1442 = vsel %vm513, %v1308, 0.0
    %v1443 = vpack.c.bf16 %v1442, %v1441
    %v1445 = vsel %vm269, %v1443, 0
    %1447 = vmatprep.subr.bf16.mxu0 0
    %1448 = vmatpush1.bf16.xpose.msra.mxu0 %v1322
    %1449 = vmatprep.subr.bf16.mxu0 0
    %1450 = vmatpush1.bf16.xpose.msra.mxu0 0
    %1451 = vmatprep.subr.bf16.mxu0 0
    %1452 = vmatpush1.bf16.xpose.msra.mxu0 0
    %1453 = vmatprep.subr.bf16.mxu0 0
    %1454 = vmatpush1.bf16.xpose.msra.mxu0 0
    %1455 = vmatprep.subr.bf16.mxu0 0
    %1456 = vmatpush1.bf16.xpose.msra.mxu0 0
    %1457 = vmatprep.subr.bf16.mxu0 0
    %1458 = vmatpush1.bf16.xpose.msra.mxu0 0
    %1459 = vmatprep.subr.bf16.mxu0 0
    %1460 = vmatpush1.bf16.xpose.msra.mxu0 0
    %1461 = vmatprep.subr.bf16.mxu0 0
    %1462 = vmatpush1.bf16.xpose.msra.mxu0 0
    %1463 = vmatprep.subr.bf16.mxu0 0
    %1464 = vmatpush1.bf16.xpose.msra.mxu0 0
    %1465 = vmatprep.subr.bf16.mxu0 0
    %1466 = vmatpush1.bf16.xpose.msra.mxu0 0
    %1467 = vmatprep.subr.bf16.mxu0 0
    %1468 = vmatpush1.bf16.xpose.msra.mxu0 0
    %1469 = vmatprep.subr.bf16.mxu0 0
    %1470 = vmatpush1.bf16.xpose.msra.mxu0 0
    %1471 = vmatprep.subr.bf16.mxu0 0
    %1472 = vmatpush1.bf16.xpose.msra.mxu0 0
    %1473 = vmatprep.subr.bf16.mxu0 0
    %1474 = vmatpush1.bf16.xpose.msra.mxu0 0
    %1475 = vmatprep.subr.bf16.mxu0 0
    %1476 = vmatpush1.bf16.xpose.msra.mxu0 0
    %1477 = vmatprep.subr.bf16.mxu0 0
    %1478 = vmatpush1.bf16.xpose.msra.mxu0 0
    %1479 = vmatprep.mubr.bf16.mxu0 0
    %1480 = vmatmul.mubr.bf16.gmra.mrb[0].mxu0 %v1445
    %v1481 = vpop.f32.mrb[0].mxu0
    %v1482 = vadd.f32 0.0, %v1481
    %v1483 = vpop.f32.mrb[0].mxu0
    %v1484 = vpop.f32.mrb[0].mxu0
    %v1485 = vadd.f32 0.0, %v1484
    %v1486 = vpop.f32.mrb[0].mxu0
    %1487 = vdwg.mxu0
    %v1488 = vsel %vm265, %v1482, -1e+30
    %v1489 = vsel %vm266, %v1485, -1e+30
    %v1490 = vsel %vm95, %v1488, -inf
    %1491 = vmax.xlane.f32.xlu0 %v1490
    %v1492 = vpop.xlane.xlu0 %1491
    %v1493 = vsel %vm95, %v1489, -inf
    %1494 = vmax.xlane.f32.xlu0 %v1493
    %v1495 = vpop.xlane.xlu0 %1494
    %v1496 = vsub.f32 %v1488, %v1492
    %v1497 = vsub.f32 %v1489, %v1495
    %v1498 = vmul.f32 %v1496, 1.442695
    %v1499 = vpow.pop %v1498
    %v1500 = vmul.f32 %v1497, 1.442695
    %v1501 = vpow.pop %v1500
    %v1502 = vsel %vm95, %v1499, 0.0
    %1503 = vadd.xlane.f32.xlu0 %v1502
    %v1504 = vpop.xlane.xlu0 %1503
    %v1505 = vsel %vm95, %v1501, 0.0
    %1506 = vadd.xlane.f32.xlu0 %v1505
    %v1507 = vpop.xlane.xlu0 %1506
    %v1508 = vrcp.pop %v1504
    %v1509 = vrcp.pop %v1507
    %v1510 = vmul.f32 %v1499, %v1508
    %v1511 = vmul.f32 %v1501, %v1509
    %v1512 = vpack.c.bf16 %v1511, %v1510
    %v1514 = vsel %vm95, %v1512, 0
    %1516 = vmatprep.subr.bf16.mxu0 0
    %1517 = vmatpush1.bf16.msra.mxu0 %v1391
    %1518 = vmatprep.subr.bf16.mxu0 0
    %1519 = vmatpush1.bf16.msra.mxu0 0
    %1520 = vmatprep.subr.bf16.mxu0 0
    %1521 = vmatpush1.bf16.msra.mxu0 0
    %1522 = vmatprep.subr.bf16.mxu0 0
    %1523 = vmatpush1.bf16.msra.mxu0 0
    %1524 = vmatprep.subr.bf16.mxu0 0
    %1525 = vmatpush1.bf16.msra.mxu0 0
    %1526 = vmatprep.subr.bf16.mxu0 0
    %1527 = vmatpush1.bf16.msra.mxu0 0
    %1528 = vmatprep.subr.bf16.mxu0 0
    %1529 = vmatpush1.bf16.msra.mxu0 0
    %1530 = vmatprep.subr.bf16.mxu0 0
    %1531 = vmatpush1.bf16.msra.mxu0 0
    %1532 = vmatprep.subr.bf16.mxu0 0
    %1533 = vmatpush1.bf16.msra.mxu0 0
    %1534 = vmatprep.subr.bf16.mxu0 0
    %1535 = vmatpush1.bf16.msra.mxu0 0
    %1536 = vmatprep.subr.bf16.mxu0 0
    %1537 = vmatpush1.bf16.msra.mxu0 0
    %1538 = vmatprep.subr.bf16.mxu0 0
    %1539 = vmatpush1.bf16.msra.mxu0 0
    %1540 = vmatprep.subr.bf16.mxu0 0
    %1541 = vmatpush1.bf16.msra.mxu0 0
    %1542 = vmatprep.subr.bf16.mxu0 0
    %1543 = vmatpush1.bf16.msra.mxu0 0
    %1544 = vmatprep.subr.bf16.mxu0 0
    %1545 = vmatpush1.bf16.msra.mxu0 0
    %1546 = vmatprep.subr.bf16.mxu0 0
    %1547 = vmatpush1.bf16.msra.mxu0 0
    %1548 = vmatprep.mubr.bf16.mxu0 0
    %1549 = vmatmul.mubr.bf16.gmra.mrb[0].mxu0 %v1514
    %v1550 = vpop.f32.mrb[0].mxu0
    %v1551 = vadd.f32 0.0, %v1550
    %v1552 = vpop.f32.mrb[0].mxu0
    %v1553 = vpop.f32.mrb[0].mxu0
    %v1554 = vadd.f32 0.0, %v1553
    %v1555 = vpop.f32.mrb[0].mxu0
    %1556 = vdwg.mxu0
    %v1557 = vsel %vm513, %v1551, 0.0
    %v1558 = vsel %vm513, %v1554, 0.0
    %v1559 = vadd.f32 %v1439, %v1557
    %v1560 = vadd.f32 %v1440, %v1558
    %v1561 = vsel %vm638, %v1305, 0.0
    %v1562 = vsel %vm638, %v1308, 0.0
    %v1563 = vpack.c.bf16 %v1562, %v1561
    %v1565 = vsel %vm269, %v1563, 0
    %1567 = vmatprep.subr.bf16.mxu0 0
    %1568 = vmatpush1.bf16.xpose.msra.mxu0 %v1322
    %1569 = vmatprep.subr.bf16.mxu0 0
    %1570 = vmatpush1.bf16.xpose.msra.mxu0 0
    %1571 = vmatprep.subr.bf16.mxu0 0
    %1572 = vmatpush1.bf16.xpose.msra.mxu0 0
    %1573 = vmatprep.subr.bf16.mxu0 0
    %1574 = vmatpush1.bf16.xpose.msra.mxu0 0
    %1575 = vmatprep.subr.bf16.mxu0 0
    %1576 = vmatpush1.bf16.xpose.msra.mxu0 0
    %1577 = vmatprep.subr.bf16.mxu0 0
    %1578 = vmatpush1.bf16.xpose.msra.mxu0 0
    %1579 = vmatprep.subr.bf16.mxu0 0
    %1580 = vmatpush1.bf16.xpose.msra.mxu0 0
    %1581 = vmatprep.subr.bf16.mxu0 0
    %1582 = vmatpush1.bf16.xpose.msra.mxu0 0
    %1583 = vmatprep.subr.bf16.mxu0 0
    %1584 = vmatpush1.bf16.xpose.msra.mxu0 0
    %1585 = vmatprep.subr.bf16.mxu0 0
    %1586 = vmatpush1.bf16.xpose.msra.mxu0 0
    %1587 = vmatprep.subr.bf16.mxu0 0
    %1588 = vmatpush1.bf16.xpose.msra.mxu0 0
    %1589 = vmatprep.subr.bf16.mxu0 0
    %1590 = vmatpush1.bf16.xpose.msra.mxu0 0
    %1591 = vmatprep.subr.bf16.mxu0 0
    %1592 = vmatpush1.bf16.xpose.msra.mxu0 0
    %1593 = vmatprep.subr.bf16.mxu0 0
    %1594 = vmatpush1.bf16.xpose.msra.mxu0 0
    %1595 = vmatprep.subr.bf16.mxu0 0
    %1596 = vmatpush1.bf16.xpose.msra.mxu0 0
    %1597 = vmatprep.subr.bf16.mxu0 0
    %1598 = vmatpush1.bf16.xpose.msra.mxu0 0
    %1599 = vmatprep.mubr.bf16.mxu0 0
    %1600 = vmatmul.mubr.bf16.gmra.mrb[0].mxu0 %v1565
    %v1601 = vpop.f32.mrb[0].mxu0
    %v1602 = vadd.f32 0.0, %v1601
    %v1603 = vpop.f32.mrb[0].mxu0
    %v1604 = vpop.f32.mrb[0].mxu0
    %v1605 = vadd.f32 0.0, %v1604
    %v1606 = vpop.f32.mrb[0].mxu0
    %1607 = vdwg.mxu0
    %v1608 = vsel %vm265, %v1602, -1e+30
    %v1609 = vsel %vm266, %v1605, -1e+30
    %v1610 = vsel %vm95, %v1608, -inf
    %1611 = vmax.xlane.f32.xlu0 %v1610
    %v1612 = vpop.xlane.xlu0 %1611
    %v1613 = vsel %vm95, %v1609, -inf
    %1614 = vmax.xlane.f32.xlu0 %v1613
    %v1615 = vpop.xlane.xlu0 %1614
    %v1616 = vsub.f32 %v1608, %v1612
    %v1617 = vsub.f32 %v1609, %v1615
    %v1618 = vmul.f32 %v1616, 1.442695
    %v1619 = vpow.pop %v1618
    %v1620 = vmul.f32 %v1617, 1.442695
    %v1621 = vpow.pop %v1620
    %v1622 = vsel %vm95, %v1619, 0.0
    %1623 = vadd.xlane.f32.xlu0 %v1622
    %v1624 = vpop.xlane.xlu0 %1623
    %v1625 = vsel %vm95, %v1621, 0.0
    %1626 = vadd.xlane.f32.xlu0 %v1625
    %v1627 = vpop.xlane.xlu0 %1626
    %v1628 = vrcp.pop %v1624
    %v1629 = vrcp.pop %v1627
    %v1630 = vmul.f32 %v1619, %v1628
    %v1631 = vmul.f32 %v1621, %v1629
    %v1632 = vpack.c.bf16 %v1631, %v1630
    %v1634 = vsel %vm95, %v1632, 0
    %1636 = vmatprep.subr.bf16.mxu0 0
    %1637 = vmatpush1.bf16.msra.mxu0 %v1391
    %1638 = vmatprep.subr.bf16.mxu0 0
    %1639 = vmatpush1.bf16.msra.mxu0 0
    %1640 = vmatprep.subr.bf16.mxu0 0
    %1641 = vmatpush1.bf16.msra.mxu0 0
    %1642 = vmatprep.subr.bf16.mxu0 0
    %1643 = vmatpush1.bf16.msra.mxu0 0
    %1644 = vmatprep.subr.bf16.mxu0 0
    %1645 = vmatpush1.bf16.msra.mxu0 0
    %1646 = vmatprep.subr.bf16.mxu0 0
    %1647 = vmatpush1.bf16.msra.mxu0 0
    %1648 = vmatprep.subr.bf16.mxu0 0
    %1649 = vmatpush1.bf16.msra.mxu0 0
    %1650 = vmatprep.subr.bf16.mxu0 0
    %1651 = vmatpush1.bf16.msra.mxu0 0
    %1652 = vmatprep.subr.bf16.mxu0 0
    %1653 = vmatpush1.bf16.msra.mxu0 0
    %1654 = vmatprep.subr.bf16.mxu0 0
    %1655 = vmatpush1.bf16.msra.mxu0 0
    %1656 = vmatprep.subr.bf16.mxu0 0
    %1657 = vmatpush1.bf16.msra.mxu0 0
    %1658 = vmatprep.subr.bf16.mxu0 0
    %1659 = vmatpush1.bf16.msra.mxu0 0
    %1660 = vmatprep.subr.bf16.mxu0 0
    %1661 = vmatpush1.bf16.msra.mxu0 0
    %1662 = vmatprep.subr.bf16.mxu0 0
    %1663 = vmatpush1.bf16.msra.mxu0 0
    %1664 = vmatprep.subr.bf16.mxu0 0
    %1665 = vmatpush1.bf16.msra.mxu0 0
    %1666 = vmatprep.subr.bf16.mxu0 0
    %1667 = vmatpush1.bf16.msra.mxu0 0
    %1668 = vmatprep.mubr.bf16.mxu0 0
    %1669 = vmatmul.mubr.bf16.gmra.mrb[0].mxu0 %v1634
    %v1670 = vpop.f32.mrb[0].mxu0
    %v1671 = vadd.f32 0.0, %v1670
    %v1672 = vpop.f32.mrb[0].mxu0
    %v1673 = vpop.f32.mrb[0].mxu0
    %v1674 = vadd.f32 0.0, %v1673
    %v1675 = vpop.f32.mrb[0].mxu0
    %1676 = vdwg.mxu0
    %v1677 = vsel %vm638, %v1671, 0.0
    %v1678 = vsel %vm638, %v1674, 0.0
    %v1679 = vadd.f32 %v1559, %v1677
    %v1680 = vadd.f32 %v1560, %v1678
    %v1681 = vsel %vm763, %v1305, 0.0
    %v1682 = vsel %vm763, %v1308, 0.0
    %v1683 = vpack.c.bf16 %v1682, %v1681
    %v1685 = vsel %vm269, %v1683, 0
    %1687 = vmatprep.subr.bf16.mxu0 0
    %1688 = vmatpush1.bf16.xpose.msra.mxu0 %v1322
    %1689 = vmatprep.subr.bf16.mxu0 0
    %1690 = vmatpush1.bf16.xpose.msra.mxu0 0
    %1691 = vmatprep.subr.bf16.mxu0 0
    %1692 = vmatpush1.bf16.xpose.msra.mxu0 0
    %1693 = vmatprep.subr.bf16.mxu0 0
    %1694 = vmatpush1.bf16.xpose.msra.mxu0 0
    %1695 = vmatprep.subr.bf16.mxu0 0
    %1696 = vmatpush1.bf16.xpose.msra.mxu0 0
    %1697 = vmatprep.subr.bf16.mxu0 0
    %1698 = vmatpush1.bf16.xpose.msra.mxu0 0
    %1699 = vmatprep.subr.bf16.mxu0 0
    %1700 = vmatpush1.bf16.xpose.msra.mxu0 0
    %1701 = vmatprep.subr.bf16.mxu0 0
    %1702 = vmatpush1.bf16.xpose.msra.mxu0 0
    %1703 = vmatprep.subr.bf16.mxu0 0
    %1704 = vmatpush1.bf16.xpose.msra.mxu0 0
    %1705 = vmatprep.subr.bf16.mxu0 0
    %1706 = vmatpush1.bf16.xpose.msra.mxu0 0
    %1707 = vmatprep.subr.bf16.mxu0 0
    %1708 = vmatpush1.bf16.xpose.msra.mxu0 0
    %1709 = vmatprep.subr.bf16.mxu0 0
    %1710 = vmatpush1.bf16.xpose.msra.mxu0 0
    %1711 = vmatprep.subr.bf16.mxu0 0
    %1712 = vmatpush1.bf16.xpose.msra.mxu0 0
    %1713 = vmatprep.subr.bf16.mxu0 0
    %1714 = vmatpush1.bf16.xpose.msra.mxu0 0
    %1715 = vmatprep.subr.bf16.mxu0 0
    %1716 = vmatpush1.bf16.xpose.msra.mxu0 0
    %1717 = vmatprep.subr.bf16.mxu0 0
    %1718 = vmatpush1.bf16.xpose.msra.mxu0 0
    %1719 = vmatprep.mubr.bf16.mxu0 0
    %1720 = vmatmul.mubr.bf16.gmra.mrb[0].mxu0 %v1685
    %v1721 = vpop.f32.mrb[0].mxu0
    %v1722 = vadd.f32 0.0, %v1721
    %v1723 = vpop.f32.mrb[0].mxu0
    %v1724 = vpop.f32.mrb[0].mxu0
    %v1725 = vadd.f32 0.0, %v1724
    %v1726 = vpop.f32.mrb[0].mxu0
    %1727 = vdwg.mxu0
    %v1728 = vsel %vm265, %v1722, -1e+30
    %v1729 = vsel %vm266, %v1725, -1e+30
    %v1730 = vsel %vm95, %v1728, -inf
    %1731 = vmax.xlane.f32.xlu0 %v1730
    %v1732 = vpop.xlane.xlu0 %1731
    %v1733 = vsel %vm95, %v1729, -inf
    %1734 = vmax.xlane.f32.xlu0 %v1733
    %v1735 = vpop.xlane.xlu0 %1734
    %v1736 = vsub.f32 %v1728, %v1732
    %v1737 = vsub.f32 %v1729, %v1735
    %v1738 = vmul.f32 %v1736, 1.442695
    %v1739 = vpow.pop %v1738
    %v1740 = vmul.f32 %v1737, 1.442695
    %v1741 = vpow.pop %v1740
    %v1742 = vsel %vm95, %v1739, 0.0
    %1743 = vadd.xlane.f32.xlu0 %v1742
    %v1744 = vpop.xlane.xlu0 %1743
    %v1745 = vsel %vm95, %v1741, 0.0
    %1746 = vadd.xlane.f32.xlu0 %v1745
    %v1747 = vpop.xlane.xlu0 %1746
    %v1748 = vrcp.pop %v1744
    %v1749 = vrcp.pop %v1747
    %v1750 = vmul.f32 %v1739, %v1748
    %v1751 = vmul.f32 %v1741, %v1749
    %v1752 = vpack.c.bf16 %v1751, %v1750
    %v1754 = vsel %vm95, %v1752, 0
    %1756 = vmatprep.subr.bf16.mxu0 0
    %1757 = vmatpush1.bf16.msra.mxu0 %v1391
    %1758 = vmatprep.subr.bf16.mxu0 0
    %1759 = vmatpush1.bf16.msra.mxu0 0
    %1760 = vmatprep.subr.bf16.mxu0 0
    %1761 = vmatpush1.bf16.msra.mxu0 0
    %1762 = vmatprep.subr.bf16.mxu0 0
    %1763 = vmatpush1.bf16.msra.mxu0 0
    %1764 = vmatprep.subr.bf16.mxu0 0
    %1765 = vmatpush1.bf16.msra.mxu0 0
    %1766 = vmatprep.subr.bf16.mxu0 0
    %1767 = vmatpush1.bf16.msra.mxu0 0
    %1768 = vmatprep.subr.bf16.mxu0 0
    %1769 = vmatpush1.bf16.msra.mxu0 0
    %1770 = vmatprep.subr.bf16.mxu0 0
    %1771 = vmatpush1.bf16.msra.mxu0 0
    %1772 = vmatprep.subr.bf16.mxu0 0
    %1773 = vmatpush1.bf16.msra.mxu0 0
    %1774 = vmatprep.subr.bf16.mxu0 0
    %1775 = vmatpush1.bf16.msra.mxu0 0
    %1776 = vmatprep.subr.bf16.mxu0 0
    %1777 = vmatpush1.bf16.msra.mxu0 0
    %1778 = vmatprep.subr.bf16.mxu0 0
    %1779 = vmatpush1.bf16.msra.mxu0 0
    %1780 = vmatprep.subr.bf16.mxu0 0
    %1781 = vmatpush1.bf16.msra.mxu0 0
    %1782 = vmatprep.subr.bf16.mxu0 0
    %1783 = vmatpush1.bf16.msra.mxu0 0
    %1784 = vmatprep.subr.bf16.mxu0 0
    %1785 = vmatpush1.bf16.msra.mxu0 0
    %1786 = vmatprep.subr.bf16.mxu0 0
    %1787 = vmatpush1.bf16.msra.mxu0 0
    %1788 = vmatprep.mubr.bf16.mxu0 0
    %1789 = vmatmul.mubr.bf16.gmra.mrb[0].mxu0 %v1754
    %v1790 = vpop.f32.mrb[0].mxu0
    %v1791 = vadd.f32 0.0, %v1790
    %v1792 = vpop.f32.mrb[0].mxu0
    %v1793 = vpop.f32.mrb[0].mxu0
    %v1794 = vadd.f32 0.0, %v1793
    %v1795 = vpop.f32.mrb[0].mxu0
    %1796 = vdwg.mxu0
    %v1797 = vsel %vm763, %v1791, 0.0
    %v1798 = vsel %vm763, %v1794, 0.0
    %v1799 = vadd.f32 %v1679, %v1797
    %v1800 = vadd.f32 %v1680, %v1798
    %s1801 = scalar_lea.vmem %s6, 16
    %v1802 = vld [vmem:[%s1801] sm:$0xf]
    %v1803 = vld [vmem:[%s1801 + $0x4] sm:$0xf]
    %v1804 = vld [vmem:[%s1801 + $0x8] sm:$0xf]
    %v1805 = vld [vmem:[%s1801 + $0xc] sm:$0xf]
    %v1806 = vpack.c.bf16 %v1800, %v1799
    %v1811 = vunpack.c.l.b16 %v1802
    %v1812 = vunpack.c.l.b16 %v1803
    %v1813 = vunpack.c.l.b16 %v1804
    %v1814 = vunpack.c.l.b16 %v1805
    %v1815 = vpack.c.b16 %v1812, %v1811
    %v1816 = vpack.c.b16 %v1814, %v1813
    %v1820 = vsel %vm269, %v1806, 0
    %1822 = vmatprep.subr.bf16.mxu0 0
    %1823 = vmatpush1.bf16.msra.mxu0 %v1815
    %1824 = vmatprep.subr.bf16.mxu0 0
    %1825 = vmatpush1.bf16.msra.mxu0 %v1816
    %1826 = vmatprep.subr.bf16.mxu0 0
    %1827 = vmatpush1.bf16.msra.mxu0 0
    %1828 = vmatprep.subr.bf16.mxu0 0
    %1829 = vmatpush1.bf16.msra.mxu0 0
    %1830 = vmatprep.subr.bf16.mxu0 0
    %1831 = vmatpush1.bf16.msra.mxu0 0
    %1832 = vmatprep.subr.bf16.mxu0 0
    %1833 = vmatpush1.bf16.msra.mxu0 0
    %1834 = vmatprep.subr.bf16.mxu0 0
    %1835 = vmatpush1.bf16.msra.mxu0 0
    %1836 = vmatprep.subr.bf16.mxu0 0
    %1837 = vmatpush1.bf16.msra.mxu0 0
    %1838 = vmatprep.subr.bf16.mxu0 0
    %1839 = vmatpush1.bf16.msra.mxu0 0
    %1840 = vmatprep.subr.bf16.mxu0 0
    %1841 = vmatpush1.bf16.msra.mxu0 0
    %1842 = vmatprep.subr.bf16.mxu0 0
    %1843 = vmatpush1.bf16.msra.mxu0 0
    %1844 = vmatprep.subr.bf16.mxu0 0
    %1845 = vmatpush1.bf16.msra.mxu0 0
    %1846 = vmatprep.subr.bf16.mxu0 0
    %1847 = vmatpush1.bf16.msra.mxu0 0
    %1848 = vmatprep.subr.bf16.mxu0 0
    %1849 = vmatpush1.bf16.msra.mxu0 0
    %1850 = vmatprep.subr.bf16.mxu0 0
    %1851 = vmatpush1.bf16.msra.mxu0 0
    %1852 = vmatprep.subr.bf16.mxu0 0
    %1853 = vmatpush1.bf16.msra.mxu0 0
    %1854 = vmatprep.mubr.bf16.mxu0 0
    %1855 = vmatmul.mubr.bf16.gmra.mrb[0].mxu0 %v1820
    %v1856 = vpop.f32.mrb[0].mxu0
    %v1857 = vadd.f32 0.0, %v1856
    %v1858 = vpop.f32.mrb[0].mxu0
    %v1859 = vpop.f32.mrb[0].mxu0
    %v1860 = vadd.f32 0.0, %v1859
    %v1861 = vpop.f32.mrb[0].mxu0
    %1862 = vdwg.mxu0
    %v1863 = vadd.f32 %v1201, %v1857
    %v1864 = vadd.f32 %v1202, %v1860
    %s1865 = scalar_lea.vmem %s7, 1
    %v1866 = vld [vmem:[%s1865] sm:$0x1]
    %v1868 = vlaneseq
    %v1869 = vshrl.u32 %v1868, 7
    %v1870 = vsub.s32 0, %v1869
    %v1871 = vrot.slane %v1866, %v1870
    %v1873 = vadd.f32 %v1863, %v1871
    %v1874 = vadd.f32 %v1864, %v1871
    %s1875 = scalar_lea.vmem %s8, 1
    %v1876 = vld [vmem:[%s1875] sm:$0x1]
    %s1877 = scalar_lea.vmem %s9, 1
    %v1878 = vld [vmem:[%s1877] sm:$0x1]
    %v1879 = vsel %vm269, %v1873, 0.0
    %1880 = vadd.xlane.f32.xlu0 %v1879
    %v1881 = vpop.xlane.xlu0 %1880
    %v1882 = vsel %vm269, %v1874, 0.0
    %1883 = vadd.xlane.f32.xlu0 %v1882
    %v1884 = vpop.xlane.xlu0 %1883
    %v1885 = vmul.f32 %v1881, %v276
    %v1886 = vmul.f32 %v1884, %v276
    %v1887 = vsub.f32 %v1873, %v1885
    %v1888 = vsub.f32 %v1874, %v1886
    %v1889 = vmul.f32 %v1887, %v1887
    %v1890 = vmul.f32 %v1888, %v1888
    %v1891 = vsel %vm269, %v1889, 0.0
    %1892 = vadd.xlane.f32.xlu0 %v1891
    %v1893 = vpop.xlane.xlu0 %1892
    %v1894 = vsel %vm269, %v1890, 0.0
    %1895 = vadd.xlane.f32.xlu0 %v1894
    %v1896 = vpop.xlane.xlu0 %1895
    %v1897 = vmul.f32 %v1893, %v276
    %v1898 = vmul.f32 %v1896, %v276
    %v1899 = vadd.f32 %v1897, 1e-05
    %v1900 = vadd.f32 %v1898, 1e-05
    %v1901 = vrsqrt.pop %v1899
    %v1902 = vrsqrt.pop %v1900
    %v1903 = vmul.f32 %v1887, %v1901
    %v1904 = vmul.f32 %v1888, %v1902
    %v1906 = vlaneseq
    %v1907 = vshrl.u32 %v1906, 7
    %v1908 = vsub.s32 0, %v1907
    %v1909 = vrot.slane %v1876, %v1908
    %v1911 = vmul.f32 %v1903, %v1909
    %v1912 = vmul.f32 %v1904, %v1909
    %v1914 = vlaneseq
    %v1915 = vshrl.u32 %v1914, 7
    %v1916 = vsub.s32 0, %v1915
    %v1917 = vrot.slane %v1878, %v1916
    %v1919 = vadd.f32 %v1911, %v1917
    %v1920 = vadd.f32 %v1912, %v1917
    %s1921 = scalar_lea.vmem %s10, 16
    %v1922 = vld [vmem:[%s1921] sm:$0xf]
    %v1923 = vld [vmem:[%s1921 + $0x4] sm:$0xf]
    %v1924 = vld [vmem:[%s1921 + $0x8] sm:$0xf]
    %v1925 = vld [vmem:[%s1921 + $0xc] sm:$0xf]
    %v1926 = vpack.c.bf16 %v1920, %v1919
    %s1927 = scalar_lea.vmem %s11, 1
    %v1928 = vld [vmem:[%s1927] sm:$0x1]
    %v1930 = vlaneseq
    %v1931 = vshrl.u32 %v1930, 7
    %v1932 = vsub.s32 0, %v1931
    %v1933 = vrot.slane %v1928, %v1932
    %v1939 = vunpack.c.l.b16 %v1922
    %v1940 = vunpack.c.l.b16 %v1923
    %v1941 = vunpack.c.l.b16 %v1924
    %v1942 = vunpack.c.l.b16 %v1925
    %v1943 = vpack.c.b16 %v1940, %v1939
    %v1944 = vpack.c.b16 %v1942, %v1941
    %v1948 = vsel %vm269, %v1926, 0
    %1950 = vmatprep.subr.bf16.mxu0 0
    %1951 = vmatpush1.bf16.msra.mxu0 %v1943
    %1952 = vmatprep.subr.bf16.mxu0 0
    %1953 = vmatpush1.bf16.msra.mxu0 %v1944
    %1954 = vmatprep.subr.bf16.mxu0 0
    %1955 = vmatpush1.bf16.msra.mxu0 0
    %1956 = vmatprep.subr.bf16.mxu0 0
    %1957 = vmatpush1.bf16.msra.mxu0 0
    %1958 = vmatprep.subr.bf16.mxu0 0
    %1959 = vmatpush1.bf16.msra.mxu0 0
    %1960 = vmatprep.subr.bf16.mxu0 0
    %1961 = vmatpush1.bf16.msra.mxu0 0
    %1962 = vmatprep.subr.bf16.mxu0 0
    %1963 = vmatpush1.bf16.msra.mxu0 0
    %1964 = vmatprep.subr.bf16.mxu0 0
    %1965 = vmatpush1.bf16.msra.mxu0 0
    %1966 = vmatprep.subr.bf16.mxu0 0
    %1967 = vmatpush1.bf16.msra.mxu0 0
    %1968 = vmatprep.subr.bf16.mxu0 0
    %1969 = vmatpush1.bf16.msra.mxu0 0
    %1970 = vmatprep.subr.bf16.mxu0 0
    %1971 = vmatpush1.bf16.msra.mxu0 0
    %1972 = vmatprep.subr.bf16.mxu0 0
    %1973 = vmatpush1.bf16.msra.mxu0 0
    %1974 = vmatprep.subr.bf16.mxu0 0
    %1975 = vmatpush1.bf16.msra.mxu0 0
    %1976 = vmatprep.subr.bf16.mxu0 0
    %1977 = vmatpush1.bf16.msra.mxu0 0
    %1978 = vmatprep.subr.bf16.mxu0 0
    %1979 = vmatpush1.bf16.msra.mxu0 0
    %1980 = vmatprep.subr.bf16.mxu0 0
    %1981 = vmatpush1.bf16.msra.mxu0 0
    %1982 = vmatprep.mubr.bf16.mxu0 0
    %1983 = vmatmul.mubr.bf16.gmra.mrb[0].mxu0 %v1948
    %v1984 = vpop.f32.mrb[0].mxu0
    %v1985 = vadd.f32 %v1933, %v1984
    %v1986 = vpop.f32.mrb[0].mxu0
    %v1987 = vpop.f32.mrb[0].mxu0
    %v1988 = vadd.f32 %v1933, %v1987
    %v1989 = vpop.f32.mrb[0].mxu0
    %1990 = vdwg.mxu0
    %v1991 = vmul.f32 %v1985, 0.5
    %v1992 = vmul.f32 %v1988, 0.5
    %v1993 = vmul.f32 %v1985, 0.044715
    %v1994 = vmul.f32 %v1988, 0.044715
    %v1995 = vmul.f32 %v1993, %v1985
    %v1996 = vmul.f32 %v1994, %v1988
    %v1997 = vmul.f32 %v1995, %v1985
    %v1998 = vmul.f32 %v1996, %v1988
    %v1999 = vadd.f32 %v1985, %v1997
    %v2000 = vadd.f32 %v1988, %v1998
    %v2001 = vmul.f32 %v1999, 0.7978846
    %v2002 = vmul.f32 %v2000, 0.7978846
    %v2003 = vtanh.pop %v2001
    %v2004 = vtanh.pop %v2002
    %v2005 = vadd.f32 %v2003, 1.0
    %v2006 = vadd.f32 %v2004, 1.0
    %v2007 = vmul.f32 %v1991, %v2005
    %v2008 = vmul.f32 %v1992, %v2006
    %s2009 = scalar_lea.vmem %s12, 64
    %v2010 = vld [vmem:[%s2009] sm:$0xf]
    %v2011 = vld [vmem:[%s2009 + $0x4] sm:$0xf]
    %v2012 = vld [vmem:[%s2009 + $0x8] sm:$0xf]
    %v2013 = vld [vmem:[%s2009 + $0xc] sm:$0xf]
    %v2014 = vld [vmem:[%s2009 + $0x10] sm:$0xf]
    %v2015 = vld [vmem:[%s2009 + $0x14] sm:$0xf]
    %v2016 = vld [vmem:[%s2009 + $0x18] sm:$0xf]
    %v2017 = vld [vmem:[%s2009 + $0x1c] sm:$0xf]
    %v2018 = vld [vmem:[%s2009 + $0x20] sm:$0xf]
    %v2019 = vld [vmem:[%s2009 + $0x24] sm:$0xf]
    %v2020 = vld [vmem:[%s2009 + $0x28] sm:$0xf]
    %v2021 = vld [vmem:[%s2009 + $0x2c] sm:$0xf]
    %v2022 = vld [vmem:[%s2009 + $0x30] sm:$0xf]
    %v2023 = vld [vmem:[%s2009 + $0x34] sm:$0xf]
    %v2024 = vld [vmem:[%s2009 + $0x38] sm:$0xf]
    %v2025 = vld [vmem:[%s2009 + $0x3c] sm:$0xf]
    %v2026 = vpack.c.bf16 %v2008, %v2007
    %v2043 = vunpack.c.l.b16 %v2010
    %v2044 = vunpack.c.l.b16 %v2011
    %v2045 = vunpack.c.l.b16 %v2012
    %v2046 = vunpack.c.l.b16 %v2013
    %v2047 = vunpack.c.l.b16 %v2014
    %v2048 = vunpack.c.l.b16 %v2015
    %v2049 = vunpack.c.l.b16 %v2016
    %v2050 = vunpack.c.l.b16 %v2017
    %v2051 = vunpack.c.l.b16 %v2018
    %v2052 = vunpack.c.l.b16 %v2019
    %v2053 = vunpack.c.l.b16 %v2020
    %v2054 = vunpack.c.l.b16 %v2021
    %v2055 = vunpack.c.l.b16 %v2022
    %v2056 = vunpack.c.l.b16 %v2023
    %v2057 = vunpack.c.l.b16 %v2024
    %v2058 = vunpack.c.l.b16 %v2025
    %v2059 = vpack.c.b16 %v2044, %v2043
    %v2060 = vpack.c.b16 %v2046, %v2045
    %v2061 = vpack.c.b16 %v2048, %v2047
    %v2062 = vpack.c.b16 %v2050, %v2049
    %v2063 = vpack.c.b16 %v2052, %v2051
    %v2064 = vpack.c.b16 %v2054, %v2053
    %v2065 = vpack.c.b16 %v2056, %v2055
    %v2066 = vpack.c.b16 %v2058, %v2057
    %2075 = vmatprep.subr.bf16.mxu0 0
    %2076 = vmatpush1.bf16.msra.mxu0 %v2059
    %2077 = vmatprep.subr.bf16.mxu0 0
    %2078 = vmatpush1.bf16.msra.mxu0 %v2060
    %2079 = vmatprep.subr.bf16.mxu0 0
    %2080 = vmatpush1.bf16.msra.mxu0 %v2061
    %2081 = vmatprep.subr.bf16.mxu0 0
    %2082 = vmatpush1.bf16.msra.mxu0 %v2062
    %2083 = vmatprep.subr.bf16.mxu0 0
    %2084 = vmatpush1.bf16.msra.mxu0 %v2063
    %2085 = vmatprep.subr.bf16.mxu0 0
    %2086 = vmatpush1.bf16.msra.mxu0 %v2064
    %2087 = vmatprep.subr.bf16.mxu0 0
    %2088 = vmatpush1.bf16.msra.mxu0 %v2065
    %2089 = vmatprep.subr.bf16.mxu0 0
    %2090 = vmatpush1.bf16.msra.mxu0 %v2066
    %2091 = vmatprep.subr.bf16.mxu0 0
    %2092 = vmatpush1.bf16.msra.mxu0 0
    %2093 = vmatprep.subr.bf16.mxu0 0
    %2094 = vmatpush1.bf16.msra.mxu0 0
    %2095 = vmatprep.subr.bf16.mxu0 0
    %2096 = vmatpush1.bf16.msra.mxu0 0
    %2097 = vmatprep.subr.bf16.mxu0 0
    %2098 = vmatpush1.bf16.msra.mxu0 0
    %2099 = vmatprep.subr.bf16.mxu0 0
    %2100 = vmatpush1.bf16.msra.mxu0 0
    %2101 = vmatprep.subr.bf16.mxu0 0
    %2102 = vmatpush1.bf16.msra.mxu0 0
    %2103 = vmatprep.subr.bf16.mxu0 0
    %2104 = vmatpush1.bf16.msra.mxu0 0
    %2105 = vmatprep.subr.bf16.mxu0 0
    %2106 = vmatpush1.bf16.msra.mxu0 0
    %2107 = vmatprep.mubr.bf16.mxu0 0
    %2108 = vmatmul.mubr.bf16.gmra.mrb[0].mxu0 %v2026
    %v2109 = vpop.f32.mrb[0].mxu0
    %v2110 = vadd.f32 0.0, %v2109
    %v2111 = vpop.f32.mrb[0].mxu0
    %v2112 = vpop.f32.mrb[0].mxu0
    %v2113 = vadd.f32 0.0, %v2112
    %v2114 = vpop.f32.mrb[0].mxu0
    %2115 = vdwg.mxu0
    %v2116 = vadd.f32 %v1873, %v2110
    %v2117 = vadd.f32 %v1874, %v2113
    %s2118 = scalar_lea.vmem %s13, 1
    %v2119 = vld [vmem:[%s2118] sm:$0x1]
    %v2121 = vlaneseq
    %v2122 = vshrl.u32 %v2121, 7
    %v2123 = vsub.s32 0, %v2122
    %v2124 = vrot.slane %v2119, %v2123
    %v2126 = vadd.f32 %v2116, %v2124
    %v2127 = vadd.f32 %v2117, %v2124
    %v2128 = vld [vmem:[%s14] sm:$0x1]
    %v2129 = vld [vmem:[%s15] sm:$0x1]
    %v2130 = vsel %vm269, %v2126, 0.0
    %2131 = vadd.xlane.f32.xlu0 %v2130
    %v2132 = vpop.xlane.xlu0 %2131
    %v2133 = vsel %vm269, %v2127, 0.0
    %2134 = vadd.xlane.f32.xlu0 %v2133
    %v2135 = vpop.xlane.xlu0 %2134
    %v2136 = vmul.f32 %v2132, %v276
    %v2137 = vmul.f32 %v2135, %v276
    %v2138 = vsub.f32 %v2126, %v2136
    %v2139 = vsub.f32 %v2127, %v2137
    %v2140 = vmul.f32 %v2138, %v2138
    %v2141 = vmul.f32 %v2139, %v2139
    %v2142 = vsel %vm269, %v2140, 0.0
    %2143 = vadd.xlane.f32.xlu0 %v2142
    %v2144 = vpop.xlane.xlu0 %2143
    %v2145 = vsel %vm269, %v2141, 0.0
    %2146 = vadd.xlane.f32.xlu0 %v2145
    %v2147 = vpop.xlane.xlu0 %2146
    %v2148 = vmul.f32 %v2144, %v276
    %v2149 = vmul.f32 %v2147, %v276
    %v2150 = vadd.f32 %v2148, 1e-05
    %v2151 = vadd.f32 %v2149, 1e-05
    %v2152 = vrsqrt.pop %v2150
    %v2153 = vrsqrt.pop %v2151
    %v2154 = vmul.f32 %v2138, %v2152
    %v2155 = vmul.f32 %v2139, %v2153
    %v2157 = vlaneseq
    %v2158 = vshrl.u32 %v2157, 7
    %v2159 = vsub.s32 0, %v2158
    %v2160 = vrot.slane %v2128, %v2159
    %v2162 = vmul.f32 %v2154, %v2160
    %v2163 = vmul.f32 %v2155, %v2160
    %v2165 = vlaneseq
    %v2166 = vshrl.u32 %v2165, 7
    %v2167 = vsub.s32 0, %v2166
    %v2168 = vrot.slane %v2129, %v2167
    %v2170 = vadd.f32 %v2162, %v2168
    %v2171 = vadd.f32 %v2163, %v2168
    %v2172 = vld [vmem:[%s16] sm:$0xf]
    %v2173 = vld [vmem:[%s16 + $0x4] sm:$0xf]
    %v2174 = vld [vmem:[%s16 + $0x8] sm:$0xf]
    %v2175 = vld [vmem:[%s16 + $0xc] sm:$0xf]
    %v2176 = vpack.c.bf16 %v2171, %v2170
    %v2181 = vunpack.c.l.b16 %v2172
    %v2182 = vunpack.c.l.b16 %v2173
    %v2183 = vunpack.c.l.b16 %v2174
    %v2184 = vunpack.c.l.b16 %v2175
    %v2185 = vpack.c.b16 %v2182, %v2181
    %v2186 = vpack.c.b16 %v2184, %v2183
    %v2190 = vsel %vm269, %v2176, 0
    %2192 = vmatprep.subr.bf16.mxu0 0
    %2193 = vmatpush1.bf16.msra.mxu0 %v2185
    %2194 = vmatprep.subr.bf16.mxu0 0
    %2195 = vmatpush1.bf16.msra.mxu0 %v2186
    %2196 = vmatprep.subr.bf16.mxu0 0
    %2197 = vmatpush1.bf16.msra.mxu0 0
    %2198 = vmatprep.subr.bf16.mxu0 0
    %2199 = vmatpush1.bf16.msra.mxu0 0
    %2200 = vmatprep.subr.bf16.mxu0 0
    %2201 = vmatpush1.bf16.msra.mxu0 0
    %2202 = vmatprep.subr.bf16.mxu0 0
    %2203 = vmatpush1.bf16.msra.mxu0 0
    %2204 = vmatprep.subr.bf16.mxu0 0
    %2205 = vmatpush1.bf16.msra.mxu0 0
    %2206 = vmatprep.subr.bf16.mxu0 0
    %2207 = vmatpush1.bf16.msra.mxu0 0
    %2208 = vmatprep.subr.bf16.mxu0 0
    %2209 = vmatpush1.bf16.msra.mxu0 0
    %2210 = vmatprep.subr.bf16.mxu0 0
    %2211 = vmatpush1.bf16.msra.mxu0 0
    %2212 = vmatprep.subr.bf16.mxu0 0
    %2213 = vmatpush1.bf16.msra.mxu0 0
    %2214 = vmatprep.subr.bf16.mxu0 0
    %2215 = vmatpush1.bf16.msra.mxu0 0
    %2216 = vmatprep.subr.bf16.mxu0 0
    %2217 = vmatpush1.bf16.msra.mxu0 0
    %2218 = vmatprep.subr.bf16.mxu0 0
    %2219 = vmatpush1.bf16.msra.mxu0 0
    %2220 = vmatprep.subr.bf16.mxu0 0
    %2221 = vmatpush1.bf16.msra.mxu0 0
    %2222 = vmatprep.subr.bf16.mxu0 0
    %2223 = vmatpush1.bf16.msra.mxu0 0
    %2224 = vmatprep.mubr.bf16.mxu0 0
    %2225 = vmatmul.mubr.bf16.gmra.mrb[0].mxu0 %v2190
    %v2226 = vpop.f32.mrb[0].mxu0
    %v2227 = vadd.f32 0.0, %v2226
    %v2228 = vpop.f32.mrb[0].mxu0
    %v2229 = vpop.f32.mrb[0].mxu0
    %v2230 = vadd.f32 0.0, %v2229
    %v2231 = vpop.f32.mrb[0].mxu0
    %2232 = vdwg.mxu0
    %2233 = vst [vmem:[#allocation2] sm:$0xff] %v2227
    %2234 = vst [vmem:[#allocation2 + $0x8] sm:$0xff] %v2230
    // Predicated region
    $region70: #{tpu_custom_call.1} parent=1 // pred_check
      _
    $region71: #{tpu_custom_call.1} parent=1 // pred_check_branch
      %2236 = sbr.rel (0) target = $region73
    $region72: #{tpu_custom_call.1} parent=1 // pred_region
      %s2238 = ssub.s32 256, 256
      %2239 = vsyncadd [#allocation3], %s2238
      %s2240 = sshll.u32 [#allocation2], 4
      %s2241 = int_to_ptr.vmem [resolvable:$true] %s2240
      %2246 = dma.vmem_to_hbm [thread:$0]  %s2241, 256, %s17, [#allocation3], 128, 128, 8
    $region73: #{tpu_custom_call.1} parent=1 // pred_fallthru
      _
    // Predicated region
    $region74: #{tpu_custom_call.1} parent=1 // pred_check
      _
    $region75: #{tpu_custom_call.1} parent=1 // pred_check_branch
      %2248 = sbr.rel (0) target = $region77
    $region76: #{tpu_custom_call.1} parent=1 // pred_region
      %2249 = dma.done [#allocation3], 256
    $region77: #{tpu_custom_call.1} parent=1 // pred_fallthru
      _
    %2250 = vsyncpa [#allocation3], 1

</llo_original>
